<compile_context>
chip_gen: v6e
topology: v6e:2x2x1
jax: 0.10.0
libtpu: 0.0.40
codegen_flags: <defaults>
</compile_context>

<pallas_src>
import jax
import jax.numpy as jnp
import numpy as np
from jax.experimental import pallas as pl
from jax.experimental.pallas import tpu as pltpu

IN_FEATURES = 77 * 45          # 3465 — kernel handles the ragged K directly
HEAD_DIMS = (90, 2, 2, 2)      # action, on_ground, has_jump, has_flip
HEAD_TOTAL = sum(HEAD_DIMS)    # 96
HEAD_PAD = 128                 # lane-dense fused head output width


def _round_up(x, m):
    return (x + m - 1) // m * m


# --------------------------------------------------------------------------- #
# Kernel
# --------------------------------------------------------------------------- #
def make_idm_kernel(num_hidden):
    """Kernel builder; num_hidden is static so the layer loop fully unrolls."""

    def kernel(*refs):
        x_ref = refs[0]
        w0_ref, b0_ref = refs[1], refs[2]
        wh_refs = refs[3:3 + 2 * num_hidden:2]
        bh_refs = refs[4:4 + 2 * num_hidden:2]
        wheads_ref = refs[3 + 2 * num_hidden]
        bheads_ref = refs[4 + 2 * num_hidden]
        out_ref = refs[5 + 2 * num_hidden]

        # lin0 (+ eval-mode dropout == identity) + ReLU.  x streams from HBM as
        # f32 and is downcast to bf16 here (cheap VPU op, saves a whole HBM
        # round-trip vs a wrapper-side cast); bf16 MXU, f32 accumulation,
        # bias + ReLU in f32 on the VPU.
        h = jnp.dot(x_ref[...].astype(jnp.bfloat16), w0_ref[...],
                    preferred_element_type=jnp.float32)
        h = jnp.maximum(h + b0_ref[...], 0.0)

        # Hidden layers (statically unrolled).
        for w_ref, b_ref in zip(wh_refs, bh_refs):
            h = jnp.dot(h.astype(jnp.bfloat16), w_ref[...],
                        preferred_element_type=jnp.float32)
            h = jnp.maximum(h + b_ref[...], 0.0)

        # All four heads fused into one lane-dense 128-wide matmul + one
        # unmasked 128-wide store.
        out_ref[...] = (
            jnp.dot(h.astype(jnp.bfloat16), wheads_ref[...],
                    preferred_element_type=jnp.float32)
            + bheads_ref[...])

    return kernel


# --------------------------------------------------------------------------- #
# Parameter preparation (fuse heads, cast weights to bf16)
# --------------------------------------------------------------------------- #
def _prepare_params(params):
    ff = params["w0"].shape[1]
    num_hidden = len(params["wh"])

    w0 = params["w0"].astype(jnp.bfloat16)                   # (3465, ff), unpadded
    b0 = params["b0"].reshape(1, ff).astype(jnp.float32)

    hidden = []
    for w, b in zip(params["wh"], params["bh"]):
        hidden.append(w.astype(jnp.bfloat16))
        hidden.append(b.reshape(1, ff).astype(jnp.float32))

    w_heads = jnp.concatenate(
        [params["wa"], params["wg"], params["wj"], params["wf"]], axis=1)
    b_heads = jnp.concatenate(
        [params["ba"], params["bg"], params["bj"], params["bf"]],
        axis=0).reshape(1, HEAD_TOTAL)
    w_heads = jnp.pad(w_heads,
                      ((0, 0), (0, HEAD_PAD - HEAD_TOTAL))).astype(jnp.bfloat16)
    b_heads = jnp.pad(b_heads,
                      ((0, 0), (0, HEAD_PAD - HEAD_TOTAL))).astype(jnp.float32)

    flat = [w0, b0] + hidden + [w_heads, b_heads]
    return flat, ff, num_hidden


def _vmem_cap_bytes():
    try:
        return int(pltpu.get_tpu_info().vmem_capacity_bytes)
    except Exception:
        return 64 << 20   # conservative: v7x per-TensorCore VMEM


# --------------------------------------------------------------------------- #
# Forward wrapper
# --------------------------------------------------------------------------- #
def idm_forward(x, params, *, batch_tile=512):
    """x: (B, 77, 45) float32. Returns (action (B,90), on_ground (B,2),
    has_jump (B,2), has_flip (B,2))."""
    B = x.shape[0]
    flat_params, ff, num_hidden = _prepare_params(params)

    # Free contiguous reshape; x stays f32 (downcast happens in-kernel).
    x_flat = x.reshape(B, IN_FEATURES)

    # Batch tiling: multiple of 8 sublanes; clamp so the grid has >= 2 steps
    # whenever B > 8 (lets the "parallel" axis split over both v7x TCs;
    # no-op on single-TC v5e/v6e).
    tile_b = min(_round_up(batch_tile, 8), _round_up(B, 8))
    if B > 8:
        tile_b = min(tile_b, _round_up(pl.cdiv(B, 2), 8))
    B_pad = _round_up(B, tile_b)
    if B_pad != B:
        x_flat = jnp.pad(x_flat, ((0, B_pad - B), (0, 0)))
    grid = (B_pad // tile_b,)

    def _const(i):
        return (0, 0)

    weight_bytes = sum(int(a.size) * a.dtype.itemsize for a in flat_params)
    x_tile_bytes = tile_b * IN_FEATURES * 4
    out_tile_bytes = tile_b * HEAD_PAD * 4

    # Advisory cost estimate for the XLA scheduler.
    flops = 2 * B_pad * (IN_FEATURES * ff + num_hidden * ff * ff + ff * HEAD_PAD)
    bytes_accessed = (B_pad * IN_FEATURES * 4 + weight_bytes
                      + B_pad * HEAD_PAD * 4)
    cost = pl.CostEstimate(flops=flops, transcendentals=0,
                           bytes_accessed=bytes_accessed)

    out_shape = jax.ShapeDtypeStruct((B_pad, HEAD_PAD), jnp.float32)
    out_specs = pl.BlockSpec((tile_b, HEAD_PAD), lambda i: (i, 0))

    def _run(single_buffer_weights):
        def resident(shape):
            # Constant block index => DMA happens once; request a single VMEM
            # buffer so the (skipped) second pipeline buffer doesn't eat VMEM.
            if single_buffer_weights:
                return pl.BlockSpec(shape, _const, pipeline_mode=pl.Buffered(1))
            return pl.BlockSpec(shape, _const)

        in_specs = [
            pl.BlockSpec((tile_b, IN_FEATURES), lambda i: (i, 0)),  # x streamed
            resident((IN_FEATURES, ff)),   # w0
            resident((1, ff)),             # b0
        ]
        for _ in range(num_hidden):
            in_specs.append(resident((ff, ff)))
            in_specs.append(resident((1, ff)))
        in_specs.append(resident((ff, HEAD_PAD)))   # fused head weight
        in_specs.append(resident((1, HEAD_PAD)))    # fused head bias

        # VMEM budget from the actual buffer plan: resident weights (x1 if
        # single-buffered, x2 otherwise) + double-buffered x/out tiles + margin.
        wfac = 1 if single_buffer_weights else 2
        plan = (wfac * weight_bytes
                + 2 * (x_tile_bytes + out_tile_bytes) + (4 << 20))
        vmem_limit = min(max(plan, 32 << 20), int(_vmem_cap_bytes() * 0.875))

        fn = pl.pallas_call(
            make_idm_kernel(num_hidden),
            grid=grid,
            in_specs=in_specs,
            out_specs=out_specs,
            out_shape=out_shape,
            compiler_params=pltpu.CompilerParams(
                dimension_semantics=("parallel",),
                vmem_limit_bytes=vmem_limit),
            cost_estimate=cost,
        )
        return fn(x_flat, *flat_params)

    try:
        out = _run(single_buffer_weights=True)
    except Exception:
        # Fallback for jax versions that reject pipeline_mode=pl.Buffered(1)
        # on BlockSpec: keep default double-buffered resident weights.
        out = _run(single_buffer_weights=False)

    out = out[:B]
    action = out[:, 0:90]
    on_ground = out[:, 90:92]
    has_jump = out[:, 92:94]
    has_flip = out[:, 94:96]
    return action, on_ground, has_jump, has_flip


# --------------------------------------------------------------------------- #
# Synthetic parameters (mirrors IDMNet.__init__ shapes; weights stored (in, out))
# --------------------------------------------------------------------------- #
def init_params(key, ff_dim, hidden_layers):
    n_lin = hidden_layers + 5
    ks = jax.random.split(key, 2 * n_lin)
    idx = iter(range(2 * n_lin))

    def lin(fan_in, fan_out):
        kw, kb = ks[next(idx)], ks[next(idx)]
        bound = 1.0 / float(np.sqrt(fan_in))
        w = jax.random.uniform(kw, (fan_in, fan_out), jnp.float32, -bound, bound)
        b = jax.random.uniform(kb, (fan_out,), jnp.float32, -bound, bound)
        return w, b

    w0, b0 = lin(IN_FEATURES, ff_dim)
    wh, bh = [], []
    for _ in range(hidden_layers):
        w, b = lin(ff_dim, ff_dim)
        wh.append(w)
        bh.append(b)
    wa, ba = lin(ff_dim, 90)
    wg, bg = lin(ff_dim, 2)
    wj, bj = lin(ff_dim, 2)
    wf, bf = lin(ff_dim, 2)

    return dict(w0=w0, b0=b0, wh=wh, bh=bh,
                wa=wa, ba=ba, wg=wg, bg=bg,
                wj=wj, bj=bj, wf=wf, bf=bf)


# --------------------------------------------------------------------------- #
# Pure-jnp reference (matches the kernel's bf16-weight numerics)
# --------------------------------------------------------------------------- #
def idm_reference(x, params):
    B = x.shape[0]
    h = jnp.dot(x.reshape(B, IN_FEATURES).astype(jnp.bfloat16),
                params["w0"].astype(jnp.bfloat16),
                preferred_element_type=jnp.float32) + params["b0"]
    h = jnp.maximum(h, 0.0)
    for w, b in zip(params["wh"], params["bh"]):
        h = jnp.dot(h.astype(jnp.bfloat16), w.astype(jnp.bfloat16),
                    preferred_element_type=jnp.float32) + b
        h = jnp.maximum(h, 0.0)
    hb = h.astype(jnp.bfloat16)

    def head(w, b):
        return jnp.dot(hb, w.astype(jnp.bfloat16),
                       preferred_element_type=jnp.float32) + b

    return (head(params["wa"], params["ba"]),
            head(params["wg"], params["bg"]),
            head(params["wj"], params["bj"]),
            head(params["wf"], params["bf"]))


if __name__ == "__main__":
    key = jax.random.PRNGKey(0)
    k_x, k_p = jax.random.split(key)

    B = 16
    FF_DIM = 128
    HIDDEN_LAYERS = 2

    x = jax.random.normal(k_x, (B, 77, 45), dtype=jnp.float32)
    params = init_params(k_p, FF_DIM, HIDDEN_LAYERS)

    # Default batch_tile, but the >=2-grid-step clamp gives tile_b=8 -> grid=2,
    # exercising the pipelined batch grid (and the v7x two-TC split).
    outs = idm_forward(x, params)
    jax.block_until_ready(outs)
    action, on_ground, has_jump, has_flip = outs

    assert action.shape == (B, 90)
    assert on_ground.shape == (B, 2)
    assert has_jump.shape == (B, 2)
    assert has_flip.shape == (B, 2)

    ref = idm_reference(x, params)
    for got, want in zip(outs, ref):
        np.testing.assert_allclose(np.asarray(got), np.asarray(want),
                                   rtol=2e-2, atol=2e-2)

    print("KERNEL_OK")
</pallas_src>

<mosaic_0001>
module attributes {stable_mosaic.version = 11 : i64} {
  func.func @kernel(%arg0: i32, %arg1: memref<8x3465xf32, #tpu.memory_space<vmem>>, %arg2: memref<3465x128xbf16, #tpu.memory_space<vmem>>, %arg3: memref<1x128xf32, #tpu.memory_space<vmem>>, %arg4: memref<128x128xbf16, #tpu.memory_space<vmem>>, %arg5: memref<1x128xf32, #tpu.memory_space<vmem>>, %arg6: memref<128x128xbf16, #tpu.memory_space<vmem>>, %arg7: memref<1x128xf32, #tpu.memory_space<vmem>>, %arg8: memref<128x128xbf16, #tpu.memory_space<vmem>>, %arg9: memref<1x128xf32, #tpu.memory_space<vmem>>, %arg10: memref<8x128xf32, #tpu.memory_space<vmem>>) attributes {dimension_semantics = [#tpu.dimension_semantics<parallel>], iteration_bounds = array<i64: 2>, scalar_prefetch = 0 : i64, scratch_operands = 0 : i64, tpu.core_type = #tpu.core_type<tc>, window_params = [{transform_indices = @transform_0, window_bounds = array<i64: 8, 3465>}, {pipeline_mode = #tpu.pipeline_mode<synchronous>, transform_indices = @transform_1, window_bounds = array<i64: 3465, 128>}, {pipeline_mode = #tpu.pipeline_mode<synchronous>, transform_indices = @transform_2, window_bounds = array<i64: 1, 128>}, {pipeline_mode = #tpu.pipeline_mode<synchronous>, transform_indices = @transform_3, window_bounds = array<i64: 128, 128>}, {pipeline_mode = #tpu.pipeline_mode<synchronous>, transform_indices = @transform_4, window_bounds = array<i64: 1, 128>}, {pipeline_mode = #tpu.pipeline_mode<synchronous>, transform_indices = @transform_5, window_bounds = array<i64: 128, 128>}, {pipeline_mode = #tpu.pipeline_mode<synchronous>, transform_indices = @transform_6, window_bounds = array<i64: 1, 128>}, {pipeline_mode = #tpu.pipeline_mode<synchronous>, transform_indices = @transform_7, window_bounds = array<i64: 128, 128>}, {pipeline_mode = #tpu.pipeline_mode<synchronous>, transform_indices = @transform_8, window_bounds = array<i64: 1, 128>}, {transform_indices = @transform_9, window_bounds = array<i64: 8, 128>}]} {
    %c0 = arith.constant 0 : index
    %c0_0 = arith.constant 0 : index
    %0 = vector.load %arg1[%c0, %c0_0] : memref<8x3465xf32, #tpu.memory_space<vmem>>, vector<8x3465xf32>
    %1 = arith.truncf %0 : vector<8x3465xf32> to vector<8x3465xbf16>
    %c0_1 = arith.constant 0 : index
    %c0_2 = arith.constant 0 : index
    %2 = vector.load %arg2[%c0_1, %c0_2] : memref<3465x128xbf16, #tpu.memory_space<vmem>>, vector<3465x128xbf16>
    %cst = arith.constant dense<0.000000e+00> : vector<8x128xf32>
    %3 = tpu.matmul %1, %2, %cst {dimension_numbers = #tpu.dot_dimension_numbers<[1], [0], [0], [1], [0, 0, 1, 1], [], []>} : vector<8x3465xbf16>, vector<3465x128xbf16>, vector<8x128xf32> -> vector<8x128xf32>
    %c0_3 = arith.constant 0 : index
    %c0_4 = arith.constant 0 : index
    %4 = vector.load %arg3[%c0_3, %c0_4] : memref<1x128xf32, #tpu.memory_space<vmem>>, vector<1x128xf32>
    %5 = vector.broadcast %4 : vector<1x128xf32> to vector<8x128xf32>
    %6 = arith.addf %3, %5 : vector<8x128xf32>
    %cst_5 = arith.constant 0.000000e+00 : f32
    %7 = vector.broadcast %cst_5 : f32 to vector<8x128xf32>
    %8 = arith.maximumf %6, %7 : vector<8x128xf32>
    %9 = arith.truncf %8 : vector<8x128xf32> to vector<8x128xbf16>
    %c0_6 = arith.constant 0 : index
    %c0_7 = arith.constant 0 : index
    %10 = vector.load %arg4[%c0_6, %c0_7] : memref<128x128xbf16, #tpu.memory_space<vmem>>, vector<128x128xbf16>
    %cst_8 = arith.constant dense<0.000000e+00> : vector<8x128xf32>
    %11 = tpu.matmul %9, %10, %cst_8 {dimension_numbers = #tpu.dot_dimension_numbers<[1], [0], [0], [1], [0, 0, 1, 1], [], []>} : vector<8x128xbf16>, vector<128x128xbf16>, vector<8x128xf32> -> vector<8x128xf32>
    %c0_9 = arith.constant 0 : index
    %c0_10 = arith.constant 0 : index
    %12 = vector.load %arg5[%c0_9, %c0_10] : memref<1x128xf32, #tpu.memory_space<vmem>>, vector<1x128xf32>
    %13 = vector.broadcast %12 : vector<1x128xf32> to vector<8x128xf32>
    %14 = arith.addf %11, %13 : vector<8x128xf32>
    %cst_11 = arith.constant 0.000000e+00 : f32
    %15 = vector.broadcast %cst_11 : f32 to vector<8x128xf32>
    %16 = arith.maximumf %14, %15 : vector<8x128xf32>
    %17 = arith.truncf %16 : vector<8x128xf32> to vector<8x128xbf16>
    %c0_12 = arith.constant 0 : index
    %c0_13 = arith.constant 0 : index
    %18 = vector.load %arg6[%c0_12, %c0_13] : memref<128x128xbf16, #tpu.memory_space<vmem>>, vector<128x128xbf16>
    %cst_14 = arith.constant dense<0.000000e+00> : vector<8x128xf32>
    %19 = tpu.matmul %17, %18, %cst_14 {dimension_numbers = #tpu.dot_dimension_numbers<[1], [0], [0], [1], [0, 0, 1, 1], [], []>} : vector<8x128xbf16>, vector<128x128xbf16>, vector<8x128xf32> -> vector<8x128xf32>
    %c0_15 = arith.constant 0 : index
    %c0_16 = arith.constant 0 : index
    %20 = vector.load %arg7[%c0_15, %c0_16] : memref<1x128xf32, #tpu.memory_space<vmem>>, vector<1x128xf32>
    %21 = vector.broadcast %20 : vector<1x128xf32> to vector<8x128xf32>
    %22 = arith.addf %19, %21 : vector<8x128xf32>
    %cst_17 = arith.constant 0.000000e+00 : f32
    %23 = vector.broadcast %cst_17 : f32 to vector<8x128xf32>
    %24 = arith.maximumf %22, %23 : vector<8x128xf32>
    %25 = arith.truncf %24 : vector<8x128xf32> to vector<8x128xbf16>
    %c0_18 = arith.constant 0 : index
    %c0_19 = arith.constant 0 : index
    %26 = vector.load %arg8[%c0_18, %c0_19] : memref<128x128xbf16, #tpu.memory_space<vmem>>, vector<128x128xbf16>
    %cst_20 = arith.constant dense<0.000000e+00> : vector<8x128xf32>
    %27 = tpu.matmul %25, %26, %cst_20 {dimension_numbers = #tpu.dot_dimension_numbers<[1], [0], [0], [1], [0, 0, 1, 1], [], []>} : vector<8x128xbf16>, vector<128x128xbf16>, vector<8x128xf32> -> vector<8x128xf32>
    %c0_21 = arith.constant 0 : index
    %c0_22 = arith.constant 0 : index
    %28 = vector.load %arg9[%c0_21, %c0_22] : memref<1x128xf32, #tpu.memory_space<vmem>>, vector<1x128xf32>
    %29 = vector.broadcast %28 : vector<1x128xf32> to vector<8x128xf32>
    %30 = arith.addf %27, %29 : vector<8x128xf32>
    %c0_23 = arith.constant 0 : index
    %c0_24 = arith.constant 0 : index
    %31 = vector.load %arg10[%c0_23, %c0_24] : memref<8x128xf32, #tpu.memory_space<vmem>>, vector<8x128xf32>
    tpu.vector_store %arg10[%c0_23, %c0_24], %30 {strides = array<i32>} : memref<8x128xf32, #tpu.memory_space<vmem>>, vector<8x128xf32>,
    return
  }
  func.func @transform_0(%arg0: i32) -> (i32, i32) {
    %c0_i32 = arith.constant 0 : i32
    %c0_i32_0 = arith.constant 0 : i32
    return %arg0, %c0_i32 : i32, i32
  }
  func.func @transform_1(%arg0: i32) -> (i32, i32) {
    %c0_i32 = arith.constant 0 : i32
    %c0_i32_0 = arith.constant 0 : i32
    %c0_i32_1 = arith.constant 0 : i32
    return %c0_i32, %c0_i32_0 : i32, i32
  }
  func.func @transform_2(%arg0: i32) -> (i32, i32) {
    %c0_i32 = arith.constant 0 : i32
    %c0_i32_0 = arith.constant 0 : i32
    %c0_i32_1 = arith.constant 0 : i32
    return %c0_i32, %c0_i32_0 : i32, i32
  }
  func.func @transform_3(%arg0: i32) -> (i32, i32) {
    %c0_i32 = arith.constant 0 : i32
    %c0_i32_0 = arith.constant 0 : i32
    %c0_i32_1 = arith.constant 0 : i32
    return %c0_i32, %c0_i32_0 : i32, i32
  }
  func.func @transform_4(%arg0: i32) -> (i32, i32) {
    %c0_i32 = arith.constant 0 : i32
    %c0_i32_0 = arith.constant 0 : i32
    %c0_i32_1 = arith.constant 0 : i32
    return %c0_i32, %c0_i32_0 : i32, i32
  }
  func.func @transform_5(%arg0: i32) -> (i32, i32) {
    %c0_i32 = arith.constant 0 : i32
    %c0_i32_0 = arith.constant 0 : i32
    %c0_i32_1 = arith.constant 0 : i32
    return %c0_i32, %c0_i32_0 : i32, i32
  }
  func.func @transform_6(%arg0: i32) -> (i32, i32) {
    %c0_i32 = arith.constant 0 : i32
    %c0_i32_0 = arith.constant 0 : i32
    %c0_i32_1 = arith.constant 0 : i32
    return %c0_i32, %c0_i32_0 : i32, i32
  }
  func.func @transform_7(%arg0: i32) -> (i32, i32) {
    %c0_i32 = arith.constant 0 : i32
    %c0_i32_0 = arith.constant 0 : i32
    %c0_i32_1 = arith.constant 0 : i32
    return %c0_i32, %c0_i32_0 : i32, i32
  }
  func.func @transform_8(%arg0: i32) -> (i32, i32) {
    %c0_i32 = arith.constant 0 : i32
    %c0_i32_0 = arith.constant 0 : i32
    %c0_i32_1 = arith.constant 0 : i32
    return %c0_i32, %c0_i32_0 : i32, i32
  }
  func.func @transform_9(%arg0: i32) -> (i32, i32) {
    %c0_i32 = arith.constant 0 : i32
    %c0_i32_0 = arith.constant 0 : i32
    return %arg0, %c0_i32 : i32, i32
  }
}

module attributes {stable_mosaic.version = 11 : i64} {
  func.func @kernel(%arg0: i32, %arg1: memref<8x3465xf32, #tpu.memory_space<vmem>>, %arg2: memref<3465x128xbf16, #tpu.memory_space<vmem>>, %arg3: memref<1x128xf32, #tpu.memory_space<vmem>>, %arg4: memref<128x128xbf16, #tpu.memory_space<vmem>>, %arg5: memref<1x128xf32, #tpu.memory_space<vmem>>, %arg6: memref<128x128xbf16, #tpu.memory_space<vmem>>, %arg7: memref<1x128xf32, #tpu.memory_space<vmem>>, %arg8: memref<128x128xbf16, #tpu.memory_space<vmem>>, %arg9: memref<1x128xf32, #tpu.memory_space<vmem>>, %arg10: memref<8x128xf32, #tpu.memory_space<vmem>>) attributes {dimension_semantics = [#tpu.dimension_semantics<parallel>], iteration_bounds = array<i64: 2>, scalar_prefetch = 0 : i64, scratch_operands = 0 : i64, tpu.core_type = #tpu.core_type<tc>, window_params = [{transform_indices = @transform_0, window_bounds = array<i64: 8, 3465>}, {pipeline_mode = #tpu.pipeline_mode<synchronous>, transform_indices = @transform_1, window_bounds = array<i64: 3465, 128>}, {pipeline_mode = #tpu.pipeline_mode<synchronous>, transform_indices = @transform_2, window_bounds = array<i64: 1, 128>}, {pipeline_mode = #tpu.pipeline_mode<synchronous>, transform_indices = @transform_3, window_bounds = array<i64: 128, 128>}, {pipeline_mode = #tpu.pipeline_mode<synchronous>, transform_indices = @transform_4, window_bounds = array<i64: 1, 128>}, {pipeline_mode = #tpu.pipeline_mode<synchronous>, transform_indices = @transform_5, window_bounds = array<i64: 128, 128>}, {pipeline_mode = #tpu.pipeline_mode<synchronous>, transform_indices = @transform_6, window_bounds = array<i64: 1, 128>}, {pipeline_mode = #tpu.pipeline_mode<synchronous>, transform_indices = @transform_7, window_bounds = array<i64: 128, 128>}, {pipeline_mode = #tpu.pipeline_mode<synchronous>, transform_indices = @transform_8, window_bounds = array<i64: 1, 128>}, {transform_indices = @transform_9, window_bounds = array<i64: 8, 128>}]} {
    %c0 = arith.constant 0 : index
    %c0_0 = arith.constant 0 : index
    %0 = vector.load %arg1[%c0, %c0_0] : memref<8x3465xf32, #tpu.memory_space<vmem>>, vector<8x3465xf32>
    %1 = arith.truncf %0 : vector<8x3465xf32> to vector<8x3465xbf16>
    %c0_1 = arith.constant 0 : index
    %c0_2 = arith.constant 0 : index
    %2 = vector.load %arg2[%c0_1, %c0_2] : memref<3465x128xbf16, #tpu.memory_space<vmem>>, vector<3465x128xbf16>
    %cst = arith.constant dense<0.000000e+00> : vector<8x128xf32>
    %3 = tpu.matmul %1, %2, %cst {dimension_numbers = #tpu.dot_dimension_numbers<[1], [0], [0], [1], [0, 0, 1, 1], [], []>} : vector<8x3465xbf16>, vector<3465x128xbf16>, vector<8x128xf32> -> vector<8x128xf32>
    %c0_3 = arith.constant 0 : index
    %c0_4 = arith.constant 0 : index
    %4 = vector.load %arg3[%c0_3, %c0_4] : memref<1x128xf32, #tpu.memory_space<vmem>>, vector<1x128xf32>
    %5 = vector.broadcast %4 : vector<1x128xf32> to vector<8x128xf32>
    %6 = arith.addf %3, %5 : vector<8x128xf32>
    %cst_5 = arith.constant 0.000000e+00 : f32
    %7 = vector.broadcast %cst_5 : f32 to vector<8x128xf32>
    %8 = arith.maximumf %6, %7 : vector<8x128xf32>
    %9 = arith.truncf %8 : vector<8x128xf32> to vector<8x128xbf16>
    %c0_6 = arith.constant 0 : index
    %c0_7 = arith.constant 0 : index
    %10 = vector.load %arg4[%c0_6, %c0_7] : memref<128x128xbf16, #tpu.memory_space<vmem>>, vector<128x128xbf16>
    %cst_8 = arith.constant dense<0.000000e+00> : vector<8x128xf32>
    %11 = tpu.matmul %9, %10, %cst_8 {dimension_numbers = #tpu.dot_dimension_numbers<[1], [0], [0], [1], [0, 0, 1, 1], [], []>} : vector<8x128xbf16>, vector<128x128xbf16>, vector<8x128xf32> -> vector<8x128xf32>
    %c0_9 = arith.constant 0 : index
    %c0_10 = arith.constant 0 : index
    %12 = vector.load %arg5[%c0_9, %c0_10] : memref<1x128xf32, #tpu.memory_space<vmem>>, vector<1x128xf32>
    %13 = vector.broadcast %12 : vector<1x128xf32> to vector<8x128xf32>
    %14 = arith.addf %11, %13 : vector<8x128xf32>
    %cst_11 = arith.constant 0.000000e+00 : f32
    %15 = vector.broadcast %cst_11 : f32 to vector<8x128xf32>
    %16 = arith.maximumf %14, %15 : vector<8x128xf32>
    %17 = arith.truncf %16 : vector<8x128xf32> to vector<8x128xbf16>
    %c0_12 = arith.constant 0 : index
    %c0_13 = arith.constant 0 : index
    %18 = vector.load %arg6[%c0_12, %c0_13] : memref<128x128xbf16, #tpu.memory_space<vmem>>, vector<128x128xbf16>
    %cst_14 = arith.constant dense<0.000000e+00> : vector<8x128xf32>
    %19 = tpu.matmul %17, %18, %cst_14 {dimension_numbers = #tpu.dot_dimension_numbers<[1], [0], [0], [1], [0, 0, 1, 1], [], []>} : vector<8x128xbf16>, vector<128x128xbf16>, vector<8x128xf32> -> vector<8x128xf32>
    %c0_15 = arith.constant 0 : index
    %c0_16 = arith.constant 0 : index
    %20 = vector.load %arg7[%c0_15, %c0_16] : memref<1x128xf32, #tpu.memory_space<vmem>>, vector<1x128xf32>
    %21 = vector.broadcast %20 : vector<1x128xf32> to vector<8x128xf32>
    %22 = arith.addf %19, %21 : vector<8x128xf32>
    %cst_17 = arith.constant 0.000000e+00 : f32
    %23 = vector.broadcast %cst_17 : f32 to vector<8x128xf32>
    %24 = arith.maximumf %22, %23 : vector<8x128xf32>
    %25 = arith.truncf %24 : vector<8x128xf32> to vector<8x128xbf16>
    %c0_18 = arith.constant 0 : index
    %c0_19 = arith.constant 0 : index
    %26 = vector.load %arg8[%c0_18, %c0_19] : memref<128x128xbf16, #tpu.memory_space<vmem>>, vector<128x128xbf16>
    %cst_20 = arith.constant dense<0.000000e+00> : vector<8x128xf32>
    %27 = tpu.matmul %25, %26, %cst_20 {dimension_numbers = #tpu.dot_dimension_numbers<[1], [0], [0], [1], [0, 0, 1, 1], [], []>} : vector<8x128xbf16>, vector<128x128xbf16>, vector<8x128xf32> -> vector<8x128xf32>
    %c0_21 = arith.constant 0 : index
    %c0_22 = arith.constant 0 : index
    %28 = vector.load %arg9[%c0_21, %c0_22] : memref<1x128xf32, #tpu.memory_space<vmem>>, vector<1x128xf32>
    %29 = vector.broadcast %28 : vector<1x128xf32> to vector<8x128xf32>
    %30 = arith.addf %27, %29 : vector<8x128xf32>
    %c0_23 = arith.constant 0 : index
    %c0_24 = arith.constant 0 : index
    %31 = vector.load %arg10[%c0_23, %c0_24] : memref<8x128xf32, #tpu.memory_space<vmem>>, vector<8x128xf32>
    tpu.vector_store %arg10[%c0_23, %c0_24], %30 {strides = array<i32>} : memref<8x128xf32, #tpu.memory_space<vmem>>, vector<8x128xf32>,
    return
  }
  func.func @transform_0(%arg0: i32) -> (i32, i32) {
    %c0_i32 = arith.constant 0 : i32
    %c0_i32_0 = arith.constant 0 : i32
    return %arg0, %c0_i32 : i32, i32
  }
  func.func @transform_1(%arg0: i32) -> (i32, i32) {
    %c0_i32 = arith.constant 0 : i32
    %c0_i32_0 = arith.constant 0 : i32
    %c0_i32_1 = arith.constant 0 : i32
    return %c0_i32, %c0_i32_0 : i32, i32
  }
  func.func @transform_2(%arg0: i32) -> (i32, i32) {
    %c0_i32 = arith.constant 0 : i32
    %c0_i32_0 = arith.constant 0 : i32
    %c0_i32_1 = arith.constant 0 : i32
    return %c0_i32, %c0_i32_0 : i32, i32
  }
  func.func @transform_3(%arg0: i32) -> (i32, i32) {
    %c0_i32 = arith.constant 0 : i32
    %c0_i32_0 = arith.constant 0 : i32
    %c0_i32_1 = arith.constant 0 : i32
    return %c0_i32, %c0_i32_0 : i32, i32
  }
  func.func @transform_4(%arg0: i32) -> (i32, i32) {
    %c0_i32 = arith.constant 0 : i32
    %c0_i32_0 = arith.constant 0 : i32
    %c0_i32_1 = arith.constant 0 : i32
    return %c0_i32, %c0_i32_0 : i32, i32
  }
  func.func @transform_5(%arg0: i32) -> (i32, i32) {
    %c0_i32 = arith.constant 0 : i32
    %c0_i32_0 = arith.constant 0 : i32
    %c0_i32_1 = arith.constant 0 : i32
    return %c0_i32, %c0_i32_0 : i32, i32
  }
  func.func @transform_6(%arg0: i32) -> (i32, i32) {
    %c0_i32 = arith.constant 0 : i32
    %c0_i32_0 = arith.constant 0 : i32
    %c0_i32_1 = arith.constant 0 : i32
    return %c0_i32, %c0_i32_0 : i32, i32
  }
  func.func @transform_7(%arg0: i32) -> (i32, i32) {
    %c0_i32 = arith.constant 0 : i32
    %c0_i32_0 = arith.constant 0 : i32
    %c0_i32_1 = arith.constant 0 : i32
    return %c0_i32, %c0_i32_0 : i32, i32
  }
  func.func @transform_8(%arg0: i32) -> (i32, i32) {
    %c0_i32 = arith.constant 0 : i32
    %c0_i32_0 = arith.constant 0 : i32
    %c0_i32_1 = arith.constant 0 : i32
    return %c0_i32, %c0_i32_0 : i32, i32
  }
  func.func @transform_9(%arg0: i32) -> (i32, i32) {
    %c0_i32 = arith.constant 0 : i32
    %c0_i32_0 = arith.constant 0 : i32
    return %arg0, %c0_i32 : i32, i32
  }
}

</mosaic_0001>

<llo_original>
// kernel: tpu_custom_call.1
$region0: #{tpu_custom_call.1}
  #allocation0 [shape = 'u32[]', space=smem, size = 0x4, offset = 0x4, fixed_abs, tag = 'smem constant byte address 0x4 - core index']
  #allocation1 [shape = 'u32[144,128]{1,0:T(1,128)}', space=vmem, size = 0x12000, scoped, tag = 'internal scratch']
  %s0 = inlined_call_operand.hbm [shape: f32[16,3465], index: 0, kind: input, shape index: {}]
  %s1 = inlined_call_operand.hbm [shape: bf16[3465,128], index: 1, kind: input, shape index: {}]
  %s2 = inlined_call_operand.vmem [shape: f32[1,128], index: 2, kind: input, shape index: {}]
  %s3 = inlined_call_operand.hbm [shape: bf16[128,128], index: 3, kind: input, shape index: {}]
  %s4 = inlined_call_operand.vmem [shape: f32[1,128], index: 4, kind: input, shape index: {}]
  %s5 = inlined_call_operand.hbm [shape: bf16[128,128], index: 5, kind: input, shape index: {}]
  %s6 = inlined_call_operand.vmem [shape: f32[1,128], index: 6, kind: input, shape index: {}]
  %s7 = inlined_call_operand.hbm [shape: bf16[128,128], index: 7, kind: input, shape index: {}]
  %s8 = inlined_call_operand.vmem [shape: f32[1,128], index: 8, kind: input, shape index: {}]
  %s9 = inlined_call_operand.hbm [shape: f32[16,128], index: 9, kind: output, shape index: {}]
  %s10 = sld [smem:[#allocation0]]
  $region89: #{tpu_custom_call.1} parent=0
    _
  %s12 = ssub.s32 1, %s10
  %s13 = scalar_select 0, %s12, %s10
  $region1: #{tpu_custom_call.1} parent=0
    #allocation2 [shape = 'u8[229376]{0}', space=vmem, size = 0x38000, scoped, tag = 'input window, operand 0']
    #allocation3 [shape = 's32[2]{0}', space=sflag, size = 0x8, scoped, tag = 'scoped memory for tpu_custom_call.1']
    #allocation4 [shape = 's32[2]{0}', space=sflag, size = 0x8, scoped, tag = 'scoped memory for tpu_custom_call.1']
    #allocation5 [shape = 'u8[888832]{0}', space=vmem, size = 0xd9000, scoped, tag = 'input window, operand 1, single buffered']
    #allocation6 [shape = 's32[1]{0}', space=sflag, size = 0x4, scoped, tag = 'scoped memory for tpu_custom_call.1']
    #allocation7 [shape = 'u8[32768]{0}', space=vmem, size = 0x8000, scoped, tag = 'input window, operand 3, single buffered']
    #allocation8 [shape = 'u8[32768]{0}', space=vmem, size = 0x8000, scoped, tag = 'input window, operand 5, single buffered']
    #allocation9 [shape = 's32[1]{0}', space=sflag, size = 0x4, scoped, tag = 'scoped memory for tpu_custom_call.1']
    #allocation10 [shape = 'u8[32768]{0}', space=vmem, size = 0x8000, scoped, tag = 'input window, operand 7, single buffered']
    #allocation11 [shape = 'u8[8192]{0}', space=vmem, size = 0x2000, scoped, tag = 'output window, operand 0']
    %14 = vsyncpa [#allocation3], 0
    %s15 = scalar_lea.sflag [#allocation3], 1
    %16 = vsyncpa %s15, 0
    %17 = vsyncpa [#allocation6], 0
    %18 = vsyncpa [#allocation9], 0
    %19 = vsyncpa [#allocation4], 0
    %s20 = scalar_lea.sflag [#allocation4], 1
    %21 = vsyncpa %s20, 0
    loop: start=0, step=1, limit=4
    $region2: #{tpu_custom_call.1} parent=1 // loop_pre_header
      _
    $region3: #{tpu_custom_call.1} parent=1 // loop_header
      %s23 = sphi 0, %s27
      %p24 = scmp.ge.s32.totalorder %s23, 4
      %s33 = sphi 0, %s35
      %s36 = sphi 0, %s33
      %s37 = sphi 0, %s36
      %s53 = sphi 0, %s37
      %s57 = sphi 0, %s57
      %s59 = sphi 0, %s57
      %s60 = sphi 0, %s59
      %s74 = sphi 0, %s60
      %s78 = sphi 0, %s78
      %s80 = sphi 0, %s78
      %s81 = sphi 0, %s80
      %s95 = sphi 0, %s81
      %s99 = sphi 0, %s99
      %s101 = sphi 0, %s99
      %s102 = sphi 0, %s101
      %s116 = sphi 0, %s102
      %s120 = sphi 0, %s120
      %s122 = sphi 0, %s120
      %s123 = sphi 0, %s122
      %s137 = sphi 0, %s123
      %s141 = sphi 0, %s141
      %s143 = sphi 0, %s141
      %s144 = sphi 0, %s143
      %s158 = sphi 0, %s144
      %s162 = sphi 0, %s162
      %s164 = sphi 0, %s162
      %s165 = sphi 0, %s164
      %s179 = sphi 0, %s165
      %s183 = sphi 0, %s183
      %s185 = sphi 0, %s183
      %s186 = sphi 0, %s185
      %s200 = sphi 0, %s186
      %s204 = sphi 0, %s204
      %s206 = sphi 0, %s204
      %s207 = sphi 0, %s206
      %s221 = sphi 0, %s207
      %s227 = sphi 0, %s229
      %s230 = sphi 0, %s227
      %s231 = sphi 0, %s230
      %s247 = sphi 0, %s231
    $region4: #{tpu_custom_call.1} parent=1 // loop_header_branch
      %26 = sbr.rel (%p24) target = $region8
    $region5: #{tpu_custom_call.1} parent=1 // loop_body
      %s28 = ssub.s32 %s23, 1
      %s29 = ssub.s32 %s23, 2
      %s30 = sadd.s32 %s23, 1
      %s31 = ssub.s32 %s23, %s30
      %p32 = scmp.eq.s32.totalorder %s31, 0
      %s34 = sadd.s32 %s33, 1
      %s35 = scalar_select %p32, %s33, %s34
      %p38 = pneg %p32
      %p39 = scmp.eq.s32.totalorder %s23, 1
      %p40 = por %p38, %p39
      %p41 = scmp.ne.s32.totalorder %s33, %s36
      %p42 = scmp.eq.s32.totalorder %s23, 0
      %p43 = por %p41, %p42
      %p44 = scmp.ne.s32.totalorder %s33, %s36
      %p45 = scmp.eq.s32.totalorder %s28, 1
      %p46 = por %p44, %p45
      %p47 = scmp.ne.s32.totalorder %s36, %s37
      %p48 = scmp.eq.s32.totalorder %s28, 0
      %p49 = por %p47, %p48
      %p50 = scmp.ne.s32.totalorder %s36, %s37
      %p51 = scmp.eq.s32.totalorder %s29, 1
      %p52 = por %p50, %p51
      %p54 = scmp.ne.s32.totalorder %s37, %s53
      %p55 = scmp.eq.s32.totalorder %s29, 0
      %p56 = por %p54, %p55
      %s58 = sadd.s32 %s57, 1
      %p61 = scmp.eq.s32.totalorder %s23, 1
      %p62 = scmp.ne.s32.totalorder %s57, %s59
      %p63 = scmp.eq.s32.totalorder %s23, 0
      %p64 = por %p62, %p63
      %p65 = scmp.ne.s32.totalorder %s57, %s59
      %p66 = scmp.eq.s32.totalorder %s28, 1
      %p67 = por %p65, %p66
      %p68 = scmp.ne.s32.totalorder %s59, %s60
      %p69 = scmp.eq.s32.totalorder %s28, 0
      %p70 = por %p68, %p69
      %p71 = scmp.ne.s32.totalorder %s59, %s60
      %p72 = scmp.eq.s32.totalorder %s29, 1
      %p73 = por %p71, %p72
      %p75 = scmp.ne.s32.totalorder %s60, %s74
      %p76 = scmp.eq.s32.totalorder %s29, 0
      %p77 = por %p75, %p76
      %s79 = sadd.s32 %s78, 1
      %p82 = scmp.eq.s32.totalorder %s23, 1
      %p83 = scmp.ne.s32.totalorder %s78, %s80
      %p84 = scmp.eq.s32.totalorder %s23, 0
      %p85 = por %p83, %p84
      %p86 = scmp.ne.s32.totalorder %s78, %s80
      %p87 = scmp.eq.s32.totalorder %s28, 1
      %p88 = por %p86, %p87
      %p89 = scmp.ne.s32.totalorder %s80, %s81
      %p90 = scmp.eq.s32.totalorder %s28, 0
      %p91 = por %p89, %p90
      %p92 = scmp.ne.s32.totalorder %s80, %s81
      %p93 = scmp.eq.s32.totalorder %s29, 1
      %p94 = por %p92, %p93
      %p96 = scmp.ne.s32.totalorder %s81, %s95
      %p97 = scmp.eq.s32.totalorder %s29, 0
      %p98 = por %p96, %p97
      %s100 = sadd.s32 %s99, 1
      %p103 = scmp.eq.s32.totalorder %s23, 1
      %p104 = scmp.ne.s32.totalorder %s99, %s101
      %p105 = scmp.eq.s32.totalorder %s23, 0
      %p106 = por %p104, %p105
      %p107 = scmp.ne.s32.totalorder %s99, %s101
      %p108 = scmp.eq.s32.totalorder %s28, 1
      %p109 = por %p107, %p108
      %p110 = scmp.ne.s32.totalorder %s101, %s102
      %p111 = scmp.eq.s32.totalorder %s28, 0
      %p112 = por %p110, %p111
      %p113 = scmp.ne.s32.totalorder %s101, %s102
      %p114 = scmp.eq.s32.totalorder %s29, 1
      %p115 = por %p113, %p114
      %p117 = scmp.ne.s32.totalorder %s102, %s116
      %p118 = scmp.eq.s32.totalorder %s29, 0
      %p119 = por %p117, %p118
      %s121 = sadd.s32 %s120, 1
      %p124 = scmp.eq.s32.totalorder %s23, 1
      %p125 = scmp.ne.s32.totalorder %s120, %s122
      %p126 = scmp.eq.s32.totalorder %s23, 0
      %p127 = por %p125, %p126
      %p128 = scmp.ne.s32.totalorder %s120, %s122
      %p129 = scmp.eq.s32.totalorder %s28, 1
      %p130 = por %p128, %p129
      %p131 = scmp.ne.s32.totalorder %s122, %s123
      %p132 = scmp.eq.s32.totalorder %s28, 0
      %p133 = por %p131, %p132
      %p134 = scmp.ne.s32.totalorder %s122, %s123
      %p135 = scmp.eq.s32.totalorder %s29, 1
      %p136 = por %p134, %p135
      %p138 = scmp.ne.s32.totalorder %s123, %s137
      %p139 = scmp.eq.s32.totalorder %s29, 0
      %p140 = por %p138, %p139
      %s142 = sadd.s32 %s141, 1
      %p145 = scmp.eq.s32.totalorder %s23, 1
      %p146 = scmp.ne.s32.totalorder %s141, %s143
      %p147 = scmp.eq.s32.totalorder %s23, 0
      %p148 = por %p146, %p147
      %p149 = scmp.ne.s32.totalorder %s141, %s143
      %p150 = scmp.eq.s32.totalorder %s28, 1
      %p151 = por %p149, %p150
      %p152 = scmp.ne.s32.totalorder %s143, %s144
      %p153 = scmp.eq.s32.totalorder %s28, 0
      %p154 = por %p152, %p153
      %p155 = scmp.ne.s32.totalorder %s143, %s144
      %p156 = scmp.eq.s32.totalorder %s29, 1
      %p157 = por %p155, %p156
      %p159 = scmp.ne.s32.totalorder %s144, %s158
      %p160 = scmp.eq.s32.totalorder %s29, 0
      %p161 = por %p159, %p160
      %s163 = sadd.s32 %s162, 1
      %p166 = scmp.eq.s32.totalorder %s23, 1
      %p167 = scmp.ne.s32.totalorder %s162, %s164
      %p168 = scmp.eq.s32.totalorder %s23, 0
      %p169 = por %p167, %p168
      %p170 = scmp.ne.s32.totalorder %s162, %s164
      %p171 = scmp.eq.s32.totalorder %s28, 1
      %p172 = por %p170, %p171
      %p173 = scmp.ne.s32.totalorder %s164, %s165
      %p174 = scmp.eq.s32.totalorder %s28, 0
      %p175 = por %p173, %p174
      %p176 = scmp.ne.s32.totalorder %s164, %s165
      %p177 = scmp.eq.s32.totalorder %s29, 1
      %p178 = por %p176, %p177
      %p180 = scmp.ne.s32.totalorder %s165, %s179
      %p181 = scmp.eq.s32.totalorder %s29, 0
      %p182 = por %p180, %p181
      %s184 = sadd.s32 %s183, 1
      %p187 = scmp.eq.s32.totalorder %s23, 1
      %p188 = scmp.ne.s32.totalorder %s183, %s185
      %p189 = scmp.eq.s32.totalorder %s23, 0
      %p190 = por %p188, %p189
      %p191 = scmp.ne.s32.totalorder %s183, %s185
      %p192 = scmp.eq.s32.totalorder %s28, 1
      %p193 = por %p191, %p192
      %p194 = scmp.ne.s32.totalorder %s185, %s186
      %p195 = scmp.eq.s32.totalorder %s28, 0
      %p196 = por %p194, %p195
      %p197 = scmp.ne.s32.totalorder %s185, %s186
      %p198 = scmp.eq.s32.totalorder %s29, 1
      %p199 = por %p197, %p198
      %p201 = scmp.ne.s32.totalorder %s186, %s200
      %p202 = scmp.eq.s32.totalorder %s29, 0
      %p203 = por %p201, %p202
      %s205 = sadd.s32 %s204, 1
      %p208 = scmp.eq.s32.totalorder %s23, 1
      %p209 = scmp.ne.s32.totalorder %s204, %s206
      %p210 = scmp.eq.s32.totalorder %s23, 0
      %p211 = por %p209, %p210
      %p212 = scmp.ne.s32.totalorder %s204, %s206
      %p213 = scmp.eq.s32.totalorder %s28, 1
      %p214 = por %p212, %p213
      %p215 = scmp.ne.s32.totalorder %s206, %s207
      %p216 = scmp.eq.s32.totalorder %s28, 0
      %p217 = por %p215, %p216
      %p218 = scmp.ne.s32.totalorder %s206, %s207
      %p219 = scmp.eq.s32.totalorder %s29, 1
      %p220 = por %p218, %p219
      %p222 = scmp.ne.s32.totalorder %s207, %s221
      %p223 = scmp.eq.s32.totalorder %s29, 0
      %p224 = por %p222, %p223
      %s225 = ssub.s32 %s23, %s30
      %p226 = scmp.eq.s32.totalorder %s225, 0
      %s228 = sadd.s32 %s227, 1
      %s229 = scalar_select %p226, %s227, %s228
      %p232 = pneg %p226
      %p233 = scmp.eq.s32.totalorder %s23, 1
      %p234 = por %p232, %p233
      %p235 = scmp.ne.s32.totalorder %s227, %s230
      %p236 = scmp.eq.s32.totalorder %s23, 0
      %p237 = por %p235, %p236
      %p238 = scmp.ne.s32.totalorder %s227, %s230
      %p239 = scmp.eq.s32.totalorder %s28, 1
      %p240 = por %p238, %p239
      %p241 = scmp.ne.s32.totalorder %s230, %s231
      %p242 = scmp.eq.s32.totalorder %s28, 0
      %p243 = por %p241, %p242
      %p244 = scmp.ne.s32.totalorder %s230, %s231
      %p245 = scmp.eq.s32.totalorder %s29, 1
      %p246 = por %p244, %p245
      %p248 = scmp.ne.s32.totalorder %s231, %s247
      %p249 = scmp.eq.s32.totalorder %s29, 0
      %p250 = por %p248, %p249
      %p251 = scmp.le.s32.totalorder 1, %s23
      %p252 = scmp.lt.s32.totalorder %s23, 3
      %p253 = pnand %p251, %p252
      %p254 = pneg %p253
      // Predicated region
      $region9: #{tpu_custom_call.1} parent=5 // pred_check
        _
      $region10: #{tpu_custom_call.1} parent=5 // pred_check_branch
        %256 = sbr.rel (%p253) target = $region12
      $region11: #{tpu_custom_call.1} parent=5 // pred_region
        %s257 = ssub.s32 %s23, 1
        // Predicated region
        $region13: #{tpu_custom_call.1} parent=11 // pred_check
          %p258 = pneg %p70
        $region14: #{tpu_custom_call.1} parent=11 // pred_check_branch
          %260 = sbr.rel (%p258) target = $region16
        $region15: #{tpu_custom_call.1} parent=11 // pred_region
          %s262 = ssub.s32 27776, 27776
          %263 = vsyncadd [#allocation6], %s262
          %s264 = sshll.u32 [#allocation5], 4
          %s265 = int_to_ptr.vmem [resolvable:$true] %s264
          %270 = dma.hbm_to_vmem [thread:$0]  %s1, 27776, %s265, [#allocation6], 64, 64, 4
        $region16: #{tpu_custom_call.1} parent=11 // pred_fallthru
          _
        // Predicated region
        $region17: #{tpu_custom_call.1} parent=11 // pred_check
          %p271 = pneg %p91
        $region18: #{tpu_custom_call.1} parent=11 // pred_check_branch
          %273 = sbr.rel (%p271) target = $region20
        $region19: #{tpu_custom_call.1} parent=11 // pred_region
          _
        $region20: #{tpu_custom_call.1} parent=11 // pred_fallthru
          _
        // Predicated region
        $region21: #{tpu_custom_call.1} parent=11 // pred_check
          %p274 = pneg %p112
        $region22: #{tpu_custom_call.1} parent=11 // pred_check_branch
          %276 = sbr.rel (%p274) target = $region24
        $region23: #{tpu_custom_call.1} parent=11 // pred_region
          %s278 = ssub.s32 1024, 1024
          %279 = vsyncadd [#allocation6], %s278
          %s280 = sshll.u32 [#allocation7], 4
          %s281 = int_to_ptr.vmem [resolvable:$true] %s280
          %286 = dma.hbm_to_vmem [thread:$0]  %s3, 1024, %s281, [#allocation6], 64, 64, 4
        $region24: #{tpu_custom_call.1} parent=11 // pred_fallthru
          _
        // Predicated region
        $region25: #{tpu_custom_call.1} parent=11 // pred_check
          %p287 = pneg %p133
        $region26: #{tpu_custom_call.1} parent=11 // pred_check_branch
          %289 = sbr.rel (%p287) target = $region28
        $region27: #{tpu_custom_call.1} parent=11 // pred_region
          _
        $region28: #{tpu_custom_call.1} parent=11 // pred_fallthru
          _
        // Predicated region
        $region29: #{tpu_custom_call.1} parent=11 // pred_check
          %p290 = pneg %p154
        $region30: #{tpu_custom_call.1} parent=11 // pred_check_branch
          %292 = sbr.rel (%p290) target = $region32
        $region31: #{tpu_custom_call.1} parent=11 // pred_region
          %s294 = ssub.s32 1024, 1024
          %295 = vsyncadd [#allocation9], %s294
          %s296 = sshll.u32 [#allocation8], 4
          %s297 = int_to_ptr.vmem [resolvable:$true] %s296
          %302 = dma.hbm_to_vmem [thread:$0]  %s5, 1024, %s297, [#allocation9], 64, 64, 4
        $region32: #{tpu_custom_call.1} parent=11 // pred_fallthru
          _
        // Predicated region
        $region33: #{tpu_custom_call.1} parent=11 // pred_check
          %p303 = pneg %p175
        $region34: #{tpu_custom_call.1} parent=11 // pred_check_branch
          %305 = sbr.rel (%p303) target = $region36
        $region35: #{tpu_custom_call.1} parent=11 // pred_region
          _
        $region36: #{tpu_custom_call.1} parent=11 // pred_fallthru
          _
        // Predicated region
        $region37: #{tpu_custom_call.1} parent=11 // pred_check
          %p306 = pneg %p196
        $region38: #{tpu_custom_call.1} parent=11 // pred_check_branch
          %308 = sbr.rel (%p306) target = $region40
        $region39: #{tpu_custom_call.1} parent=11 // pred_region
          %s310 = ssub.s32 1024, 1024
          %311 = vsyncadd [#allocation9], %s310
          %s312 = sshll.u32 [#allocation10], 4
          %s313 = int_to_ptr.vmem [resolvable:$true] %s312
          %318 = dma.hbm_to_vmem [thread:$0]  %s7, 1024, %s313, [#allocation9], 64, 64, 4
        $region40: #{tpu_custom_call.1} parent=11 // pred_fallthru
          _
        // Predicated region
        $region41: #{tpu_custom_call.1} parent=11 // pred_check
          %p319 = pneg %p217
        $region42: #{tpu_custom_call.1} parent=11 // pred_check_branch
          %321 = sbr.rel (%p319) target = $region44
        $region43: #{tpu_custom_call.1} parent=11 // pred_region
          _
        $region44: #{tpu_custom_call.1} parent=11 // pred_fallthru
          _
      $region12: #{tpu_custom_call.1} parent=5 // pred_fallthru
        _
      %p322 = scmp.lt.s32.totalorder %s23, 2
      // Predicated region
      $region45: #{tpu_custom_call.1} parent=5 // pred_check
        %p323 = pneg %p322
      $region46: #{tpu_custom_call.1} parent=5 // pred_check_branch
        %325 = sbr.rel (%p323) target = $region48
      $region47: #{tpu_custom_call.1} parent=5 // pred_region
        // Predicated region
        $region49: #{tpu_custom_call.1} parent=47 // pred_check
          %p326 = pneg %p43
        $region50: #{tpu_custom_call.1} parent=47 // pred_check_branch
          %328 = sbr.rel (%p326) target = $region52
        $region51: #{tpu_custom_call.1} parent=47 // pred_region
          %s329 = sand.u32 %s33, 1
          %s330 = scalar_lea.sflag [#allocation3], %s329
          %s331 = sand.u32 %s33, 1
          %s332 = smul.addr %s331, 224
          %s333 = scalar_lea.vmem [#allocation2], %s332
          %s335 = ssub.s32 3584, 3584
          %336 = vsyncadd %s330, %s335
          %s337 = smul.addr %s23, 28
          %s338 = smul.addr %s337, 128
          %s339 = scalar_lea.hbm %s0, %s338
          %s341 = sshll.u32 %s333, 4
          %s342 = int_to_ptr.vmem [resolvable:$true] %s341
          %344 = dma.hbm_to_vmem [thread:$0]  %s339, 3584, %s342, %s330
        $region52: #{tpu_custom_call.1} parent=47 // pred_fallthru
          _
      $region48: #{tpu_custom_call.1} parent=5 // pred_fallthru
        _
      %p345 = scmp.le.s32.totalorder 1, %s23
      %p346 = scmp.lt.s32.totalorder %s23, 3
      %p347 = pnand %p345, %p346
      %p348 = pneg %p347
      // Predicated region
      $region53: #{tpu_custom_call.1} parent=5 // pred_check
        _
      $region54: #{tpu_custom_call.1} parent=5 // pred_check_branch
        %350 = sbr.rel (%p347) target = $region56
      $region55: #{tpu_custom_call.1} parent=5 // pred_region
        %s351 = ssub.s32 %s23, 1
        %s352 = sand.u32 %s36, 1
        %s353 = scalar_lea.sflag [#allocation3], %s352
        %s354 = sand.u32 %s36, 1
        %s355 = smul.addr %s354, 224
        %s356 = scalar_lea.vmem [#allocation2], %s355
        // Predicated region
        $region57: #{tpu_custom_call.1} parent=55 // pred_check
          %p357 = pneg %p49
        $region58: #{tpu_custom_call.1} parent=55 // pred_check_branch
          %359 = sbr.rel (%p357) target = $region60
        $region59: #{tpu_custom_call.1} parent=55 // pred_region
          %360 = dma.done %s353, 3584
        $region60: #{tpu_custom_call.1} parent=55 // pred_fallthru
          _
        // Predicated region
        $region61: #{tpu_custom_call.1} parent=55 // pred_check
          %p361 = pneg %p70
        $region62: #{tpu_custom_call.1} parent=55 // pred_check_branch
          %363 = sbr.rel (%p361) target = $region64
        $region63: #{tpu_custom_call.1} parent=55 // pred_region
          %364 = dma.done [#allocation6], 27776
        $region64: #{tpu_custom_call.1} parent=55 // pred_fallthru
          _
        // Predicated region
        $region65: #{tpu_custom_call.1} parent=55 // pred_check
          %p365 = pneg %p112
        $region66: #{tpu_custom_call.1} parent=55 // pred_check_branch
          %367 = sbr.rel (%p365) target = $region68
        $region67: #{tpu_custom_call.1} parent=55 // pred_region
          %368 = dma.done [#allocation6], 1024
        $region68: #{tpu_custom_call.1} parent=55 // pred_fallthru
          _
        // Predicated region
        $region69: #{tpu_custom_call.1} parent=55 // pred_check
          %p369 = pneg %p154
        $region70: #{tpu_custom_call.1} parent=55 // pred_check_branch
          %371 = sbr.rel (%p369) target = $region72
        $region71: #{tpu_custom_call.1} parent=55 // pred_region
          %372 = dma.done [#allocation9], 1024
        $region72: #{tpu_custom_call.1} parent=55 // pred_fallthru
          _
        // Predicated region
        $region73: #{tpu_custom_call.1} parent=55 // pred_check
          %p373 = pneg %p196
        $region74: #{tpu_custom_call.1} parent=55 // pred_check_branch
          %375 = sbr.rel (%p373) target = $region76
        $region75: #{tpu_custom_call.1} parent=55 // pred_region
          %376 = dma.done [#allocation9], 1024
        $region76: #{tpu_custom_call.1} parent=55 // pred_fallthru
          _
        %s377 = sand.u32 %s36, 1
        %s378 = scalar_lea.sflag [#allocation3], %s377
        %s379 = sand.u32 %s36, 1
        %s380 = smul.addr %s379, 224
        %s381 = scalar_lea.vmem [#allocation2], %s380
        %p382 = pneg %p49
        %p383 = pneg %p46
        %p384 = pneg %p70
        %p385 = pneg %p67
        %p386 = pneg %p91
        %p387 = pneg %p88
        %p388 = pneg %p112
        %p389 = pneg %p109
        %p390 = pneg %p133
        %p391 = pneg %p130
        %p392 = pneg %p154
        %p393 = pneg %p151
        %p394 = pneg %p175
        %p395 = pneg %p172
        %p396 = pneg %p196
        %p397 = pneg %p193
        %p398 = pneg %p217
        %p399 = pneg %p214
        %p400 = pneg %p243
        %p401 = pneg %p240
        %s402 = sand.u32 %s230, 1
        %s403 = scalar_lea.sflag [#allocation4], %s402
        %s404 = sand.u32 %s230, 1
        %s405 = smul.addr %s404, 8
        %s406 = scalar_lea.vmem [#allocation11], %s405
        %v408 = vld [vmem:[%s356] sm:$0xff]
        %v409 = vld [vmem:[%s356 + $0x8] sm:$0xff]
        %v410 = vld [vmem:[%s356 + $0x10] sm:$0xff]
        %v411 = vld [vmem:[%s356 + $0x18] sm:$0xff]
        %v412 = vld [vmem:[%s356 + $0x20] sm:$0xff]
        %v413 = vld [vmem:[%s356 + $0x28] sm:$0xff]
        %v414 = vld [vmem:[%s356 + $0x30] sm:$0xff]
        %v415 = vld [vmem:[%s356 + $0x38] sm:$0xff]
        %v416 = vld [vmem:[%s356 + $0x40] sm:$0xff]
        %v417 = vld [vmem:[%s356 + $0x48] sm:$0xff]
        %v418 = vld [vmem:[%s356 + $0x50] sm:$0xff]
        %v419 = vld [vmem:[%s356 + $0x58] sm:$0xff]
        %v420 = vld [vmem:[%s356 + $0x60] sm:$0xff]
        %v421 = vld [vmem:[%s356 + $0x68] sm:$0xff]
        %v422 = vld [vmem:[%s356 + $0x70] sm:$0xff]
        %v423 = vld [vmem:[%s356 + $0x78] sm:$0xff]
        %v424 = vld [vmem:[%s356 + $0x80] sm:$0xff]
        %v425 = vld [vmem:[%s356 + $0x88] sm:$0xff]
        %v426 = vld [vmem:[%s356 + $0x90] sm:$0xff]
        %v427 = vld [vmem:[%s356 + $0x98] sm:$0xff]
        %v428 = vld [vmem:[%s356 + $0xa0] sm:$0xff]
        %v429 = vld [vmem:[%s356 + $0xa8] sm:$0xff]
        %v430 = vld [vmem:[%s356 + $0xb0] sm:$0xff]
        %v431 = vld [vmem:[%s356 + $0xb8] sm:$0xff]
        %v432 = vld [vmem:[%s356 + $0xc0] sm:$0xff]
        %v433 = vld [vmem:[%s356 + $0xc8] sm:$0xff]
        %v434 = vld [vmem:[%s356 + $0xd0] sm:$0xff]
        %v435 = vld [vmem:[%s356 + $0xd8] sm:$0xff]
        %v436 = vpack.c.bf16 %v408, %v408
        %v437 = vpack.c.bf16 %v409, %v409
        %v438 = vpack.c.bf16 %v410, %v410
        %v439 = vpack.c.bf16 %v411, %v411
        %v440 = vpack.c.bf16 %v412, %v412
        %v441 = vpack.c.bf16 %v413, %v413
        %v442 = vpack.c.bf16 %v414, %v414
        %v443 = vpack.c.bf16 %v415, %v415
        %v444 = vpack.c.bf16 %v416, %v416
        %v445 = vpack.c.bf16 %v417, %v417
        %v446 = vpack.c.bf16 %v418, %v418
        %v447 = vpack.c.bf16 %v419, %v419
        %v448 = vpack.c.bf16 %v420, %v420
        %v449 = vpack.c.bf16 %v421, %v421
        %v450 = vpack.c.bf16 %v422, %v422
        %v451 = vpack.c.bf16 %v423, %v423
        %v452 = vpack.c.bf16 %v424, %v424
        %v453 = vpack.c.bf16 %v425, %v425
        %v454 = vpack.c.bf16 %v426, %v426
        %v455 = vpack.c.bf16 %v427, %v427
        %v456 = vpack.c.bf16 %v428, %v428
        %v457 = vpack.c.bf16 %v429, %v429
        %v458 = vpack.c.bf16 %v430, %v430
        %v459 = vpack.c.bf16 %v431, %v431
        %v460 = vpack.c.bf16 %v432, %v432
        %v461 = vpack.c.bf16 %v433, %v433
        %v462 = vpack.c.bf16 %v434, %v434
        %v463 = vpack.c.bf16 %v435, %v435
        %v464 = vld [vmem:[#allocation5] sm:$0xf]
        %v465 = vld [vmem:[#allocation5 + $0x4] sm:$0xf]
        %v466 = vld [vmem:[#allocation5 + $0x8] sm:$0xf]
        %v467 = vld [vmem:[#allocation5 + $0xc] sm:$0xf]
        %v468 = vld [vmem:[#allocation5 + $0x10] sm:$0xf]
        %v469 = vld [vmem:[#allocation5 + $0x14] sm:$0xf]
        %v470 = vld [vmem:[#allocation5 + $0x18] sm:$0xf]
        %v471 = vld [vmem:[#allocation5 + $0x1c] sm:$0xf]
        %v472 = vld [vmem:[#allocation5 + $0x20] sm:$0xf]
        %v473 = vld [vmem:[#allocation5 + $0x24] sm:$0xf]
        %v474 = vld [vmem:[#allocation5 + $0x28] sm:$0xf]
        %v475 = vld [vmem:[#allocation5 + $0x2c] sm:$0xf]
        %v476 = vld [vmem:[#allocation5 + $0x30] sm:$0xf]
        %v477 = vld [vmem:[#allocation5 + $0x34] sm:$0xf]
        %v478 = vld [vmem:[#allocation5 + $0x38] sm:$0xf]
        %v479 = vld [vmem:[#allocation5 + $0x3c] sm:$0xf]
        %v480 = vld [vmem:[#allocation5 + $0x40] sm:$0xf]
        %v481 = vld [vmem:[#allocation5 + $0x44] sm:$0xf]
        %v482 = vld [vmem:[#allocation5 + $0x48] sm:$0xf]
        %v483 = vld [vmem:[#allocation5 + $0x4c] sm:$0xf]
        %v484 = vld [vmem:[#allocation5 + $0x50] sm:$0xf]
        %v485 = vld [vmem:[#allocation5 + $0x54] sm:$0xf]
        %v486 = vld [vmem:[#allocation5 + $0x58] sm:$0xf]
        %v487 = vld [vmem:[#allocation5 + $0x5c] sm:$0xf]
        %v488 = vld [vmem:[#allocation5 + $0x60] sm:$0xf]
        %v489 = vld [vmem:[#allocation5 + $0x64] sm:$0xf]
        %v490 = vld [vmem:[#allocation5 + $0x68] sm:$0xf]
        %v491 = vld [vmem:[#allocation5 + $0x6c] sm:$0xf]
        %v492 = vld [vmem:[#allocation5 + $0x70] sm:$0xf]
        %v493 = vld [vmem:[#allocation5 + $0x74] sm:$0xf]
        %v494 = vld [vmem:[#allocation5 + $0x78] sm:$0xf]
        %v495 = vld [vmem:[#allocation5 + $0x7c] sm:$0xf]
        %v496 = vld [vmem:[#allocation5 + $0x80] sm:$0xf]
        %v497 = vld [vmem:[#allocation5 + $0x84] sm:$0xf]
        %v498 = vld [vmem:[#allocation5 + $0x88] sm:$0xf]
        %v499 = vld [vmem:[#allocation5 + $0x8c] sm:$0xf]
        %v500 = vld [vmem:[#allocation5 + $0x90] sm:$0xf]
        %v501 = vld [vmem:[#allocation5 + $0x94] sm:$0xf]
        %v502 = vld [vmem:[#allocation5 + $0x98] sm:$0xf]
        %v503 = vld [vmem:[#allocation5 + $0x9c] sm:$0xf]
        %v504 = vld [vmem:[#allocation5 + $0xa0] sm:$0xf]
        %v505 = vld [vmem:[#allocation5 + $0xa4] sm:$0xf]
        %v506 = vld [vmem:[#allocation5 + $0xa8] sm:$0xf]
        %v507 = vld [vmem:[#allocation5 + $0xac] sm:$0xf]
        %v508 = vld [vmem:[#allocation5 + $0xb0] sm:$0xf]
        %v509 = vld [vmem:[#allocation5 + $0xb4] sm:$0xf]
        %v510 = vld [vmem:[#allocation5 + $0xb8] sm:$0xf]
        %v511 = vld [vmem:[#allocation5 + $0xbc] sm:$0xf]
        %v512 = vld [vmem:[#allocation5 + $0xc0] sm:$0xf]
        %v513 = vld [vmem:[#allocation5 + $0xc4] sm:$0xf]
        %v514 = vld [vmem:[#allocation5 + $0xc8] sm:$0xf]
        %v515 = vld [vmem:[#allocation5 + $0xcc] sm:$0xf]
        %v516 = vld [vmem:[#allocation5 + $0xd0] sm:$0xf]
        %v517 = vld [vmem:[#allocation5 + $0xd4] sm:$0xf]
        %v518 = vld [vmem:[#allocation5 + $0xd8] sm:$0xf]
        %v519 = vld [vmem:[#allocation5 + $0xdc] sm:$0xf]
        %v520 = vld [vmem:[#allocation5 + $0xe0] sm:$0xf]
        %v521 = vld [vmem:[#allocation5 + $0xe4] sm:$0xf]
        %v522 = vld [vmem:[#allocation5 + $0xe8] sm:$0xf]
        %v523 = vld [vmem:[#allocation5 + $0xec] sm:$0xf]
        %v524 = vld [vmem:[#allocation5 + $0xf0] sm:$0xf]
        %v525 = vld [vmem:[#allocation5 + $0xf4] sm:$0xf]
        %v526 = vld [vmem:[#allocation5 + $0xf8] sm:$0xf]
        %v527 = vld [vmem:[#allocation5 + $0xfc] sm:$0xf]
        %v528 = vld [vmem:[#allocation5 + $0x100] sm:$0xf]
        %v529 = vld [vmem:[#allocation5 + $0x104] sm:$0xf]
        %v530 = vld [vmem:[#allocation5 + $0x108] sm:$0xf]
        %v531 = vld [vmem:[#allocation5 + $0x10c] sm:$0xf]
        %v532 = vld [vmem:[#allocation5 + $0x110] sm:$0xf]
        %v533 = vld [vmem:[#allocation5 + $0x114] sm:$0xf]
        %v534 = vld [vmem:[#allocation5 + $0x118] sm:$0xf]
        %v535 = vld [vmem:[#allocation5 + $0x11c] sm:$0xf]
        %v536 = vld [vmem:[#allocation5 + $0x120] sm:$0xf]
        %v537 = vld [vmem:[#allocation5 + $0x124] sm:$0xf]
        %v538 = vld [vmem:[#allocation5 + $0x128] sm:$0xf]
        %v539 = vld [vmem:[#allocation5 + $0x12c] sm:$0xf]
        %v540 = vld [vmem:[#allocation5 + $0x130] sm:$0xf]
        %v541 = vld [vmem:[#allocation5 + $0x134] sm:$0xf]
        %v542 = vld [vmem:[#allocation5 + $0x138] sm:$0xf]
        %v543 = vld [vmem:[#allocation5 + $0x13c] sm:$0xf]
        %v544 = vld [vmem:[#allocation5 + $0x140] sm:$0xf]
        %v545 = vld [vmem:[#allocation5 + $0x144] sm:$0xf]
        %v546 = vld [vmem:[#allocation5 + $0x148] sm:$0xf]
        %v547 = vld [vmem:[#allocation5 + $0x14c] sm:$0xf]
        %v548 = vld [vmem:[#allocation5 + $0x150] sm:$0xf]
        %v549 = vld [vmem:[#allocation5 + $0x154] sm:$0xf]
        %v550 = vld [vmem:[#allocation5 + $0x158] sm:$0xf]
        %v551 = vld [vmem:[#allocation5 + $0x15c] sm:$0xf]
        %v552 = vld [vmem:[#allocation5 + $0x160] sm:$0xf]
        %v553 = vld [vmem:[#allocation5 + $0x164] sm:$0xf]
        %v554 = vld [vmem:[#allocation5 + $0x168] sm:$0xf]
        %v555 = vld [vmem:[#allocation5 + $0x16c] sm:$0xf]
        %v556 = vld [vmem:[#allocation5 + $0x170] sm:$0xf]
        %v557 = vld [vmem:[#allocation5 + $0x174] sm:$0xf]
        %v558 = vld [vmem:[#allocation5 + $0x178] sm:$0xf]
        %v559 = vld [vmem:[#allocation5 + $0x17c] sm:$0xf]
        %v560 = vld [vmem:[#allocation5 + $0x180] sm:$0xf]
        %v561 = vld [vmem:[#allocation5 + $0x184] sm:$0xf]
        %v562 = vld [vmem:[#allocation5 + $0x188] sm:$0xf]
        %v563 = vld [vmem:[#allocation5 + $0x18c] sm:$0xf]
        %v564 = vld [vmem:[#allocation5 + $0x190] sm:$0xf]
        %v565 = vld [vmem:[#allocation5 + $0x194] sm:$0xf]
        %v566 = vld [vmem:[#allocation5 + $0x198] sm:$0xf]
        %v567 = vld [vmem:[#allocation5 + $0x19c] sm:$0xf]
        %v568 = vld [vmem:[#allocation5 + $0x1a0] sm:$0xf]
        %v569 = vld [vmem:[#allocation5 + $0x1a4] sm:$0xf]
        %v570 = vld [vmem:[#allocation5 + $0x1a8] sm:$0xf]
        %v571 = vld [vmem:[#allocation5 + $0x1ac] sm:$0xf]
        %v572 = vld [vmem:[#allocation5 + $0x1b0] sm:$0xf]
        %v573 = vld [vmem:[#allocation5 + $0x1b4] sm:$0xf]
        %v574 = vld [vmem:[#allocation5 + $0x1b8] sm:$0xf]
        %v575 = vld [vmem:[#allocation5 + $0x1bc] sm:$0xf]
        %v576 = vld [vmem:[#allocation5 + $0x1c0] sm:$0xf]
        %v577 = vld [vmem:[#allocation5 + $0x1c4] sm:$0xf]
        %v578 = vld [vmem:[#allocation5 + $0x1c8] sm:$0xf]
        %v579 = vld [vmem:[#allocation5 + $0x1cc] sm:$0xf]
        %v580 = vld [vmem:[#allocation5 + $0x1d0] sm:$0xf]
        %v581 = vld [vmem:[#allocation5 + $0x1d4] sm:$0xf]
        %v582 = vld [vmem:[#allocation5 + $0x1d8] sm:$0xf]
        %v583 = vld [vmem:[#allocation5 + $0x1dc] sm:$0xf]
        %v584 = vld [vmem:[#allocation5 + $0x1e0] sm:$0xf]
        %v585 = vld [vmem:[#allocation5 + $0x1e4] sm:$0xf]
        %v586 = vld [vmem:[#allocation5 + $0x1e8] sm:$0xf]
        %v587 = vld [vmem:[#allocation5 + $0x1ec] sm:$0xf]
        %v588 = vld [vmem:[#allocation5 + $0x1f0] sm:$0xf]
        %v589 = vld [vmem:[#allocation5 + $0x1f4] sm:$0xf]
        %v590 = vld [vmem:[#allocation5 + $0x1f8] sm:$0xf]
        %v591 = vld [vmem:[#allocation5 + $0x1fc] sm:$0xf]
        %v592 = vld [vmem:[#allocation5 + $0x200] sm:$0xf]
        %v593 = vld [vmem:[#allocation5 + $0x204] sm:$0xf]
        %v594 = vld [vmem:[#allocation5 + $0x208] sm:$0xf]
        %v595 = vld [vmem:[#allocation5 + $0x20c] sm:$0xf]
        %v596 = vld [vmem:[#allocation5 + $0x210] sm:$0xf]
        %v597 = vld [vmem:[#allocation5 + $0x214] sm:$0xf]
        %v598 = vld [vmem:[#allocation5 + $0x218] sm:$0xf]
        %v599 = vld [vmem:[#allocation5 + $0x21c] sm:$0xf]
        %v600 = vld [vmem:[#allocation5 + $0x220] sm:$0xf]
        %v601 = vld [vmem:[#allocation5 + $0x224] sm:$0xf]
        %v602 = vld [vmem:[#allocation5 + $0x228] sm:$0xf]
        %v603 = vld [vmem:[#allocation5 + $0x22c] sm:$0xf]
        %v604 = vld [vmem:[#allocation5 + $0x230] sm:$0xf]
        %v605 = vld [vmem:[#allocation5 + $0x234] sm:$0xf]
        %v606 = vld [vmem:[#allocation5 + $0x238] sm:$0xf]
        %v607 = vld [vmem:[#allocation5 + $0x23c] sm:$0xf]
        %v608 = vld [vmem:[#allocation5 + $0x240] sm:$0xf]
        %v609 = vld [vmem:[#allocation5 + $0x244] sm:$0xf]
        %v610 = vld [vmem:[#allocation5 + $0x248] sm:$0xf]
        %v611 = vld [vmem:[#allocation5 + $0x24c] sm:$0xf]
        %v612 = vld [vmem:[#allocation5 + $0x250] sm:$0xf]
        %v613 = vld [vmem:[#allocation5 + $0x254] sm:$0xf]
        %v614 = vld [vmem:[#allocation5 + $0x258] sm:$0xf]
        %v615 = vld [vmem:[#allocation5 + $0x25c] sm:$0xf]
        %v616 = vld [vmem:[#allocation5 + $0x260] sm:$0xf]
        %v617 = vld [vmem:[#allocation5 + $0x264] sm:$0xf]
        %v618 = vld [vmem:[#allocation5 + $0x268] sm:$0xf]
        %v619 = vld [vmem:[#allocation5 + $0x26c] sm:$0xf]
        %v620 = vld [vmem:[#allocation5 + $0x270] sm:$0xf]
        %v621 = vld [vmem:[#allocation5 + $0x274] sm:$0xf]
        %v622 = vld [vmem:[#allocation5 + $0x278] sm:$0xf]
        %v623 = vld [vmem:[#allocation5 + $0x27c] sm:$0xf]
        %v624 = vld [vmem:[#allocation5 + $0x280] sm:$0xf]
        %v625 = vld [vmem:[#allocation5 + $0x284] sm:$0xf]
        %v626 = vld [vmem:[#allocation5 + $0x288] sm:$0xf]
        %v627 = vld [vmem:[#allocation5 + $0x28c] sm:$0xf]
        %v628 = vld [vmem:[#allocation5 + $0x290] sm:$0xf]
        %v629 = vld [vmem:[#allocation5 + $0x294] sm:$0xf]
        %v630 = vld [vmem:[#allocation5 + $0x298] sm:$0xf]
        %v631 = vld [vmem:[#allocation5 + $0x29c] sm:$0xf]
        %v632 = vld [vmem:[#allocation5 + $0x2a0] sm:$0xf]
        %v633 = vld [vmem:[#allocation5 + $0x2a4] sm:$0xf]
        %v634 = vld [vmem:[#allocation5 + $0x2a8] sm:$0xf]
        %v635 = vld [vmem:[#allocation5 + $0x2ac] sm:$0xf]
        %v636 = vld [vmem:[#allocation5 + $0x2b0] sm:$0xf]
        %v637 = vld [vmem:[#allocation5 + $0x2b4] sm:$0xf]
        %v638 = vld [vmem:[#allocation5 + $0x2b8] sm:$0xf]
        %v639 = vld [vmem:[#allocation5 + $0x2bc] sm:$0xf]
        %v640 = vld [vmem:[#allocation5 + $0x2c0] sm:$0xf]
        %v641 = vld [vmem:[#allocation5 + $0x2c4] sm:$0xf]
        %v642 = vld [vmem:[#allocation5 + $0x2c8] sm:$0xf]
        %v643 = vld [vmem:[#allocation5 + $0x2cc] sm:$0xf]
        %v644 = vld [vmem:[#allocation5 + $0x2d0] sm:$0xf]
        %v645 = vld [vmem:[#allocation5 + $0x2d4] sm:$0xf]
        %v646 = vld [vmem:[#allocation5 + $0x2d8] sm:$0xf]
        %v647 = vld [vmem:[#allocation5 + $0x2dc] sm:$0xf]
        %v648 = vld [vmem:[#allocation5 + $0x2e0] sm:$0xf]
        %v649 = vld [vmem:[#allocation5 + $0x2e4] sm:$0xf]
        %v650 = vld [vmem:[#allocation5 + $0x2e8] sm:$0xf]
        %v651 = vld [vmem:[#allocation5 + $0x2ec] sm:$0xf]
        %v652 = vld [vmem:[#allocation5 + $0x2f0] sm:$0xf]
        %v653 = vld [vmem:[#allocation5 + $0x2f4] sm:$0xf]
        %v654 = vld [vmem:[#allocation5 + $0x2f8] sm:$0xf]
        %v655 = vld [vmem:[#allocation5 + $0x2fc] sm:$0xf]
        %v656 = vld [vmem:[#allocation5 + $0x300] sm:$0xf]
        %v657 = vld [vmem:[#allocation5 + $0x304] sm:$0xf]
        %v658 = vld [vmem:[#allocation5 + $0x308] sm:$0xf]
        %v659 = vld [vmem:[#allocation5 + $0x30c] sm:$0xf]
        %v660 = vld [vmem:[#allocation5 + $0x310] sm:$0xf]
        %v661 = vld [vmem:[#allocation5 + $0x314] sm:$0xf]
        %v662 = vld [vmem:[#allocation5 + $0x318] sm:$0xf]
        %v663 = vld [vmem:[#allocation5 + $0x31c] sm:$0xf]
        %v664 = vld [vmem:[#allocation5 + $0x320] sm:$0xf]
        %v665 = vld [vmem:[#allocation5 + $0x324] sm:$0xf]
        %v666 = vld [vmem:[#allocation5 + $0x328] sm:$0xf]
        %v667 = vld [vmem:[#allocation5 + $0x32c] sm:$0xf]
        %v668 = vld [vmem:[#allocation5 + $0x330] sm:$0xf]
        %v669 = vld [vmem:[#allocation5 + $0x334] sm:$0xf]
        %v670 = vld [vmem:[#allocation5 + $0x338] sm:$0xf]
        %v671 = vld [vmem:[#allocation5 + $0x33c] sm:$0xf]
        %v672 = vld [vmem:[#allocation5 + $0x340] sm:$0xf]
        %v673 = vld [vmem:[#allocation5 + $0x344] sm:$0xf]
        %v674 = vld [vmem:[#allocation5 + $0x348] sm:$0xf]
        %v675 = vld [vmem:[#allocation5 + $0x34c] sm:$0xf]
        %v676 = vld [vmem:[#allocation5 + $0x350] sm:$0xf]
        %v677 = vld [vmem:[#allocation5 + $0x354] sm:$0xf]
        %v678 = vld [vmem:[#allocation5 + $0x358] sm:$0xf]
        %v679 = vld [vmem:[#allocation5 + $0x35c] sm:$0xf]
        %v680 = vld [vmem:[#allocation5 + $0x360] sm:$0xf]
        %v681 = vld [vmem:[#allocation5 + $0x364] sm:$0xf]
        %v682 = vld [vmem:[#allocation5 + $0x368] sm:$0xf]
        %v683 = vld [vmem:[#allocation5 + $0x36c] sm:$0xf]
        %v684 = vld [vmem:[#allocation5 + $0x370] sm:$0xf]
        %v685 = vld [vmem:[#allocation5 + $0x374] sm:$0xf]
        %v686 = vld [vmem:[#allocation5 + $0x378] sm:$0xf]
        %v687 = vld [vmem:[#allocation5 + $0x37c] sm:$0xf]
        %v688 = vld [vmem:[#allocation5 + $0x380] sm:$0xf]
        %v689 = vld [vmem:[#allocation5 + $0x384] sm:$0xf]
        %v690 = vld [vmem:[#allocation5 + $0x388] sm:$0xf]
        %v691 = vld [vmem:[#allocation5 + $0x38c] sm:$0xf]
        %v692 = vld [vmem:[#allocation5 + $0x390] sm:$0xf]
        %v693 = vld [vmem:[#allocation5 + $0x394] sm:$0xf]
        %v694 = vld [vmem:[#allocation5 + $0x398] sm:$0xf]
        %v695 = vld [vmem:[#allocation5 + $0x39c] sm:$0xf]
        %v696 = vld [vmem:[#allocation5 + $0x3a0] sm:$0xf]
        %v697 = vld [vmem:[#allocation5 + $0x3a4] sm:$0xf]
        %v698 = vld [vmem:[#allocation5 + $0x3a8] sm:$0xf]
        %v699 = vld [vmem:[#allocation5 + $0x3ac] sm:$0xf]
        %v700 = vld [vmem:[#allocation5 + $0x3b0] sm:$0xf]
        %v701 = vld [vmem:[#allocation5 + $0x3b4] sm:$0xf]
        %v702 = vld [vmem:[#allocation5 + $0x3b8] sm:$0xf]
        %v703 = vld [vmem:[#allocation5 + $0x3bc] sm:$0xf]
        %v704 = vld [vmem:[#allocation5 + $0x3c0] sm:$0xf]
        %v705 = vld [vmem:[#allocation5 + $0x3c4] sm:$0xf]
        %v706 = vld [vmem:[#allocation5 + $0x3c8] sm:$0xf]
        %v707 = vld [vmem:[#allocation5 + $0x3cc] sm:$0xf]
        %v708 = vld [vmem:[#allocation5 + $0x3d0] sm:$0xf]
        %v709 = vld [vmem:[#allocation5 + $0x3d4] sm:$0xf]
        %v710 = vld [vmem:[#allocation5 + $0x3d8] sm:$0xf]
        %v711 = vld [vmem:[#allocation5 + $0x3dc] sm:$0xf]
        %v712 = vld [vmem:[#allocation5 + $0x3e0] sm:$0xf]
        %v713 = vld [vmem:[#allocation5 + $0x3e4] sm:$0xf]
        %v714 = vld [vmem:[#allocation5 + $0x3e8] sm:$0xf]
        %v715 = vld [vmem:[#allocation5 + $0x3ec] sm:$0xf]
        %v716 = vld [vmem:[#allocation5 + $0x3f0] sm:$0xf]
        %v717 = vld [vmem:[#allocation5 + $0x3f4] sm:$0xf]
        %v718 = vld [vmem:[#allocation5 + $0x3f8] sm:$0xf]
        %v719 = vld [vmem:[#allocation5 + $0x3fc] sm:$0xf]
        %v720 = vld [vmem:[#allocation5 + $0x400] sm:$0xf]
        %v721 = vld [vmem:[#allocation5 + $0x404] sm:$0xf]
        %v722 = vld [vmem:[#allocation5 + $0x408] sm:$0xf]
        %v723 = vld [vmem:[#allocation5 + $0x40c] sm:$0xf]
        %v724 = vld [vmem:[#allocation5 + $0x410] sm:$0xf]
        %v725 = vld [vmem:[#allocation5 + $0x414] sm:$0xf]
        %v726 = vld [vmem:[#allocation5 + $0x418] sm:$0xf]
        %v727 = vld [vmem:[#allocation5 + $0x41c] sm:$0xf]
        %v728 = vld [vmem:[#allocation5 + $0x420] sm:$0xf]
        %v729 = vld [vmem:[#allocation5 + $0x424] sm:$0xf]
        %v730 = vld [vmem:[#allocation5 + $0x428] sm:$0xf]
        %v731 = vld [vmem:[#allocation5 + $0x42c] sm:$0xf]
        %v732 = vld [vmem:[#allocation5 + $0x430] sm:$0xf]
        %v733 = vld [vmem:[#allocation5 + $0x434] sm:$0xf]
        %v734 = vld [vmem:[#allocation5 + $0x438] sm:$0xf]
        %v735 = vld [vmem:[#allocation5 + $0x43c] sm:$0xf]
        %v736 = vld [vmem:[#allocation5 + $0x440] sm:$0xf]
        %v737 = vld [vmem:[#allocation5 + $0x444] sm:$0xf]
        %v738 = vld [vmem:[#allocation5 + $0x448] sm:$0xf]
        %v739 = vld [vmem:[#allocation5 + $0x44c] sm:$0xf]
        %v740 = vld [vmem:[#allocation5 + $0x450] sm:$0xf]
        %v741 = vld [vmem:[#allocation5 + $0x454] sm:$0xf]
        %v742 = vld [vmem:[#allocation5 + $0x458] sm:$0xf]
        %v743 = vld [vmem:[#allocation5 + $0x45c] sm:$0xf]
        %v744 = vld [vmem:[#allocation5 + $0x460] sm:$0xf]
        %v745 = vld [vmem:[#allocation5 + $0x464] sm:$0xf]
        %v746 = vld [vmem:[#allocation5 + $0x468] sm:$0xf]
        %v747 = vld [vmem:[#allocation5 + $0x46c] sm:$0xf]
        %v748 = vld [vmem:[#allocation5 + $0x470] sm:$0xf]
        %v749 = vld [vmem:[#allocation5 + $0x474] sm:$0xf]
        %v750 = vld [vmem:[#allocation5 + $0x478] sm:$0xf]
        %v751 = vld [vmem:[#allocation5 + $0x47c] sm:$0xf]
        %v752 = vld [vmem:[#allocation5 + $0x480] sm:$0xf]
        %v753 = vld [vmem:[#allocation5 + $0x484] sm:$0xf]
        %v754 = vld [vmem:[#allocation5 + $0x488] sm:$0xf]
        %v755 = vld [vmem:[#allocation5 + $0x48c] sm:$0xf]
        %v756 = vld [vmem:[#allocation5 + $0x490] sm:$0xf]
        %v757 = vld [vmem:[#allocation5 + $0x494] sm:$0xf]
        %v758 = vld [vmem:[#allocation5 + $0x498] sm:$0xf]
        %v759 = vld [vmem:[#allocation5 + $0x49c] sm:$0xf]
        %v760 = vld [vmem:[#allocation5 + $0x4a0] sm:$0xf]
        %v761 = vld [vmem:[#allocation5 + $0x4a4] sm:$0xf]
        %v762 = vld [vmem:[#allocation5 + $0x4a8] sm:$0xf]
        %v763 = vld [vmem:[#allocation5 + $0x4ac] sm:$0xf]
        %v764 = vld [vmem:[#allocation5 + $0x4b0] sm:$0xf]
        %v765 = vld [vmem:[#allocation5 + $0x4b4] sm:$0xf]
        %v766 = vld [vmem:[#allocation5 + $0x4b8] sm:$0xf]
        %v767 = vld [vmem:[#allocation5 + $0x4bc] sm:$0xf]
        %v768 = vld [vmem:[#allocation5 + $0x4c0] sm:$0xf]
        %v769 = vld [vmem:[#allocation5 + $0x4c4] sm:$0xf]
        %v770 = vld [vmem:[#allocation5 + $0x4c8] sm:$0xf]
        %v771 = vld [vmem:[#allocation5 + $0x4cc] sm:$0xf]
        %v772 = vld [vmem:[#allocation5 + $0x4d0] sm:$0xf]
        %v773 = vld [vmem:[#allocation5 + $0x4d4] sm:$0xf]
        %v774 = vld [vmem:[#allocation5 + $0x4d8] sm:$0xf]
        %v775 = vld [vmem:[#allocation5 + $0x4dc] sm:$0xf]
        %v776 = vld [vmem:[#allocation5 + $0x4e0] sm:$0xf]
        %v777 = vld [vmem:[#allocation5 + $0x4e4] sm:$0xf]
        %v778 = vld [vmem:[#allocation5 + $0x4e8] sm:$0xf]
        %v779 = vld [vmem:[#allocation5 + $0x4ec] sm:$0xf]
        %v780 = vld [vmem:[#allocation5 + $0x4f0] sm:$0xf]
        %v781 = vld [vmem:[#allocation5 + $0x4f4] sm:$0xf]
        %v782 = vld [vmem:[#allocation5 + $0x4f8] sm:$0xf]
        %v783 = vld [vmem:[#allocation5 + $0x4fc] sm:$0xf]
        %v784 = vld [vmem:[#allocation5 + $0x500] sm:$0xf]
        %v785 = vld [vmem:[#allocation5 + $0x504] sm:$0xf]
        %v786 = vld [vmem:[#allocation5 + $0x508] sm:$0xf]
        %v787 = vld [vmem:[#allocation5 + $0x50c] sm:$0xf]
        %v788 = vld [vmem:[#allocation5 + $0x510] sm:$0xf]
        %v789 = vld [vmem:[#allocation5 + $0x514] sm:$0xf]
        %v790 = vld [vmem:[#allocation5 + $0x518] sm:$0xf]
        %v791 = vld [vmem:[#allocation5 + $0x51c] sm:$0xf]
        %v792 = vld [vmem:[#allocation5 + $0x520] sm:$0xf]
        %v793 = vld [vmem:[#allocation5 + $0x524] sm:$0xf]
        %v794 = vld [vmem:[#allocation5 + $0x528] sm:$0xf]
        %v795 = vld [vmem:[#allocation5 + $0x52c] sm:$0xf]
        %v796 = vld [vmem:[#allocation5 + $0x530] sm:$0xf]
        %v797 = vld [vmem:[#allocation5 + $0x534] sm:$0xf]
        %v798 = vld [vmem:[#allocation5 + $0x538] sm:$0xf]
        %v799 = vld [vmem:[#allocation5 + $0x53c] sm:$0xf]
        %v800 = vld [vmem:[#allocation5 + $0x540] sm:$0xf]
        %v801 = vld [vmem:[#allocation5 + $0x544] sm:$0xf]
        %v802 = vld [vmem:[#allocation5 + $0x548] sm:$0xf]
        %v803 = vld [vmem:[#allocation5 + $0x54c] sm:$0xf]
        %v804 = vld [vmem:[#allocation5 + $0x550] sm:$0xf]
        %v805 = vld [vmem:[#allocation5 + $0x554] sm:$0xf]
        %v806 = vld [vmem:[#allocation5 + $0x558] sm:$0xf]
        %v807 = vld [vmem:[#allocation5 + $0x55c] sm:$0xf]
        %v808 = vld [vmem:[#allocation5 + $0x560] sm:$0xf]
        %v809 = vld [vmem:[#allocation5 + $0x564] sm:$0xf]
        %v810 = vld [vmem:[#allocation5 + $0x568] sm:$0xf]
        %v811 = vld [vmem:[#allocation5 + $0x56c] sm:$0xf]
        %v812 = vld [vmem:[#allocation5 + $0x570] sm:$0xf]
        %v813 = vld [vmem:[#allocation5 + $0x574] sm:$0xf]
        %v814 = vld [vmem:[#allocation5 + $0x578] sm:$0xf]
        %v815 = vld [vmem:[#allocation5 + $0x57c] sm:$0xf]
        %v816 = vld [vmem:[#allocation5 + $0x580] sm:$0xf]
        %v817 = vld [vmem:[#allocation5 + $0x584] sm:$0xf]
        %v818 = vld [vmem:[#allocation5 + $0x588] sm:$0xf]
        %v819 = vld [vmem:[#allocation5 + $0x58c] sm:$0xf]
        %v820 = vld [vmem:[#allocation5 + $0x590] sm:$0xf]
        %v821 = vld [vmem:[#allocation5 + $0x594] sm:$0xf]
        %v822 = vld [vmem:[#allocation5 + $0x598] sm:$0xf]
        %v823 = vld [vmem:[#allocation5 + $0x59c] sm:$0xf]
        %v824 = vld [vmem:[#allocation5 + $0x5a0] sm:$0xf]
        %v825 = vld [vmem:[#allocation5 + $0x5a4] sm:$0xf]
        %v826 = vld [vmem:[#allocation5 + $0x5a8] sm:$0xf]
        %v827 = vld [vmem:[#allocation5 + $0x5ac] sm:$0xf]
        %v828 = vld [vmem:[#allocation5 + $0x5b0] sm:$0xf]
        %v829 = vld [vmem:[#allocation5 + $0x5b4] sm:$0xf]
        %v830 = vld [vmem:[#allocation5 + $0x5b8] sm:$0xf]
        %v831 = vld [vmem:[#allocation5 + $0x5bc] sm:$0xf]
        %v832 = vld [vmem:[#allocation5 + $0x5c0] sm:$0xf]
        %v833 = vld [vmem:[#allocation5 + $0x5c4] sm:$0xf]
        %v834 = vld [vmem:[#allocation5 + $0x5c8] sm:$0xf]
        %v835 = vld [vmem:[#allocation5 + $0x5cc] sm:$0xf]
        %v836 = vld [vmem:[#allocation5 + $0x5d0] sm:$0xf]
        %v837 = vld [vmem:[#allocation5 + $0x5d4] sm:$0xf]
        %v838 = vld [vmem:[#allocation5 + $0x5d8] sm:$0xf]
        %v839 = vld [vmem:[#allocation5 + $0x5dc] sm:$0xf]
        %v840 = vld [vmem:[#allocation5 + $0x5e0] sm:$0xf]
        %v841 = vld [vmem:[#allocation5 + $0x5e4] sm:$0xf]
        %v842 = vld [vmem:[#allocation5 + $0x5e8] sm:$0xf]
        %v843 = vld [vmem:[#allocation5 + $0x5ec] sm:$0xf]
        %v844 = vld [vmem:[#allocation5 + $0x5f0] sm:$0xf]
        %v845 = vld [vmem:[#allocation5 + $0x5f4] sm:$0xf]
        %v846 = vld [vmem:[#allocation5 + $0x5f8] sm:$0xf]
        %v847 = vld [vmem:[#allocation5 + $0x5fc] sm:$0xf]
        %v848 = vld [vmem:[#allocation5 + $0x600] sm:$0xf]
        %v849 = vld [vmem:[#allocation5 + $0x604] sm:$0xf]
        %v850 = vld [vmem:[#allocation5 + $0x608] sm:$0xf]
        %v851 = vld [vmem:[#allocation5 + $0x60c] sm:$0xf]
        %v852 = vld [vmem:[#allocation5 + $0x610] sm:$0xf]
        %v853 = vld [vmem:[#allocation5 + $0x614] sm:$0xf]
        %v854 = vld [vmem:[#allocation5 + $0x618] sm:$0xf]
        %v855 = vld [vmem:[#allocation5 + $0x61c] sm:$0xf]
        %v856 = vld [vmem:[#allocation5 + $0x620] sm:$0xf]
        %v857 = vld [vmem:[#allocation5 + $0x624] sm:$0xf]
        %v858 = vld [vmem:[#allocation5 + $0x628] sm:$0xf]
        %v859 = vld [vmem:[#allocation5 + $0x62c] sm:$0xf]
        %v860 = vld [vmem:[#allocation5 + $0x630] sm:$0xf]
        %v861 = vld [vmem:[#allocation5 + $0x634] sm:$0xf]
        %v862 = vld [vmem:[#allocation5 + $0x638] sm:$0xf]
        %v863 = vld [vmem:[#allocation5 + $0x63c] sm:$0xf]
        %v864 = vld [vmem:[#allocation5 + $0x640] sm:$0xf]
        %v865 = vld [vmem:[#allocation5 + $0x644] sm:$0xf]
        %v866 = vld [vmem:[#allocation5 + $0x648] sm:$0xf]
        %v867 = vld [vmem:[#allocation5 + $0x64c] sm:$0xf]
        %v868 = vld [vmem:[#allocation5 + $0x650] sm:$0xf]
        %v869 = vld [vmem:[#allocation5 + $0x654] sm:$0xf]
        %v870 = vld [vmem:[#allocation5 + $0x658] sm:$0xf]
        %v871 = vld [vmem:[#allocation5 + $0x65c] sm:$0xf]
        %v872 = vld [vmem:[#allocation5 + $0x660] sm:$0xf]
        %v873 = vld [vmem:[#allocation5 + $0x664] sm:$0xf]
        %v874 = vld [vmem:[#allocation5 + $0x668] sm:$0xf]
        %v875 = vld [vmem:[#allocation5 + $0x66c] sm:$0xf]
        %v876 = vld [vmem:[#allocation5 + $0x670] sm:$0xf]
        %v877 = vld [vmem:[#allocation5 + $0x674] sm:$0xf]
        %v878 = vld [vmem:[#allocation5 + $0x678] sm:$0xf]
        %v879 = vld [vmem:[#allocation5 + $0x67c] sm:$0xf]
        %v880 = vld [vmem:[#allocation5 + $0x680] sm:$0xf]
        %v881 = vld [vmem:[#allocation5 + $0x684] sm:$0xf]
        %v882 = vld [vmem:[#allocation5 + $0x688] sm:$0xf]
        %v883 = vld [vmem:[#allocation5 + $0x68c] sm:$0xf]
        %v884 = vld [vmem:[#allocation5 + $0x690] sm:$0xf]
        %v885 = vld [vmem:[#allocation5 + $0x694] sm:$0xf]
        %v886 = vld [vmem:[#allocation5 + $0x698] sm:$0xf]
        %v887 = vld [vmem:[#allocation5 + $0x69c] sm:$0xf]
        %v888 = vld [vmem:[#allocation5 + $0x6a0] sm:$0xf]
        %v889 = vld [vmem:[#allocation5 + $0x6a4] sm:$0xf]
        %v890 = vld [vmem:[#allocation5 + $0x6a8] sm:$0xf]
        %v891 = vld [vmem:[#allocation5 + $0x6ac] sm:$0xf]
        %v892 = vld [vmem:[#allocation5 + $0x6b0] sm:$0xf]
        %v893 = vld [vmem:[#allocation5 + $0x6b4] sm:$0xf]
        %v894 = vld [vmem:[#allocation5 + $0x6b8] sm:$0xf]
        %v895 = vld [vmem:[#allocation5 + $0x6bc] sm:$0xf]
        %v896 = vld [vmem:[#allocation5 + $0x6c0] sm:$0xf]
        %v897 = vld [vmem:[#allocation5 + $0x6c4] sm:$0x1]
        %v898 = vld [vmem:[%s2] sm:$0x1]
        %v900 = vlaneseq
        %v901 = vshrl.u32 %v900, 7
        %v902 = vsub.s32 0, %v901
        %v903 = vrot.slane %v898, %v902
        %v1339 = vunpack.c.l.b16 %v464
        %v1340 = vunpack.c.l.b16 %v465
        %v1341 = vunpack.c.l.b16 %v466
        %v1342 = vunpack.c.l.b16 %v467
        %v1343 = vunpack.c.l.b16 %v468
        %v1344 = vunpack.c.l.b16 %v469
        %v1345 = vunpack.c.l.b16 %v470
        %v1346 = vunpack.c.l.b16 %v471
        %v1347 = vunpack.c.l.b16 %v472
        %v1348 = vunpack.c.l.b16 %v473
        %v1349 = vunpack.c.l.b16 %v474
        %v1350 = vunpack.c.l.b16 %v475
        %v1351 = vunpack.c.l.b16 %v476
        %v1352 = vunpack.c.l.b16 %v477
        %v1353 = vunpack.c.l.b16 %v478
        %v1354 = vunpack.c.l.b16 %v479
        %v1355 = vunpack.c.l.b16 %v480
        %v1356 = vunpack.c.l.b16 %v481
        %v1357 = vunpack.c.l.b16 %v482
        %v1358 = vunpack.c.l.b16 %v483
        %v1359 = vunpack.c.l.b16 %v484
        %v1360 = vunpack.c.l.b16 %v485
        %v1361 = vunpack.c.l.b16 %v486
        %v1362 = vunpack.c.l.b16 %v487
        %v1363 = vunpack.c.l.b16 %v488
        %v1364 = vunpack.c.l.b16 %v489
        %v1365 = vunpack.c.l.b16 %v490
        %v1366 = vunpack.c.l.b16 %v491
        %v1367 = vunpack.c.l.b16 %v492
        %v1368 = vunpack.c.l.b16 %v493
        %v1369 = vunpack.c.l.b16 %v494
        %v1370 = vunpack.c.l.b16 %v495
        %v1371 = vunpack.c.l.b16 %v496
        %v1372 = vunpack.c.l.b16 %v497
        %v1373 = vunpack.c.l.b16 %v498
        %v1374 = vunpack.c.l.b16 %v499
        %v1375 = vunpack.c.l.b16 %v500
        %v1376 = vunpack.c.l.b16 %v501
        %v1377 = vunpack.c.l.b16 %v502
        %v1378 = vunpack.c.l.b16 %v503
        %v1379 = vunpack.c.l.b16 %v504
        %v1380 = vunpack.c.l.b16 %v505
        %v1381 = vunpack.c.l.b16 %v506
        %v1382 = vunpack.c.l.b16 %v507
        %v1383 = vunpack.c.l.b16 %v508
        %v1384 = vunpack.c.l.b16 %v509
        %v1385 = vunpack.c.l.b16 %v510
        %v1386 = vunpack.c.l.b16 %v511
        %v1387 = vunpack.c.l.b16 %v512
        %v1388 = vunpack.c.l.b16 %v513
        %v1389 = vunpack.c.l.b16 %v514
        %v1390 = vunpack.c.l.b16 %v515
        %v1391 = vunpack.c.l.b16 %v516
        %v1392 = vunpack.c.l.b16 %v517
        %v1393 = vunpack.c.l.b16 %v518
        %v1394 = vunpack.c.l.b16 %v519
        %v1395 = vunpack.c.l.b16 %v520
        %v1396 = vunpack.c.l.b16 %v521
        %v1397 = vunpack.c.l.b16 %v522
        %v1398 = vunpack.c.l.b16 %v523
        %v1399 = vunpack.c.l.b16 %v524
        %v1400 = vunpack.c.l.b16 %v525
        %v1401 = vunpack.c.l.b16 %v526
        %v1402 = vunpack.c.l.b16 %v527
        %v1403 = vunpack.c.l.b16 %v528
        %v1404 = vunpack.c.l.b16 %v529
        %v1405 = vunpack.c.l.b16 %v530
        %v1406 = vunpack.c.l.b16 %v531
        %v1407 = vunpack.c.l.b16 %v532
        %v1408 = vunpack.c.l.b16 %v533
        %v1409 = vunpack.c.l.b16 %v534
        %v1410 = vunpack.c.l.b16 %v535
        %v1411 = vunpack.c.l.b16 %v536
        %v1412 = vunpack.c.l.b16 %v537
        %v1413 = vunpack.c.l.b16 %v538
        %v1414 = vunpack.c.l.b16 %v539
        %v1415 = vunpack.c.l.b16 %v540
        %v1416 = vunpack.c.l.b16 %v541
        %v1417 = vunpack.c.l.b16 %v542
        %v1418 = vunpack.c.l.b16 %v543
        %v1419 = vunpack.c.l.b16 %v544
        %v1420 = vunpack.c.l.b16 %v545
        %v1421 = vunpack.c.l.b16 %v546
        %v1422 = vunpack.c.l.b16 %v547
        %v1423 = vunpack.c.l.b16 %v548
        %v1424 = vunpack.c.l.b16 %v549
        %v1425 = vunpack.c.l.b16 %v550
        %v1426 = vunpack.c.l.b16 %v551
        %v1427 = vunpack.c.l.b16 %v552
        %v1428 = vunpack.c.l.b16 %v553
        %v1429 = vunpack.c.l.b16 %v554
        %v1430 = vunpack.c.l.b16 %v555
        %v1431 = vunpack.c.l.b16 %v556
        %v1432 = vunpack.c.l.b16 %v557
        %v1433 = vunpack.c.l.b16 %v558
        %v1434 = vunpack.c.l.b16 %v559
        %v1435 = vunpack.c.l.b16 %v560
        %v1436 = vunpack.c.l.b16 %v561
        %v1437 = vunpack.c.l.b16 %v562
        %v1438 = vunpack.c.l.b16 %v563
        %v1439 = vunpack.c.l.b16 %v564
        %v1440 = vunpack.c.l.b16 %v565
        %v1441 = vunpack.c.l.b16 %v566
        %v1442 = vunpack.c.l.b16 %v567
        %v1443 = vunpack.c.l.b16 %v568
        %v1444 = vunpack.c.l.b16 %v569
        %v1445 = vunpack.c.l.b16 %v570
        %v1446 = vunpack.c.l.b16 %v571
        %v1447 = vunpack.c.l.b16 %v572
        %v1448 = vunpack.c.l.b16 %v573
        %v1449 = vunpack.c.l.b16 %v574
        %v1450 = vunpack.c.l.b16 %v575
        %v1451 = vunpack.c.l.b16 %v576
        %v1452 = vunpack.c.l.b16 %v577
        %v1453 = vunpack.c.l.b16 %v578
        %v1454 = vunpack.c.l.b16 %v579
        %v1455 = vunpack.c.l.b16 %v580
        %v1456 = vunpack.c.l.b16 %v581
        %v1457 = vunpack.c.l.b16 %v582
        %v1458 = vunpack.c.l.b16 %v583
        %v1459 = vunpack.c.l.b16 %v584
        %v1460 = vunpack.c.l.b16 %v585
        %v1461 = vunpack.c.l.b16 %v586
        %v1462 = vunpack.c.l.b16 %v587
        %v1463 = vunpack.c.l.b16 %v588
        %v1464 = vunpack.c.l.b16 %v589
        %v1465 = vunpack.c.l.b16 %v590
        %v1466 = vunpack.c.l.b16 %v591
        %v1467 = vunpack.c.l.b16 %v592
        %v1468 = vunpack.c.l.b16 %v593
        %v1469 = vunpack.c.l.b16 %v594
        %v1470 = vunpack.c.l.b16 %v595
        %v1471 = vunpack.c.l.b16 %v596
        %v1472 = vunpack.c.l.b16 %v597
        %v1473 = vunpack.c.l.b16 %v598
        %v1474 = vunpack.c.l.b16 %v599
        %v1475 = vunpack.c.l.b16 %v600
        %v1476 = vunpack.c.l.b16 %v601
        %v1477 = vunpack.c.l.b16 %v602
        %v1478 = vunpack.c.l.b16 %v603
        %v1479 = vunpack.c.l.b16 %v604
        %v1480 = vunpack.c.l.b16 %v605
        %v1481 = vunpack.c.l.b16 %v606
        %v1482 = vunpack.c.l.b16 %v607
        %v1483 = vunpack.c.l.b16 %v608
        %v1484 = vunpack.c.l.b16 %v609
        %v1485 = vunpack.c.l.b16 %v610
        %v1486 = vunpack.c.l.b16 %v611
        %v1487 = vunpack.c.l.b16 %v612
        %v1488 = vunpack.c.l.b16 %v613
        %v1489 = vunpack.c.l.b16 %v614
        %v1490 = vunpack.c.l.b16 %v615
        %v1491 = vunpack.c.l.b16 %v616
        %v1492 = vunpack.c.l.b16 %v617
        %v1493 = vunpack.c.l.b16 %v618
        %v1494 = vunpack.c.l.b16 %v619
        %v1495 = vunpack.c.l.b16 %v620
        %v1496 = vunpack.c.l.b16 %v621
        %v1497 = vunpack.c.l.b16 %v622
        %v1498 = vunpack.c.l.b16 %v623
        %v1499 = vunpack.c.l.b16 %v624
        %v1500 = vunpack.c.l.b16 %v625
        %v1501 = vunpack.c.l.b16 %v626
        %v1502 = vunpack.c.l.b16 %v627
        %v1503 = vunpack.c.l.b16 %v628
        %v1504 = vunpack.c.l.b16 %v629
        %v1505 = vunpack.c.l.b16 %v630
        %v1506 = vunpack.c.l.b16 %v631
        %v1507 = vunpack.c.l.b16 %v632
        %v1508 = vunpack.c.l.b16 %v633
        %v1509 = vunpack.c.l.b16 %v634
        %v1510 = vunpack.c.l.b16 %v635
        %v1511 = vunpack.c.l.b16 %v636
        %v1512 = vunpack.c.l.b16 %v637
        %v1513 = vunpack.c.l.b16 %v638
        %v1514 = vunpack.c.l.b16 %v639
        %v1515 = vunpack.c.l.b16 %v640
        %v1516 = vunpack.c.l.b16 %v641
        %v1517 = vunpack.c.l.b16 %v642
        %v1518 = vunpack.c.l.b16 %v643
        %v1519 = vunpack.c.l.b16 %v644
        %v1520 = vunpack.c.l.b16 %v645
        %v1521 = vunpack.c.l.b16 %v646
        %v1522 = vunpack.c.l.b16 %v647
        %v1523 = vunpack.c.l.b16 %v648
        %v1524 = vunpack.c.l.b16 %v649
        %v1525 = vunpack.c.l.b16 %v650
        %v1526 = vunpack.c.l.b16 %v651
        %v1527 = vunpack.c.l.b16 %v652
        %v1528 = vunpack.c.l.b16 %v653
        %v1529 = vunpack.c.l.b16 %v654
        %v1530 = vunpack.c.l.b16 %v655
        %v1531 = vunpack.c.l.b16 %v656
        %v1532 = vunpack.c.l.b16 %v657
        %v1533 = vunpack.c.l.b16 %v658
        %v1534 = vunpack.c.l.b16 %v659
        %v1535 = vunpack.c.l.b16 %v660
        %v1536 = vunpack.c.l.b16 %v661
        %v1537 = vunpack.c.l.b16 %v662
        %v1538 = vunpack.c.l.b16 %v663
        %v1539 = vunpack.c.l.b16 %v664
        %v1540 = vunpack.c.l.b16 %v665
        %v1541 = vunpack.c.l.b16 %v666
        %v1542 = vunpack.c.l.b16 %v667
        %v1543 = vunpack.c.l.b16 %v668
        %v1544 = vunpack.c.l.b16 %v669
        %v1545 = vunpack.c.l.b16 %v670
        %v1546 = vunpack.c.l.b16 %v671
        %v1547 = vunpack.c.l.b16 %v672
        %v1548 = vunpack.c.l.b16 %v673
        %v1549 = vunpack.c.l.b16 %v674
        %v1550 = vunpack.c.l.b16 %v675
        %v1551 = vunpack.c.l.b16 %v676
        %v1552 = vunpack.c.l.b16 %v677
        %v1553 = vunpack.c.l.b16 %v678
        %v1554 = vunpack.c.l.b16 %v679
        %v1555 = vunpack.c.l.b16 %v680
        %v1556 = vunpack.c.l.b16 %v681
        %v1557 = vunpack.c.l.b16 %v682
        %v1558 = vunpack.c.l.b16 %v683
        %v1559 = vunpack.c.l.b16 %v684
        %v1560 = vunpack.c.l.b16 %v685
        %v1561 = vunpack.c.l.b16 %v686
        %v1562 = vunpack.c.l.b16 %v687
        %v1563 = vunpack.c.l.b16 %v688
        %v1564 = vunpack.c.l.b16 %v689
        %v1565 = vunpack.c.l.b16 %v690
        %v1566 = vunpack.c.l.b16 %v691
        %v1567 = vunpack.c.l.b16 %v692
        %v1568 = vunpack.c.l.b16 %v693
        %v1569 = vunpack.c.l.b16 %v694
        %v1570 = vunpack.c.l.b16 %v695
        %v1571 = vunpack.c.l.b16 %v696
        %v1572 = vunpack.c.l.b16 %v697
        %v1573 = vunpack.c.l.b16 %v698
        %v1574 = vunpack.c.l.b16 %v699
        %v1575 = vunpack.c.l.b16 %v700
        %v1576 = vunpack.c.l.b16 %v701
        %v1577 = vunpack.c.l.b16 %v702
        %v1578 = vunpack.c.l.b16 %v703
        %v1579 = vunpack.c.l.b16 %v704
        %v1580 = vunpack.c.l.b16 %v705
        %v1581 = vunpack.c.l.b16 %v706
        %v1582 = vunpack.c.l.b16 %v707
        %v1583 = vunpack.c.l.b16 %v708
        %v1584 = vunpack.c.l.b16 %v709
        %v1585 = vunpack.c.l.b16 %v710
        %v1586 = vunpack.c.l.b16 %v711
        %v1587 = vunpack.c.l.b16 %v712
        %v1588 = vunpack.c.l.b16 %v713
        %v1589 = vunpack.c.l.b16 %v714
        %v1590 = vunpack.c.l.b16 %v715
        %v1591 = vunpack.c.l.b16 %v716
        %v1592 = vunpack.c.l.b16 %v717
        %v1593 = vunpack.c.l.b16 %v718
        %v1594 = vunpack.c.l.b16 %v719
        %v1595 = vunpack.c.l.b16 %v720
        %v1596 = vunpack.c.l.b16 %v721
        %v1597 = vunpack.c.l.b16 %v722
        %v1598 = vunpack.c.l.b16 %v723
        %v1599 = vunpack.c.l.b16 %v724
        %v1600 = vunpack.c.l.b16 %v725
        %v1601 = vunpack.c.l.b16 %v726
        %v1602 = vunpack.c.l.b16 %v727
        %v1603 = vunpack.c.l.b16 %v728
        %v1604 = vunpack.c.l.b16 %v729
        %v1605 = vunpack.c.l.b16 %v730
        %v1606 = vunpack.c.l.b16 %v731
        %v1607 = vunpack.c.l.b16 %v732
        %v1608 = vunpack.c.l.b16 %v733
        %v1609 = vunpack.c.l.b16 %v734
        %v1610 = vunpack.c.l.b16 %v735
        %v1611 = vunpack.c.l.b16 %v736
        %v1612 = vunpack.c.l.b16 %v737
        %v1613 = vunpack.c.l.b16 %v738
        %v1614 = vunpack.c.l.b16 %v739
        %v1615 = vunpack.c.l.b16 %v740
        %v1616 = vunpack.c.l.b16 %v741
        %v1617 = vunpack.c.l.b16 %v742
        %v1618 = vunpack.c.l.b16 %v743
        %v1619 = vunpack.c.l.b16 %v744
        %v1620 = vunpack.c.l.b16 %v745
        %v1621 = vunpack.c.l.b16 %v746
        %v1622 = vunpack.c.l.b16 %v747
        %v1623 = vunpack.c.l.b16 %v748
        %v1624 = vunpack.c.l.b16 %v749
        %v1625 = vunpack.c.l.b16 %v750
        %v1626 = vunpack.c.l.b16 %v751
        %v1627 = vunpack.c.l.b16 %v752
        %v1628 = vunpack.c.l.b16 %v753
        %v1629 = vunpack.c.l.b16 %v754
        %v1630 = vunpack.c.l.b16 %v755
        %v1631 = vunpack.c.l.b16 %v756
        %v1632 = vunpack.c.l.b16 %v757
        %v1633 = vunpack.c.l.b16 %v758
        %v1634 = vunpack.c.l.b16 %v759
        %v1635 = vunpack.c.l.b16 %v760
        %v1636 = vunpack.c.l.b16 %v761
        %v1637 = vunpack.c.l.b16 %v762
        %v1638 = vunpack.c.l.b16 %v763
        %v1639 = vunpack.c.l.b16 %v764
        %v1640 = vunpack.c.l.b16 %v765
        %v1641 = vunpack.c.l.b16 %v766
        %v1642 = vunpack.c.l.b16 %v767
        %v1643 = vunpack.c.l.b16 %v768
        %v1644 = vunpack.c.l.b16 %v769
        %v1645 = vunpack.c.l.b16 %v770
        %v1646 = vunpack.c.l.b16 %v771
        %v1647 = vunpack.c.l.b16 %v772
        %v1648 = vunpack.c.l.b16 %v773
        %v1649 = vunpack.c.l.b16 %v774
        %v1650 = vunpack.c.l.b16 %v775
        %v1651 = vunpack.c.l.b16 %v776
        %v1652 = vunpack.c.l.b16 %v777
        %v1653 = vunpack.c.l.b16 %v778
        %v1654 = vunpack.c.l.b16 %v779
        %v1655 = vunpack.c.l.b16 %v780
        %v1656 = vunpack.c.l.b16 %v781
        %v1657 = vunpack.c.l.b16 %v782
        %v1658 = vunpack.c.l.b16 %v783
        %v1659 = vunpack.c.l.b16 %v784
        %v1660 = vunpack.c.l.b16 %v785
        %v1661 = vunpack.c.l.b16 %v786
        %v1662 = vunpack.c.l.b16 %v787
        %v1663 = vunpack.c.l.b16 %v788
        %v1664 = vunpack.c.l.b16 %v789
        %v1665 = vunpack.c.l.b16 %v790
        %v1666 = vunpack.c.l.b16 %v791
        %v1667 = vunpack.c.l.b16 %v792
        %v1668 = vunpack.c.l.b16 %v793
        %v1669 = vunpack.c.l.b16 %v794
        %v1670 = vunpack.c.l.b16 %v795
        %v1671 = vunpack.c.l.b16 %v796
        %v1672 = vunpack.c.l.b16 %v797
        %v1673 = vunpack.c.l.b16 %v798
        %v1674 = vunpack.c.l.b16 %v799
        %v1675 = vunpack.c.l.b16 %v800
        %v1676 = vunpack.c.l.b16 %v801
        %v1677 = vunpack.c.l.b16 %v802
        %v1678 = vunpack.c.l.b16 %v803
        %v1679 = vunpack.c.l.b16 %v804
        %v1680 = vunpack.c.l.b16 %v805
        %v1681 = vunpack.c.l.b16 %v806
        %v1682 = vunpack.c.l.b16 %v807
        %v1683 = vunpack.c.l.b16 %v808
        %v1684 = vunpack.c.l.b16 %v809
        %v1685 = vunpack.c.l.b16 %v810
        %v1686 = vunpack.c.l.b16 %v811
        %v1687 = vunpack.c.l.b16 %v812
        %v1688 = vunpack.c.l.b16 %v813
        %v1689 = vunpack.c.l.b16 %v814
        %v1690 = vunpack.c.l.b16 %v815
        %v1691 = vunpack.c.l.b16 %v816
        %v1692 = vunpack.c.l.b16 %v817
        %v1693 = vunpack.c.l.b16 %v818
        %v1694 = vunpack.c.l.b16 %v819
        %v1695 = vunpack.c.l.b16 %v820
        %v1696 = vunpack.c.l.b16 %v821
        %v1697 = vunpack.c.l.b16 %v822
        %v1698 = vunpack.c.l.b16 %v823
        %v1699 = vunpack.c.l.b16 %v824
        %v1700 = vunpack.c.l.b16 %v825
        %v1701 = vunpack.c.l.b16 %v826
        %v1702 = vunpack.c.l.b16 %v827
        %v1703 = vunpack.c.l.b16 %v828
        %v1704 = vunpack.c.l.b16 %v829
        %v1705 = vunpack.c.l.b16 %v830
        %v1706 = vunpack.c.l.b16 %v831
        %v1707 = vunpack.c.l.b16 %v832
        %v1708 = vunpack.c.l.b16 %v833
        %v1709 = vunpack.c.l.b16 %v834
        %v1710 = vunpack.c.l.b16 %v835
        %v1711 = vunpack.c.l.b16 %v836
        %v1712 = vunpack.c.l.b16 %v837
        %v1713 = vunpack.c.l.b16 %v838
        %v1714 = vunpack.c.l.b16 %v839
        %v1715 = vunpack.c.l.b16 %v840
        %v1716 = vunpack.c.l.b16 %v841
        %v1717 = vunpack.c.l.b16 %v842
        %v1718 = vunpack.c.l.b16 %v843
        %v1719 = vunpack.c.l.b16 %v844
        %v1720 = vunpack.c.l.b16 %v845
        %v1721 = vunpack.c.l.b16 %v846
        %v1722 = vunpack.c.l.b16 %v847
        %v1723 = vunpack.c.l.b16 %v848
        %v1724 = vunpack.c.l.b16 %v849
        %v1725 = vunpack.c.l.b16 %v850
        %v1726 = vunpack.c.l.b16 %v851
        %v1727 = vunpack.c.l.b16 %v852
        %v1728 = vunpack.c.l.b16 %v853
        %v1729 = vunpack.c.l.b16 %v854
        %v1730 = vunpack.c.l.b16 %v855
        %v1731 = vunpack.c.l.b16 %v856
        %v1732 = vunpack.c.l.b16 %v857
        %v1733 = vunpack.c.l.b16 %v858
        %v1734 = vunpack.c.l.b16 %v859
        %v1735 = vunpack.c.l.b16 %v860
        %v1736 = vunpack.c.l.b16 %v861
        %v1737 = vunpack.c.l.b16 %v862
        %v1738 = vunpack.c.l.b16 %v863
        %v1739 = vunpack.c.l.b16 %v864
        %v1740 = vunpack.c.l.b16 %v865
        %v1741 = vunpack.c.l.b16 %v866
        %v1742 = vunpack.c.l.b16 %v867
        %v1743 = vunpack.c.l.b16 %v868
        %v1744 = vunpack.c.l.b16 %v869
        %v1745 = vunpack.c.l.b16 %v870
        %v1746 = vunpack.c.l.b16 %v871
        %v1747 = vunpack.c.l.b16 %v872
        %v1748 = vunpack.c.l.b16 %v873
        %v1749 = vunpack.c.l.b16 %v874
        %v1750 = vunpack.c.l.b16 %v875
        %v1751 = vunpack.c.l.b16 %v876
        %v1752 = vunpack.c.l.b16 %v877
        %v1753 = vunpack.c.l.b16 %v878
        %v1754 = vunpack.c.l.b16 %v879
        %v1755 = vunpack.c.l.b16 %v880
        %v1756 = vunpack.c.l.b16 %v881
        %v1757 = vunpack.c.l.b16 %v882
        %v1758 = vunpack.c.l.b16 %v883
        %v1759 = vunpack.c.l.b16 %v884
        %v1760 = vunpack.c.l.b16 %v885
        %v1761 = vunpack.c.l.b16 %v886
        %v1762 = vunpack.c.l.b16 %v887
        %v1763 = vunpack.c.l.b16 %v888
        %v1764 = vunpack.c.l.b16 %v889
        %v1765 = vunpack.c.l.b16 %v890
        %v1766 = vunpack.c.l.b16 %v891
        %v1767 = vunpack.c.l.b16 %v892
        %v1768 = vunpack.c.l.b16 %v893
        %v1769 = vunpack.c.l.b16 %v894
        %v1770 = vunpack.c.l.b16 %v895
        %v1771 = vunpack.c.l.b16 %v896
        %v1772 = vunpack.c.l.b16 %v897
        %v1773 = vpack.c.b16 %v1340, %v1339
        %v1774 = vpack.c.b16 %v1342, %v1341
        %v1775 = vpack.c.b16 %v1344, %v1343
        %v1776 = vpack.c.b16 %v1346, %v1345
        %v1777 = vpack.c.b16 %v1348, %v1347
        %v1778 = vpack.c.b16 %v1350, %v1349
        %v1779 = vpack.c.b16 %v1352, %v1351
        %v1780 = vpack.c.b16 %v1354, %v1353
        %v1781 = vpack.c.b16 %v1356, %v1355
        %v1782 = vpack.c.b16 %v1358, %v1357
        %v1783 = vpack.c.b16 %v1360, %v1359
        %v1784 = vpack.c.b16 %v1362, %v1361
        %v1785 = vpack.c.b16 %v1364, %v1363
        %v1786 = vpack.c.b16 %v1366, %v1365
        %v1787 = vpack.c.b16 %v1368, %v1367
        %v1788 = vpack.c.b16 %v1370, %v1369
        %v1789 = vpack.c.b16 %v1372, %v1371
        %v1790 = vpack.c.b16 %v1374, %v1373
        %v1791 = vpack.c.b16 %v1376, %v1375
        %v1792 = vpack.c.b16 %v1378, %v1377
        %v1793 = vpack.c.b16 %v1380, %v1379
        %v1794 = vpack.c.b16 %v1382, %v1381
        %v1795 = vpack.c.b16 %v1384, %v1383
        %v1796 = vpack.c.b16 %v1386, %v1385
        %v1797 = vpack.c.b16 %v1388, %v1387
        %v1798 = vpack.c.b16 %v1390, %v1389
        %v1799 = vpack.c.b16 %v1392, %v1391
        %v1800 = vpack.c.b16 %v1394, %v1393
        %v1801 = vpack.c.b16 %v1396, %v1395
        %v1802 = vpack.c.b16 %v1398, %v1397
        %v1803 = vpack.c.b16 %v1400, %v1399
        %v1804 = vpack.c.b16 %v1402, %v1401
        %v1805 = vpack.c.b16 %v1404, %v1403
        %v1806 = vpack.c.b16 %v1406, %v1405
        %v1807 = vpack.c.b16 %v1408, %v1407
        %v1808 = vpack.c.b16 %v1410, %v1409
        %v1809 = vpack.c.b16 %v1412, %v1411
        %v1810 = vpack.c.b16 %v1414, %v1413
        %v1811 = vpack.c.b16 %v1416, %v1415
        %v1812 = vpack.c.b16 %v1418, %v1417
        %v1813 = vpack.c.b16 %v1420, %v1419
        %v1814 = vpack.c.b16 %v1422, %v1421
        %v1815 = vpack.c.b16 %v1424, %v1423
        %v1816 = vpack.c.b16 %v1426, %v1425
        %v1817 = vpack.c.b16 %v1428, %v1427
        %v1818 = vpack.c.b16 %v1430, %v1429
        %v1819 = vpack.c.b16 %v1432, %v1431
        %v1820 = vpack.c.b16 %v1434, %v1433
        %v1821 = vpack.c.b16 %v1436, %v1435
        %v1822 = vpack.c.b16 %v1438, %v1437
        %v1823 = vpack.c.b16 %v1440, %v1439
        %v1824 = vpack.c.b16 %v1442, %v1441
        %v1825 = vpack.c.b16 %v1444, %v1443
        %v1826 = vpack.c.b16 %v1446, %v1445
        %v1827 = vpack.c.b16 %v1448, %v1447
        %v1828 = vpack.c.b16 %v1450, %v1449
        %v1829 = vpack.c.b16 %v1452, %v1451
        %v1830 = vpack.c.b16 %v1454, %v1453
        %v1831 = vpack.c.b16 %v1456, %v1455
        %v1832 = vpack.c.b16 %v1458, %v1457
        %v1833 = vpack.c.b16 %v1460, %v1459
        %v1834 = vpack.c.b16 %v1462, %v1461
        %v1835 = vpack.c.b16 %v1464, %v1463
        %v1836 = vpack.c.b16 %v1466, %v1465
        %v1837 = vpack.c.b16 %v1468, %v1467
        %v1838 = vpack.c.b16 %v1470, %v1469
        %v1839 = vpack.c.b16 %v1472, %v1471
        %v1840 = vpack.c.b16 %v1474, %v1473
        %v1841 = vpack.c.b16 %v1476, %v1475
        %v1842 = vpack.c.b16 %v1478, %v1477
        %v1843 = vpack.c.b16 %v1480, %v1479
        %v1844 = vpack.c.b16 %v1482, %v1481
        %v1845 = vpack.c.b16 %v1484, %v1483
        %v1846 = vpack.c.b16 %v1486, %v1485
        %v1847 = vpack.c.b16 %v1488, %v1487
        %v1848 = vpack.c.b16 %v1490, %v1489
        %v1849 = vpack.c.b16 %v1492, %v1491
        %v1850 = vpack.c.b16 %v1494, %v1493
        %v1851 = vpack.c.b16 %v1496, %v1495
        %v1852 = vpack.c.b16 %v1498, %v1497
        %v1853 = vpack.c.b16 %v1500, %v1499
        %v1854 = vpack.c.b16 %v1502, %v1501
        %v1855 = vpack.c.b16 %v1504, %v1503
        %v1856 = vpack.c.b16 %v1506, %v1505
        %v1857 = vpack.c.b16 %v1508, %v1507
        %v1858 = vpack.c.b16 %v1510, %v1509
        %v1859 = vpack.c.b16 %v1512, %v1511
        %v1860 = vpack.c.b16 %v1514, %v1513
        %v1861 = vpack.c.b16 %v1516, %v1515
        %v1862 = vpack.c.b16 %v1518, %v1517
        %v1863 = vpack.c.b16 %v1520, %v1519
        %v1864 = vpack.c.b16 %v1522, %v1521
        %v1865 = vpack.c.b16 %v1524, %v1523
        %v1866 = vpack.c.b16 %v1526, %v1525
        %v1867 = vpack.c.b16 %v1528, %v1527
        %v1868 = vpack.c.b16 %v1530, %v1529
        %v1869 = vpack.c.b16 %v1532, %v1531
        %v1870 = vpack.c.b16 %v1534, %v1533
        %v1871 = vpack.c.b16 %v1536, %v1535
        %v1872 = vpack.c.b16 %v1538, %v1537
        %v1873 = vpack.c.b16 %v1540, %v1539
        %v1874 = vpack.c.b16 %v1542, %v1541
        %v1875 = vpack.c.b16 %v1544, %v1543
        %v1876 = vpack.c.b16 %v1546, %v1545
        %v1877 = vpack.c.b16 %v1548, %v1547
        %v1878 = vpack.c.b16 %v1550, %v1549
        %v1879 = vpack.c.b16 %v1552, %v1551
        %v1880 = vpack.c.b16 %v1554, %v1553
        %v1881 = vpack.c.b16 %v1556, %v1555
        %v1882 = vpack.c.b16 %v1558, %v1557
        %v1883 = vpack.c.b16 %v1560, %v1559
        %v1884 = vpack.c.b16 %v1562, %v1561
        %v1885 = vpack.c.b16 %v1564, %v1563
        %v1886 = vpack.c.b16 %v1566, %v1565
        %v1887 = vpack.c.b16 %v1568, %v1567
        %v1888 = vpack.c.b16 %v1570, %v1569
        %v1889 = vpack.c.b16 %v1572, %v1571
        %v1890 = vpack.c.b16 %v1574, %v1573
        %v1891 = vpack.c.b16 %v1576, %v1575
        %v1892 = vpack.c.b16 %v1578, %v1577
        %v1893 = vpack.c.b16 %v1580, %v1579
        %v1894 = vpack.c.b16 %v1582, %v1581
        %v1895 = vpack.c.b16 %v1584, %v1583
        %v1896 = vpack.c.b16 %v1586, %v1585
        %v1897 = vpack.c.b16 %v1588, %v1587
        %v1898 = vpack.c.b16 %v1590, %v1589
        %v1899 = vpack.c.b16 %v1592, %v1591
        %v1900 = vpack.c.b16 %v1594, %v1593
        %v1901 = vpack.c.b16 %v1596, %v1595
        %v1902 = vpack.c.b16 %v1598, %v1597
        %v1903 = vpack.c.b16 %v1600, %v1599
        %v1904 = vpack.c.b16 %v1602, %v1601
        %v1905 = vpack.c.b16 %v1604, %v1603
        %v1906 = vpack.c.b16 %v1606, %v1605
        %v1907 = vpack.c.b16 %v1608, %v1607
        %v1908 = vpack.c.b16 %v1610, %v1609
        %v1909 = vpack.c.b16 %v1612, %v1611
        %v1910 = vpack.c.b16 %v1614, %v1613
        %v1911 = vpack.c.b16 %v1616, %v1615
        %v1912 = vpack.c.b16 %v1618, %v1617
        %v1913 = vpack.c.b16 %v1620, %v1619
        %v1914 = vpack.c.b16 %v1622, %v1621
        %v1915 = vpack.c.b16 %v1624, %v1623
        %v1916 = vpack.c.b16 %v1626, %v1625
        %v1917 = vpack.c.b16 %v1628, %v1627
        %v1918 = vpack.c.b16 %v1630, %v1629
        %v1919 = vpack.c.b16 %v1632, %v1631
        %v1920 = vpack.c.b16 %v1634, %v1633
        %v1921 = vpack.c.b16 %v1636, %v1635
        %v1922 = vpack.c.b16 %v1638, %v1637
        %v1923 = vpack.c.b16 %v1640, %v1639
        %v1924 = vpack.c.b16 %v1642, %v1641
        %v1925 = vpack.c.b16 %v1644, %v1643
        %v1926 = vpack.c.b16 %v1646, %v1645
        %v1927 = vpack.c.b16 %v1648, %v1647
        %v1928 = vpack.c.b16 %v1650, %v1649
        %v1929 = vpack.c.b16 %v1652, %v1651
        %v1930 = vpack.c.b16 %v1654, %v1653
        %v1931 = vpack.c.b16 %v1656, %v1655
        %v1932 = vpack.c.b16 %v1658, %v1657
        %v1933 = vpack.c.b16 %v1660, %v1659
        %v1934 = vpack.c.b16 %v1662, %v1661
        %v1935 = vpack.c.b16 %v1664, %v1663
        %v1936 = vpack.c.b16 %v1666, %v1665
        %v1937 = vpack.c.b16 %v1668, %v1667
        %v1938 = vpack.c.b16 %v1670, %v1669
        %v1939 = vpack.c.b16 %v1672, %v1671
        %v1940 = vpack.c.b16 %v1674, %v1673
        %v1941 = vpack.c.b16 %v1676, %v1675
        %v1942 = vpack.c.b16 %v1678, %v1677
        %v1943 = vpack.c.b16 %v1680, %v1679
        %v1944 = vpack.c.b16 %v1682, %v1681
        %v1945 = vpack.c.b16 %v1684, %v1683
        %v1946 = vpack.c.b16 %v1686, %v1685
        %v1947 = vpack.c.b16 %v1688, %v1687
        %v1948 = vpack.c.b16 %v1690, %v1689
        %v1949 = vpack.c.b16 %v1692, %v1691
        %v1950 = vpack.c.b16 %v1694, %v1693
        %v1951 = vpack.c.b16 %v1696, %v1695
        %v1952 = vpack.c.b16 %v1698, %v1697
        %v1953 = vpack.c.b16 %v1700, %v1699
        %v1954 = vpack.c.b16 %v1702, %v1701
        %v1955 = vpack.c.b16 %v1704, %v1703
        %v1956 = vpack.c.b16 %v1706, %v1705
        %v1957 = vpack.c.b16 %v1708, %v1707
        %v1958 = vpack.c.b16 %v1710, %v1709
        %v1959 = vpack.c.b16 %v1712, %v1711
        %v1960 = vpack.c.b16 %v1714, %v1713
        %v1961 = vpack.c.b16 %v1716, %v1715
        %v1962 = vpack.c.b16 %v1718, %v1717
        %v1963 = vpack.c.b16 %v1720, %v1719
        %v1964 = vpack.c.b16 %v1722, %v1721
        %v1965 = vpack.c.b16 %v1724, %v1723
        %v1966 = vpack.c.b16 %v1726, %v1725
        %v1967 = vpack.c.b16 %v1728, %v1727
        %v1968 = vpack.c.b16 %v1730, %v1729
        %v1969 = vpack.c.b16 %v1732, %v1731
        %v1970 = vpack.c.b16 %v1734, %v1733
        %v1971 = vpack.c.b16 %v1736, %v1735
        %v1972 = vpack.c.b16 %v1738, %v1737
        %v1973 = vpack.c.b16 %v1740, %v1739
        %v1974 = vpack.c.b16 %v1742, %v1741
        %v1975 = vpack.c.b16 %v1744, %v1743
        %v1976 = vpack.c.b16 %v1746, %v1745
        %v1977 = vpack.c.b16 %v1748, %v1747
        %v1978 = vpack.c.b16 %v1750, %v1749
        %v1979 = vpack.c.b16 %v1752, %v1751
        %v1980 = vpack.c.b16 %v1754, %v1753
        %v1981 = vpack.c.b16 %v1756, %v1755
        %v1982 = vpack.c.b16 %v1758, %v1757
        %v1983 = vpack.c.b16 %v1760, %v1759
        %v1984 = vpack.c.b16 %v1762, %v1761
        %v1985 = vpack.c.b16 %v1764, %v1763
        %v1986 = vpack.c.b16 %v1766, %v1765
        %v1987 = vpack.c.b16 %v1768, %v1767
        %v1988 = vpack.c.b16 %v1770, %v1769
        %v1989 = vpack.c.b16 %v1772, %v1771
        %vm2206 = vcmask 72704
        %v2208 = vsel %vm2206, %v463, 0
        %vm2210 = vcmask 1043456
        %vm2211 = vcmask 1044480
        %v2212 = vsel %vm2210, 4294967295, 65535
        %v2213 = vsel %vm2211, %v2212, 0
        %v2215 = vand.u32 %v1989, %v2213
        %2217 = vmatprep.subr.bf16.mxu0 0
        %2218 = vmatpush1.bf16.msra.mxu0 %v1780
        %2219 = vmatprep.subr.bf16.mxu0 0
        %2220 = vmatpush1.bf16.msra.mxu0 %v1779
        %2221 = vmatprep.subr.bf16.mxu0 0
        %2222 = vmatpush1.bf16.msra.mxu0 %v1778
        %2223 = vmatprep.subr.bf16.mxu0 0
        %2224 = vmatpush1.bf16.msra.mxu0 %v1777
        %2225 = vmatprep.subr.bf16.mxu0 0
        %2226 = vmatpush1.bf16.msra.mxu0 %v1776
        %2227 = vmatprep.subr.bf16.mxu0 0
        %2228 = vmatpush1.bf16.msra.mxu0 %v1775
        %2229 = vmatprep.subr.bf16.mxu0 0
        %2230 = vmatpush1.bf16.msra.mxu0 %v1774
        %2231 = vmatprep.subr.bf16.mxu0 0
        %2232 = vmatpush1.bf16.msra.mxu0 %v1773
        %2233 = vmatprep.subr.bf16.mxu0 0
        %2234 = vmatpush2.bf16.msra.mxu0 %v1788
        %2235 = vmatprep.subr.bf16.mxu0 0
        %2236 = vmatpush2.bf16.msra.mxu0 %v1787
        %2237 = vmatprep.subr.bf16.mxu0 0
        %2238 = vmatpush2.bf16.msra.mxu0 %v1786
        %2239 = vmatprep.subr.bf16.mxu0 0
        %2240 = vmatpush2.bf16.msra.mxu0 %v1785
        %2241 = vmatprep.subr.bf16.mxu0 0
        %2242 = vmatpush2.bf16.msra.mxu0 %v1784
        %2243 = vmatprep.subr.bf16.mxu0 0
        %2244 = vmatpush2.bf16.msra.mxu0 %v1783
        %2245 = vmatprep.subr.bf16.mxu0 0
        %2246 = vmatpush2.bf16.msra.mxu0 %v1782
        %2247 = vmatprep.subr.bf16.mxu0 0
        %2248 = vmatpush2.bf16.msra.mxu0 %v1781
        %2249 = vmatprep.mubr.bf16.mxu0 %v437
        %2250 = vmatmul.mubr.bf16.gmra.mxu0 %v436
        %v2251 = vpop.f32.mrf.mxu0
        %v2252 = vadd.f32 %v903, %v2251
        %v2253 = vpop.f32.mrf.mxu0
        %v2254 = vpop.f32.mrf.mxu0
        %v2255 = vpop.f32.mrf.mxu0
        %2256 = vdwg.mxu0
        %2257 = vmatprep.subr.bf16.mxu0 0
        %2258 = vmatpush1.bf16.msra.mxu0 %v1796
        %2259 = vmatprep.subr.bf16.mxu0 0
        %2260 = vmatpush1.bf16.msra.mxu0 %v1795
        %2261 = vmatprep.subr.bf16.mxu0 0
        %2262 = vmatpush1.bf16.msra.mxu0 %v1794
        %2263 = vmatprep.subr.bf16.mxu0 0
        %2264 = vmatpush1.bf16.msra.mxu0 %v1793
        %2265 = vmatprep.subr.bf16.mxu0 0
        %2266 = vmatpush1.bf16.msra.mxu0 %v1792
        %2267 = vmatprep.subr.bf16.mxu0 0
        %2268 = vmatpush1.bf16.msra.mxu0 %v1791
        %2269 = vmatprep.subr.bf16.mxu0 0
        %2270 = vmatpush1.bf16.msra.mxu0 %v1790
        %2271 = vmatprep.subr.bf16.mxu0 0
        %2272 = vmatpush1.bf16.msra.mxu0 %v1789
        %2273 = vmatprep.subr.bf16.mxu0 0
        %2274 = vmatpush2.bf16.msra.mxu0 %v1804
        %2275 = vmatprep.subr.bf16.mxu0 0
        %2276 = vmatpush2.bf16.msra.mxu0 %v1803
        %2277 = vmatprep.subr.bf16.mxu0 0
        %2278 = vmatpush2.bf16.msra.mxu0 %v1802
        %2279 = vmatprep.subr.bf16.mxu0 0
        %2280 = vmatpush2.bf16.msra.mxu0 %v1801
        %2281 = vmatprep.subr.bf16.mxu0 0
        %2282 = vmatpush2.bf16.msra.mxu0 %v1800
        %2283 = vmatprep.subr.bf16.mxu0 0
        %2284 = vmatpush2.bf16.msra.mxu0 %v1799
        %2285 = vmatprep.subr.bf16.mxu0 0
        %2286 = vmatpush2.bf16.msra.mxu0 %v1798
        %2287 = vmatprep.subr.bf16.mxu0 0
        %2288 = vmatpush2.bf16.msra.mxu0 %v1797
        %2289 = vmatprep.mubr.bf16.mxu0 %v439
        %2290 = vmatmul.mubr.bf16.gmra.mxu0 %v438
        %v2291 = vpop.f32.mrf.mxu0
        %v2292 = vadd.f32 %v2252, %v2291
        %v2293 = vpop.f32.mrf.mxu0
        %v2294 = vpop.f32.mrf.mxu0
        %v2295 = vpop.f32.mrf.mxu0
        %2296 = vdwg.mxu0
        %2297 = vmatprep.subr.bf16.mxu0 0
        %2298 = vmatpush1.bf16.msra.mxu0 %v1812
        %2299 = vmatprep.subr.bf16.mxu0 0
        %2300 = vmatpush1.bf16.msra.mxu0 %v1811
        %2301 = vmatprep.subr.bf16.mxu0 0
        %2302 = vmatpush1.bf16.msra.mxu0 %v1810
        %2303 = vmatprep.subr.bf16.mxu0 0
        %2304 = vmatpush1.bf16.msra.mxu0 %v1809
        %2305 = vmatprep.subr.bf16.mxu0 0
        %2306 = vmatpush1.bf16.msra.mxu0 %v1808
        %2307 = vmatprep.subr.bf16.mxu0 0
        %2308 = vmatpush1.bf16.msra.mxu0 %v1807
        %2309 = vmatprep.subr.bf16.mxu0 0
        %2310 = vmatpush1.bf16.msra.mxu0 %v1806
        %2311 = vmatprep.subr.bf16.mxu0 0
        %2312 = vmatpush1.bf16.msra.mxu0 %v1805
        %2313 = vmatprep.subr.bf16.mxu0 0
        %2314 = vmatpush2.bf16.msra.mxu0 %v1820
        %2315 = vmatprep.subr.bf16.mxu0 0
        %2316 = vmatpush2.bf16.msra.mxu0 %v1819
        %2317 = vmatprep.subr.bf16.mxu0 0
        %2318 = vmatpush2.bf16.msra.mxu0 %v1818
        %2319 = vmatprep.subr.bf16.mxu0 0
        %2320 = vmatpush2.bf16.msra.mxu0 %v1817
        %2321 = vmatprep.subr.bf16.mxu0 0
        %2322 = vmatpush2.bf16.msra.mxu0 %v1816
        %2323 = vmatprep.subr.bf16.mxu0 0
        %2324 = vmatpush2.bf16.msra.mxu0 %v1815
        %2325 = vmatprep.subr.bf16.mxu0 0
        %2326 = vmatpush2.bf16.msra.mxu0 %v1814
        %2327 = vmatprep.subr.bf16.mxu0 0
        %2328 = vmatpush2.bf16.msra.mxu0 %v1813
        %2329 = vmatprep.mubr.bf16.mxu0 %v441
        %2330 = vmatmul.mubr.bf16.gmra.mxu0 %v440
        %v2331 = vpop.f32.mrf.mxu0
        %v2332 = vadd.f32 %v2292, %v2331
        %v2333 = vpop.f32.mrf.mxu0
        %v2334 = vpop.f32.mrf.mxu0
        %v2335 = vpop.f32.mrf.mxu0
        %2336 = vdwg.mxu0
        %2337 = vmatprep.subr.bf16.mxu0 0
        %2338 = vmatpush1.bf16.msra.mxu0 %v1828
        %2339 = vmatprep.subr.bf16.mxu0 0
        %2340 = vmatpush1.bf16.msra.mxu0 %v1827
        %2341 = vmatprep.subr.bf16.mxu0 0
        %2342 = vmatpush1.bf16.msra.mxu0 %v1826
        %2343 = vmatprep.subr.bf16.mxu0 0
        %2344 = vmatpush1.bf16.msra.mxu0 %v1825
        %2345 = vmatprep.subr.bf16.mxu0 0
        %2346 = vmatpush1.bf16.msra.mxu0 %v1824
        %2347 = vmatprep.subr.bf16.mxu0 0
        %2348 = vmatpush1.bf16.msra.mxu0 %v1823
        %2349 = vmatprep.subr.bf16.mxu0 0
        %2350 = vmatpush1.bf16.msra.mxu0 %v1822
        %2351 = vmatprep.subr.bf16.mxu0 0
        %2352 = vmatpush1.bf16.msra.mxu0 %v1821
        %2353 = vmatprep.subr.bf16.mxu0 0
        %2354 = vmatpush2.bf16.msra.mxu0 %v1836
        %2355 = vmatprep.subr.bf16.mxu0 0
        %2356 = vmatpush2.bf16.msra.mxu0 %v1835
        %2357 = vmatprep.subr.bf16.mxu0 0
        %2358 = vmatpush2.bf16.msra.mxu0 %v1834
        %2359 = vmatprep.subr.bf16.mxu0 0
        %2360 = vmatpush2.bf16.msra.mxu0 %v1833
        %2361 = vmatprep.subr.bf16.mxu0 0
        %2362 = vmatpush2.bf16.msra.mxu0 %v1832
        %2363 = vmatprep.subr.bf16.mxu0 0
        %2364 = vmatpush2.bf16.msra.mxu0 %v1831
        %2365 = vmatprep.subr.bf16.mxu0 0
        %2366 = vmatpush2.bf16.msra.mxu0 %v1830
        %2367 = vmatprep.subr.bf16.mxu0 0
        %2368 = vmatpush2.bf16.msra.mxu0 %v1829
        %2369 = vmatprep.mubr.bf16.mxu0 %v443
        %2370 = vmatmul.mubr.bf16.gmra.mxu0 %v442
        %v2371 = vpop.f32.mrf.mxu0
        %v2372 = vadd.f32 %v2332, %v2371
        %v2373 = vpop.f32.mrf.mxu0
        %v2374 = vpop.f32.mrf.mxu0
        %v2375 = vpop.f32.mrf.mxu0
        %2376 = vdwg.mxu0
        %2377 = vmatprep.subr.bf16.mxu0 0
        %2378 = vmatpush1.bf16.msra.mxu0 %v1844
        %2379 = vmatprep.subr.bf16.mxu0 0
        %2380 = vmatpush1.bf16.msra.mxu0 %v1843
        %2381 = vmatprep.subr.bf16.mxu0 0
        %2382 = vmatpush1.bf16.msra.mxu0 %v1842
        %2383 = vmatprep.subr.bf16.mxu0 0
        %2384 = vmatpush1.bf16.msra.mxu0 %v1841
        %2385 = vmatprep.subr.bf16.mxu0 0
        %2386 = vmatpush1.bf16.msra.mxu0 %v1840
        %2387 = vmatprep.subr.bf16.mxu0 0
        %2388 = vmatpush1.bf16.msra.mxu0 %v1839
        %2389 = vmatprep.subr.bf16.mxu0 0
        %2390 = vmatpush1.bf16.msra.mxu0 %v1838
        %2391 = vmatprep.subr.bf16.mxu0 0
        %2392 = vmatpush1.bf16.msra.mxu0 %v1837
        %2393 = vmatprep.subr.bf16.mxu0 0
        %2394 = vmatpush2.bf16.msra.mxu0 %v1852
        %2395 = vmatprep.subr.bf16.mxu0 0
        %2396 = vmatpush2.bf16.msra.mxu0 %v1851
        %2397 = vmatprep.subr.bf16.mxu0 0
        %2398 = vmatpush2.bf16.msra.mxu0 %v1850
        %2399 = vmatprep.subr.bf16.mxu0 0
        %2400 = vmatpush2.bf16.msra.mxu0 %v1849
        %2401 = vmatprep.subr.bf16.mxu0 0
        %2402 = vmatpush2.bf16.msra.mxu0 %v1848
        %2403 = vmatprep.subr.bf16.mxu0 0
        %2404 = vmatpush2.bf16.msra.mxu0 %v1847
        %2405 = vmatprep.subr.bf16.mxu0 0
        %2406 = vmatpush2.bf16.msra.mxu0 %v1846
        %2407 = vmatprep.subr.bf16.mxu0 0
        %2408 = vmatpush2.bf16.msra.mxu0 %v1845
        %2409 = vmatprep.mubr.bf16.mxu0 %v445
        %2410 = vmatmul.mubr.bf16.gmra.mxu0 %v444
        %v2411 = vpop.f32.mrf.mxu0
        %v2412 = vadd.f32 %v2372, %v2411
        %v2413 = vpop.f32.mrf.mxu0
        %v2414 = vpop.f32.mrf.mxu0
        %v2415 = vpop.f32.mrf.mxu0
        %2416 = vdwg.mxu0
        %2417 = vmatprep.subr.bf16.mxu0 0
        %2418 = vmatpush1.bf16.msra.mxu0 %v1860
        %2419 = vmatprep.subr.bf16.mxu0 0
        %2420 = vmatpush1.bf16.msra.mxu0 %v1859
        %2421 = vmatprep.subr.bf16.mxu0 0
        %2422 = vmatpush1.bf16.msra.mxu0 %v1858
        %2423 = vmatprep.subr.bf16.mxu0 0
        %2424 = vmatpush1.bf16.msra.mxu0 %v1857
        %2425 = vmatprep.subr.bf16.mxu0 0
        %2426 = vmatpush1.bf16.msra.mxu0 %v1856
        %2427 = vmatprep.subr.bf16.mxu0 0
        %2428 = vmatpush1.bf16.msra.mxu0 %v1855
        %2429 = vmatprep.subr.bf16.mxu0 0
        %2430 = vmatpush1.bf16.msra.mxu0 %v1854
        %2431 = vmatprep.subr.bf16.mxu0 0
        %2432 = vmatpush1.bf16.msra.mxu0 %v1853
        %2433 = vmatprep.subr.bf16.mxu0 0
        %2434 = vmatpush2.bf16.msra.mxu0 %v1868
        %2435 = vmatprep.subr.bf16.mxu0 0
        %2436 = vmatpush2.bf16.msra.mxu0 %v1867
        %2437 = vmatprep.subr.bf16.mxu0 0
        %2438 = vmatpush2.bf16.msra.mxu0 %v1866
        %2439 = vmatprep.subr.bf16.mxu0 0
        %2440 = vmatpush2.bf16.msra.mxu0 %v1865
        %2441 = vmatprep.subr.bf16.mxu0 0
        %2442 = vmatpush2.bf16.msra.mxu0 %v1864
        %2443 = vmatprep.subr.bf16.mxu0 0
        %2444 = vmatpush2.bf16.msra.mxu0 %v1863
        %2445 = vmatprep.subr.bf16.mxu0 0
        %2446 = vmatpush2.bf16.msra.mxu0 %v1862
        %2447 = vmatprep.subr.bf16.mxu0 0
        %2448 = vmatpush2.bf16.msra.mxu0 %v1861
        %2449 = vmatprep.mubr.bf16.mxu0 %v447
        %2450 = vmatmul.mubr.bf16.gmra.mxu0 %v446
        %v2451 = vpop.f32.mrf.mxu0
        %v2452 = vadd.f32 %v2412, %v2451
        %v2453 = vpop.f32.mrf.mxu0
        %v2454 = vpop.f32.mrf.mxu0
        %v2455 = vpop.f32.mrf.mxu0
        %2456 = vdwg.mxu0
        %2457 = vmatprep.subr.bf16.mxu0 0
        %2458 = vmatpush1.bf16.msra.mxu0 %v1876
        %2459 = vmatprep.subr.bf16.mxu0 0
        %2460 = vmatpush1.bf16.msra.mxu0 %v1875
        %2461 = vmatprep.subr.bf16.mxu0 0
        %2462 = vmatpush1.bf16.msra.mxu0 %v1874
        %2463 = vmatprep.subr.bf16.mxu0 0
        %2464 = vmatpush1.bf16.msra.mxu0 %v1873
        %2465 = vmatprep.subr.bf16.mxu0 0
        %2466 = vmatpush1.bf16.msra.mxu0 %v1872
        %2467 = vmatprep.subr.bf16.mxu0 0
        %2468 = vmatpush1.bf16.msra.mxu0 %v1871
        %2469 = vmatprep.subr.bf16.mxu0 0
        %2470 = vmatpush1.bf16.msra.mxu0 %v1870
        %2471 = vmatprep.subr.bf16.mxu0 0
        %2472 = vmatpush1.bf16.msra.mxu0 %v1869
        %2473 = vmatprep.subr.bf16.mxu0 0
        %2474 = vmatpush2.bf16.msra.mxu0 %v1884
        %2475 = vmatprep.subr.bf16.mxu0 0
        %2476 = vmatpush2.bf16.msra.mxu0 %v1883
        %2477 = vmatprep.subr.bf16.mxu0 0
        %2478 = vmatpush2.bf16.msra.mxu0 %v1882
        %2479 = vmatprep.subr.bf16.mxu0 0
        %2480 = vmatpush2.bf16.msra.mxu0 %v1881
        %2481 = vmatprep.subr.bf16.mxu0 0
        %2482 = vmatpush2.bf16.msra.mxu0 %v1880
        %2483 = vmatprep.subr.bf16.mxu0 0
        %2484 = vmatpush2.bf16.msra.mxu0 %v1879
        %2485 = vmatprep.subr.bf16.mxu0 0
        %2486 = vmatpush2.bf16.msra.mxu0 %v1878
        %2487 = vmatprep.subr.bf16.mxu0 0
        %2488 = vmatpush2.bf16.msra.mxu0 %v1877
        %2489 = vmatprep.mubr.bf16.mxu0 %v449
        %2490 = vmatmul.mubr.bf16.gmra.mxu0 %v448
        %v2491 = vpop.f32.mrf.mxu0
        %v2492 = vadd.f32 %v2452, %v2491
        %v2493 = vpop.f32.mrf.mxu0
        %v2494 = vpop.f32.mrf.mxu0
        %v2495 = vpop.f32.mrf.mxu0
        %2496 = vdwg.mxu0
        %2497 = vmatprep.subr.bf16.mxu0 0
        %2498 = vmatpush1.bf16.msra.mxu0 %v1892
        %2499 = vmatprep.subr.bf16.mxu0 0
        %2500 = vmatpush1.bf16.msra.mxu0 %v1891
        %2501 = vmatprep.subr.bf16.mxu0 0
        %2502 = vmatpush1.bf16.msra.mxu0 %v1890
        %2503 = vmatprep.subr.bf16.mxu0 0
        %2504 = vmatpush1.bf16.msra.mxu0 %v1889
        %2505 = vmatprep.subr.bf16.mxu0 0
        %2506 = vmatpush1.bf16.msra.mxu0 %v1888
        %2507 = vmatprep.subr.bf16.mxu0 0
        %2508 = vmatpush1.bf16.msra.mxu0 %v1887
        %2509 = vmatprep.subr.bf16.mxu0 0
        %2510 = vmatpush1.bf16.msra.mxu0 %v1886
        %2511 = vmatprep.subr.bf16.mxu0 0
        %2512 = vmatpush1.bf16.msra.mxu0 %v1885
        %2513 = vmatprep.subr.bf16.mxu0 0
        %2514 = vmatpush2.bf16.msra.mxu0 %v1900
        %2515 = vmatprep.subr.bf16.mxu0 0
        %2516 = vmatpush2.bf16.msra.mxu0 %v1899
        %2517 = vmatprep.subr.bf16.mxu0 0
        %2518 = vmatpush2.bf16.msra.mxu0 %v1898
        %2519 = vmatprep.subr.bf16.mxu0 0
        %2520 = vmatpush2.bf16.msra.mxu0 %v1897
        %2521 = vmatprep.subr.bf16.mxu0 0
        %2522 = vmatpush2.bf16.msra.mxu0 %v1896
        %2523 = vmatprep.subr.bf16.mxu0 0
        %2524 = vmatpush2.bf16.msra.mxu0 %v1895
        %2525 = vmatprep.subr.bf16.mxu0 0
        %2526 = vmatpush2.bf16.msra.mxu0 %v1894
        %2527 = vmatprep.subr.bf16.mxu0 0
        %2528 = vmatpush2.bf16.msra.mxu0 %v1893
        %2529 = vmatprep.mubr.bf16.mxu0 %v451
        %2530 = vmatmul.mubr.bf16.gmra.mxu0 %v450
        %v2531 = vpop.f32.mrf.mxu0
        %v2532 = vadd.f32 %v2492, %v2531
        %v2533 = vpop.f32.mrf.mxu0
        %v2534 = vpop.f32.mrf.mxu0
        %v2535 = vpop.f32.mrf.mxu0
        %2536 = vdwg.mxu0
        %2537 = vmatprep.subr.bf16.mxu0 0
        %2538 = vmatpush1.bf16.msra.mxu0 %v1908
        %2539 = vmatprep.subr.bf16.mxu0 0
        %2540 = vmatpush1.bf16.msra.mxu0 %v1907
        %2541 = vmatprep.subr.bf16.mxu0 0
        %2542 = vmatpush1.bf16.msra.mxu0 %v1906
        %2543 = vmatprep.subr.bf16.mxu0 0
        %2544 = vmatpush1.bf16.msra.mxu0 %v1905
        %2545 = vmatprep.subr.bf16.mxu0 0
        %2546 = vmatpush1.bf16.msra.mxu0 %v1904
        %2547 = vmatprep.subr.bf16.mxu0 0
        %2548 = vmatpush1.bf16.msra.mxu0 %v1903
        %2549 = vmatprep.subr.bf16.mxu0 0
        %2550 = vmatpush1.bf16.msra.mxu0 %v1902
        %2551 = vmatprep.subr.bf16.mxu0 0
        %2552 = vmatpush1.bf16.msra.mxu0 %v1901
        %2553 = vmatprep.subr.bf16.mxu0 0
        %2554 = vmatpush2.bf16.msra.mxu0 %v1916
        %2555 = vmatprep.subr.bf16.mxu0 0
        %2556 = vmatpush2.bf16.msra.mxu0 %v1915
        %2557 = vmatprep.subr.bf16.mxu0 0
        %2558 = vmatpush2.bf16.msra.mxu0 %v1914
        %2559 = vmatprep.subr.bf16.mxu0 0
        %2560 = vmatpush2.bf16.msra.mxu0 %v1913
        %2561 = vmatprep.subr.bf16.mxu0 0
        %2562 = vmatpush2.bf16.msra.mxu0 %v1912
        %2563 = vmatprep.subr.bf16.mxu0 0
        %2564 = vmatpush2.bf16.msra.mxu0 %v1911
        %2565 = vmatprep.subr.bf16.mxu0 0
        %2566 = vmatpush2.bf16.msra.mxu0 %v1910
        %2567 = vmatprep.subr.bf16.mxu0 0
        %2568 = vmatpush2.bf16.msra.mxu0 %v1909
        %2569 = vmatprep.mubr.bf16.mxu0 %v453
        %2570 = vmatmul.mubr.bf16.gmra.mxu0 %v452
        %v2571 = vpop.f32.mrf.mxu0
        %v2572 = vadd.f32 %v2532, %v2571
        %v2573 = vpop.f32.mrf.mxu0
        %v2574 = vpop.f32.mrf.mxu0
        %v2575 = vpop.f32.mrf.mxu0
        %2576 = vdwg.mxu0
        %2577 = vmatprep.subr.bf16.mxu0 0
        %2578 = vmatpush1.bf16.msra.mxu0 %v1924
        %2579 = vmatprep.subr.bf16.mxu0 0
        %2580 = vmatpush1.bf16.msra.mxu0 %v1923
        %2581 = vmatprep.subr.bf16.mxu0 0
        %2582 = vmatpush1.bf16.msra.mxu0 %v1922
        %2583 = vmatprep.subr.bf16.mxu0 0
        %2584 = vmatpush1.bf16.msra.mxu0 %v1921
        %2585 = vmatprep.subr.bf16.mxu0 0
        %2586 = vmatpush1.bf16.msra.mxu0 %v1920
        %2587 = vmatprep.subr.bf16.mxu0 0
        %2588 = vmatpush1.bf16.msra.mxu0 %v1919
        %2589 = vmatprep.subr.bf16.mxu0 0
        %2590 = vmatpush1.bf16.msra.mxu0 %v1918
        %2591 = vmatprep.subr.bf16.mxu0 0
        %2592 = vmatpush1.bf16.msra.mxu0 %v1917
        %2593 = vmatprep.subr.bf16.mxu0 0
        %2594 = vmatpush2.bf16.msra.mxu0 %v1932
        %2595 = vmatprep.subr.bf16.mxu0 0
        %2596 = vmatpush2.bf16.msra.mxu0 %v1931
        %2597 = vmatprep.subr.bf16.mxu0 0
        %2598 = vmatpush2.bf16.msra.mxu0 %v1930
        %2599 = vmatprep.subr.bf16.mxu0 0
        %2600 = vmatpush2.bf16.msra.mxu0 %v1929
        %2601 = vmatprep.subr.bf16.mxu0 0
        %2602 = vmatpush2.bf16.msra.mxu0 %v1928
        %2603 = vmatprep.subr.bf16.mxu0 0
        %2604 = vmatpush2.bf16.msra.mxu0 %v1927
        %2605 = vmatprep.subr.bf16.mxu0 0
        %2606 = vmatpush2.bf16.msra.mxu0 %v1926
        %2607 = vmatprep.subr.bf16.mxu0 0
        %2608 = vmatpush2.bf16.msra.mxu0 %v1925
        %2609 = vmatprep.mubr.bf16.mxu0 %v455
        %2610 = vmatmul.mubr.bf16.gmra.mxu0 %v454
        %v2611 = vpop.f32.mrf.mxu0
        %v2612 = vadd.f32 %v2572, %v2611
        %v2613 = vpop.f32.mrf.mxu0
        %v2614 = vpop.f32.mrf.mxu0
        %v2615 = vpop.f32.mrf.mxu0
        %2616 = vdwg.mxu0
        %2617 = vmatprep.subr.bf16.mxu0 0
        %2618 = vmatpush1.bf16.msra.mxu0 %v1940
        %2619 = vmatprep.subr.bf16.mxu0 0
        %2620 = vmatpush1.bf16.msra.mxu0 %v1939
        %2621 = vmatprep.subr.bf16.mxu0 0
        %2622 = vmatpush1.bf16.msra.mxu0 %v1938
        %2623 = vmatprep.subr.bf16.mxu0 0
        %2624 = vmatpush1.bf16.msra.mxu0 %v1937
        %2625 = vmatprep.subr.bf16.mxu0 0
        %2626 = vmatpush1.bf16.msra.mxu0 %v1936
        %2627 = vmatprep.subr.bf16.mxu0 0
        %2628 = vmatpush1.bf16.msra.mxu0 %v1935
        %2629 = vmatprep.subr.bf16.mxu0 0
        %2630 = vmatpush1.bf16.msra.mxu0 %v1934
        %2631 = vmatprep.subr.bf16.mxu0 0
        %2632 = vmatpush1.bf16.msra.mxu0 %v1933
        %2633 = vmatprep.subr.bf16.mxu0 0
        %2634 = vmatpush2.bf16.msra.mxu0 %v1948
        %2635 = vmatprep.subr.bf16.mxu0 0
        %2636 = vmatpush2.bf16.msra.mxu0 %v1947
        %2637 = vmatprep.subr.bf16.mxu0 0
        %2638 = vmatpush2.bf16.msra.mxu0 %v1946
        %2639 = vmatprep.subr.bf16.mxu0 0
        %2640 = vmatpush2.bf16.msra.mxu0 %v1945
        %2641 = vmatprep.subr.bf16.mxu0 0
        %2642 = vmatpush2.bf16.msra.mxu0 %v1944
        %2643 = vmatprep.subr.bf16.mxu0 0
        %2644 = vmatpush2.bf16.msra.mxu0 %v1943
        %2645 = vmatprep.subr.bf16.mxu0 0
        %2646 = vmatpush2.bf16.msra.mxu0 %v1942
        %2647 = vmatprep.subr.bf16.mxu0 0
        %2648 = vmatpush2.bf16.msra.mxu0 %v1941
        %2649 = vmatprep.mubr.bf16.mxu0 %v457
        %2650 = vmatmul.mubr.bf16.gmra.mxu0 %v456
        %v2651 = vpop.f32.mrf.mxu0
        %v2652 = vadd.f32 %v2612, %v2651
        %v2653 = vpop.f32.mrf.mxu0
        %v2654 = vpop.f32.mrf.mxu0
        %v2655 = vpop.f32.mrf.mxu0
        %2656 = vdwg.mxu0
        %2657 = vmatprep.subr.bf16.mxu0 0
        %2658 = vmatpush1.bf16.msra.mxu0 %v1956
        %2659 = vmatprep.subr.bf16.mxu0 0
        %2660 = vmatpush1.bf16.msra.mxu0 %v1955
        %2661 = vmatprep.subr.bf16.mxu0 0
        %2662 = vmatpush1.bf16.msra.mxu0 %v1954
        %2663 = vmatprep.subr.bf16.mxu0 0
        %2664 = vmatpush1.bf16.msra.mxu0 %v1953
        %2665 = vmatprep.subr.bf16.mxu0 0
        %2666 = vmatpush1.bf16.msra.mxu0 %v1952
        %2667 = vmatprep.subr.bf16.mxu0 0
        %2668 = vmatpush1.bf16.msra.mxu0 %v1951
        %2669 = vmatprep.subr.bf16.mxu0 0
        %2670 = vmatpush1.bf16.msra.mxu0 %v1950
        %2671 = vmatprep.subr.bf16.mxu0 0
        %2672 = vmatpush1.bf16.msra.mxu0 %v1949
        %2673 = vmatprep.subr.bf16.mxu0 0
        %2674 = vmatpush2.bf16.msra.mxu0 %v1964
        %2675 = vmatprep.subr.bf16.mxu0 0
        %2676 = vmatpush2.bf16.msra.mxu0 %v1963
        %2677 = vmatprep.subr.bf16.mxu0 0
        %2678 = vmatpush2.bf16.msra.mxu0 %v1962
        %2679 = vmatprep.subr.bf16.mxu0 0
        %2680 = vmatpush2.bf16.msra.mxu0 %v1961
        %2681 = vmatprep.subr.bf16.mxu0 0
        %2682 = vmatpush2.bf16.msra.mxu0 %v1960
        %2683 = vmatprep.subr.bf16.mxu0 0
        %2684 = vmatpush2.bf16.msra.mxu0 %v1959
        %2685 = vmatprep.subr.bf16.mxu0 0
        %2686 = vmatpush2.bf16.msra.mxu0 %v1958
        %2687 = vmatprep.subr.bf16.mxu0 0
        %2688 = vmatpush2.bf16.msra.mxu0 %v1957
        %2689 = vmatprep.mubr.bf16.mxu0 %v459
        %2690 = vmatmul.mubr.bf16.gmra.mxu0 %v458
        %v2691 = vpop.f32.mrf.mxu0
        %v2692 = vadd.f32 %v2652, %v2691
        %v2693 = vpop.f32.mrf.mxu0
        %v2694 = vpop.f32.mrf.mxu0
        %v2695 = vpop.f32.mrf.mxu0
        %2696 = vdwg.mxu0
        %2697 = vmatprep.subr.bf16.mxu0 0
        %2698 = vmatpush1.bf16.msra.mxu0 %v1972
        %2699 = vmatprep.subr.bf16.mxu0 0
        %2700 = vmatpush1.bf16.msra.mxu0 %v1971
        %2701 = vmatprep.subr.bf16.mxu0 0
        %2702 = vmatpush1.bf16.msra.mxu0 %v1970
        %2703 = vmatprep.subr.bf16.mxu0 0
        %2704 = vmatpush1.bf16.msra.mxu0 %v1969
        %2705 = vmatprep.subr.bf16.mxu0 0
        %2706 = vmatpush1.bf16.msra.mxu0 %v1968
        %2707 = vmatprep.subr.bf16.mxu0 0
        %2708 = vmatpush1.bf16.msra.mxu0 %v1967
        %2709 = vmatprep.subr.bf16.mxu0 0
        %2710 = vmatpush1.bf16.msra.mxu0 %v1966
        %2711 = vmatprep.subr.bf16.mxu0 0
        %2712 = vmatpush1.bf16.msra.mxu0 %v1965
        %2713 = vmatprep.subr.bf16.mxu0 0
        %2714 = vmatpush2.bf16.msra.mxu0 %v1980
        %2715 = vmatprep.subr.bf16.mxu0 0
        %2716 = vmatpush2.bf16.msra.mxu0 %v1979
        %2717 = vmatprep.subr.bf16.mxu0 0
        %2718 = vmatpush2.bf16.msra.mxu0 %v1978
        %2719 = vmatprep.subr.bf16.mxu0 0
        %2720 = vmatpush2.bf16.msra.mxu0 %v1977
        %2721 = vmatprep.subr.bf16.mxu0 0
        %2722 = vmatpush2.bf16.msra.mxu0 %v1976
        %2723 = vmatprep.subr.bf16.mxu0 0
        %2724 = vmatpush2.bf16.msra.mxu0 %v1975
        %2725 = vmatprep.subr.bf16.mxu0 0
        %2726 = vmatpush2.bf16.msra.mxu0 %v1974
        %2727 = vmatprep.subr.bf16.mxu0 0
        %2728 = vmatpush2.bf16.msra.mxu0 %v1973
        %2729 = vmatprep.mubr.bf16.mxu0 %v461
        %2730 = vmatmul.mubr.bf16.gmra.mxu0 %v460
        %v2731 = vpop.f32.mrf.mxu0
        %v2732 = vadd.f32 %v2692, %v2731
        %v2733 = vpop.f32.mrf.mxu0
        %v2734 = vpop.f32.mrf.mxu0
        %v2735 = vpop.f32.mrf.mxu0
        %2736 = vdwg.mxu0
        %2737 = vmatprep.subr.bf16.mxu0 0
        %2738 = vmatpush1.bf16.msra.mxu0 %v1988
        %2739 = vmatprep.subr.bf16.mxu0 0
        %2740 = vmatpush1.bf16.msra.mxu0 %v1987
        %2741 = vmatprep.subr.bf16.mxu0 0
        %2742 = vmatpush1.bf16.msra.mxu0 %v1986
        %2743 = vmatprep.subr.bf16.mxu0 0
        %2744 = vmatpush1.bf16.msra.mxu0 %v1985
        %2745 = vmatprep.subr.bf16.mxu0 0
        %2746 = vmatpush1.bf16.msra.mxu0 %v1984
        %2747 = vmatprep.subr.bf16.mxu0 0
        %2748 = vmatpush1.bf16.msra.mxu0 %v1983
        %2749 = vmatprep.subr.bf16.mxu0 0
        %2750 = vmatpush1.bf16.msra.mxu0 %v1982
        %2751 = vmatprep.subr.bf16.mxu0 0
        %2752 = vmatpush1.bf16.msra.mxu0 %v1981
        %2753 = vmatprep.subr.bf16.mxu0 0
        %2754 = vmatpush2.bf16.msra.mxu0 0
        %2755 = vmatprep.subr.bf16.mxu0 0
        %2756 = vmatpush2.bf16.msra.mxu0 0
        %2757 = vmatprep.subr.bf16.mxu0 0
        %2758 = vmatpush2.bf16.msra.mxu0 0
        %2759 = vmatprep.subr.bf16.mxu0 0
        %2760 = vmatpush2.bf16.msra.mxu0 0
        %2761 = vmatprep.subr.bf16.mxu0 0
        %2762 = vmatpush2.bf16.msra.mxu0 0
        %2763 = vmatprep.subr.bf16.mxu0 0
        %2764 = vmatpush2.bf16.msra.mxu0 0
        %2765 = vmatprep.subr.bf16.mxu0 0
        %2766 = vmatpush2.bf16.msra.mxu0 0
        %2767 = vmatprep.subr.bf16.mxu0 0
        %2768 = vmatpush2.bf16.msra.mxu0 %v2215
        %2769 = vmatprep.mubr.bf16.mxu0 %v2208
        %2770 = vmatmul.mubr.bf16.gmra.mxu0 %v462
        %v2771 = vpop.f32.mrf.mxu0
        %v2772 = vadd.f32 %v2732, %v2771
        %v2773 = vpop.f32.mrf.mxu0
        %v2774 = vpop.f32.mrf.mxu0
        %v2775 = vpop.f32.mrf.mxu0
        %2776 = vdwg.mxu0
        %v2777 = vmax.f32 %v2772, 0.0
        %v2778 = vpack.c.bf16 %v2777, %v2777
        %v2779 = vld [vmem:[#allocation7] sm:$0xf]
        %v2780 = vld [vmem:[#allocation7 + $0x4] sm:$0xf]
        %v2781 = vld [vmem:[#allocation7 + $0x8] sm:$0xf]
        %v2782 = vld [vmem:[#allocation7 + $0xc] sm:$0xf]
        %v2783 = vld [vmem:[#allocation7 + $0x10] sm:$0xf]
        %v2784 = vld [vmem:[#allocation7 + $0x14] sm:$0xf]
        %v2785 = vld [vmem:[#allocation7 + $0x18] sm:$0xf]
        %v2786 = vld [vmem:[#allocation7 + $0x1c] sm:$0xf]
        %v2787 = vld [vmem:[#allocation7 + $0x20] sm:$0xf]
        %v2788 = vld [vmem:[#allocation7 + $0x24] sm:$0xf]
        %v2789 = vld [vmem:[#allocation7 + $0x28] sm:$0xf]
        %v2790 = vld [vmem:[#allocation7 + $0x2c] sm:$0xf]
        %v2791 = vld [vmem:[#allocation7 + $0x30] sm:$0xf]
        %v2792 = vld [vmem:[#allocation7 + $0x34] sm:$0xf]
        %v2793 = vld [vmem:[#allocation7 + $0x38] sm:$0xf]
        %v2794 = vld [vmem:[#allocation7 + $0x3c] sm:$0xf]
        %v2795 = vld [vmem:[%s4] sm:$0x1]
        %v2797 = vlaneseq
        %v2798 = vshrl.u32 %v2797, 7
        %v2799 = vsub.s32 0, %v2798
        %v2800 = vrot.slane %v2795, %v2799
        %v2818 = vunpack.c.l.b16 %v2779
        %v2819 = vunpack.c.l.b16 %v2780
        %v2820 = vunpack.c.l.b16 %v2781
        %v2821 = vunpack.c.l.b16 %v2782
        %v2822 = vunpack.c.l.b16 %v2783
        %v2823 = vunpack.c.l.b16 %v2784
        %v2824 = vunpack.c.l.b16 %v2785
        %v2825 = vunpack.c.l.b16 %v2786
        %v2826 = vunpack.c.l.b16 %v2787
        %v2827 = vunpack.c.l.b16 %v2788
        %v2828 = vunpack.c.l.b16 %v2789
        %v2829 = vunpack.c.l.b16 %v2790
        %v2830 = vunpack.c.l.b16 %v2791
        %v2831 = vunpack.c.l.b16 %v2792
        %v2832 = vunpack.c.l.b16 %v2793
        %v2833 = vunpack.c.l.b16 %v2794
        %v2834 = vpack.c.b16 %v2819, %v2818
        %v2835 = vpack.c.b16 %v2821, %v2820
        %v2836 = vpack.c.b16 %v2823, %v2822
        %v2837 = vpack.c.b16 %v2825, %v2824
        %v2838 = vpack.c.b16 %v2827, %v2826
        %v2839 = vpack.c.b16 %v2829, %v2828
        %v2840 = vpack.c.b16 %v2831, %v2830
        %v2841 = vpack.c.b16 %v2833, %v2832
        %2850 = vmatprep.subr.bf16.mxu0 0
        %2851 = vmatpush1.bf16.msra.mxu0 %v2841
        %2852 = vmatprep.subr.bf16.mxu0 0
        %2853 = vmatpush1.bf16.msra.mxu0 %v2840
        %2854 = vmatprep.subr.bf16.mxu0 0
        %2855 = vmatpush1.bf16.msra.mxu0 %v2839
        %2856 = vmatprep.subr.bf16.mxu0 0
        %2857 = vmatpush1.bf16.msra.mxu0 %v2838
        %2858 = vmatprep.subr.bf16.mxu0 0
        %2859 = vmatpush1.bf16.msra.mxu0 %v2837
        %2860 = vmatprep.subr.bf16.mxu0 0
        %2861 = vmatpush1.bf16.msra.mxu0 %v2836
        %2862 = vmatprep.subr.bf16.mxu0 0
        %2863 = vmatpush1.bf16.msra.mxu0 %v2835
        %2864 = vmatprep.subr.bf16.mxu0 0
        %2865 = vmatpush1.bf16.msra.mxu0 %v2834
        %2866 = vmatprep.subr.bf16.mxu0 0
        %2867 = vmatpush2.bf16.msra.mxu0 0
        %2868 = vmatprep.subr.bf16.mxu0 0
        %2869 = vmatpush2.bf16.msra.mxu0 0
        %2870 = vmatprep.subr.bf16.mxu0 0
        %2871 = vmatpush2.bf16.msra.mxu0 0
        %2872 = vmatprep.subr.bf16.mxu0 0
        %2873 = vmatpush2.bf16.msra.mxu0 0
        %2874 = vmatprep.subr.bf16.mxu0 0
        %2875 = vmatpush2.bf16.msra.mxu0 0
        %2876 = vmatprep.subr.bf16.mxu0 0
        %2877 = vmatpush2.bf16.msra.mxu0 0
        %2878 = vmatprep.subr.bf16.mxu0 0
        %2879 = vmatpush2.bf16.msra.mxu0 0
        %2880 = vmatprep.subr.bf16.mxu0 0
        %2881 = vmatpush2.bf16.msra.mxu0 0
        %2882 = vmatprep.mubr.bf16.mxu0 0
        %2883 = vmatmul.mubr.bf16.gmra.mxu0 %v2778
        %v2884 = vpop.f32.mrf.mxu0
        %v2885 = vadd.f32 %v2800, %v2884
        %v2886 = vpop.f32.mrf.mxu0
        %v2887 = vpop.f32.mrf.mxu0
        %v2888 = vpop.f32.mrf.mxu0
        %2889 = vdwg.mxu0
        %v2890 = vmax.f32 %v2885, 0.0
        %v2891 = vpack.c.bf16 %v2890, %v2890
        %v2892 = vld [vmem:[#allocation8] sm:$0xf]
        %v2893 = vld [vmem:[#allocation8 + $0x4] sm:$0xf]
        %v2894 = vld [vmem:[#allocation8 + $0x8] sm:$0xf]
        %v2895 = vld [vmem:[#allocation8 + $0xc] sm:$0xf]
        %v2896 = vld [vmem:[#allocation8 + $0x10] sm:$0xf]
        %v2897 = vld [vmem:[#allocation8 + $0x14] sm:$0xf]
        %v2898 = vld [vmem:[#allocation8 + $0x18] sm:$0xf]
        %v2899 = vld [vmem:[#allocation8 + $0x1c] sm:$0xf]
        %v2900 = vld [vmem:[#allocation8 + $0x20] sm:$0xf]
        %v2901 = vld [vmem:[#allocation8 + $0x24] sm:$0xf]
        %v2902 = vld [vmem:[#allocation8 + $0x28] sm:$0xf]
        %v2903 = vld [vmem:[#allocation8 + $0x2c] sm:$0xf]
        %v2904 = vld [vmem:[#allocation8 + $0x30] sm:$0xf]
        %v2905 = vld [vmem:[#allocation8 + $0x34] sm:$0xf]
        %v2906 = vld [vmem:[#allocation8 + $0x38] sm:$0xf]
        %v2907 = vld [vmem:[#allocation8 + $0x3c] sm:$0xf]
        %v2908 = vld [vmem:[%s6] sm:$0x1]
        %v2910 = vlaneseq
        %v2911 = vshrl.u32 %v2910, 7
        %v2912 = vsub.s32 0, %v2911
        %v2913 = vrot.slane %v2908, %v2912
        %v2931 = vunpack.c.l.b16 %v2892
        %v2932 = vunpack.c.l.b16 %v2893
        %v2933 = vunpack.c.l.b16 %v2894
        %v2934 = vunpack.c.l.b16 %v2895
        %v2935 = vunpack.c.l.b16 %v2896
        %v2936 = vunpack.c.l.b16 %v2897
        %v2937 = vunpack.c.l.b16 %v2898
        %v2938 = vunpack.c.l.b16 %v2899
        %v2939 = vunpack.c.l.b16 %v2900
        %v2940 = vunpack.c.l.b16 %v2901
        %v2941 = vunpack.c.l.b16 %v2902
        %v2942 = vunpack.c.l.b16 %v2903
        %v2943 = vunpack.c.l.b16 %v2904
        %v2944 = vunpack.c.l.b16 %v2905
        %v2945 = vunpack.c.l.b16 %v2906
        %v2946 = vunpack.c.l.b16 %v2907
        %v2947 = vpack.c.b16 %v2932, %v2931
        %v2948 = vpack.c.b16 %v2934, %v2933
        %v2949 = vpack.c.b16 %v2936, %v2935
        %v2950 = vpack.c.b16 %v2938, %v2937
        %v2951 = vpack.c.b16 %v2940, %v2939
        %v2952 = vpack.c.b16 %v2942, %v2941
        %v2953 = vpack.c.b16 %v2944, %v2943
        %v2954 = vpack.c.b16 %v2946, %v2945
        %2963 = vmatprep.subr.bf16.mxu0 0
        %2964 = vmatpush1.bf16.msra.mxu0 %v2954
        %2965 = vmatprep.subr.bf16.mxu0 0
        %2966 = vmatpush1.bf16.msra.mxu0 %v2953
        %2967 = vmatprep.subr.bf16.mxu0 0
        %2968 = vmatpush1.bf16.msra.mxu0 %v2952
        %2969 = vmatprep.subr.bf16.mxu0 0
        %2970 = vmatpush1.bf16.msra.mxu0 %v2951
        %2971 = vmatprep.subr.bf16.mxu0 0
        %2972 = vmatpush1.bf16.msra.mxu0 %v2950
        %2973 = vmatprep.subr.bf16.mxu0 0
        %2974 = vmatpush1.bf16.msra.mxu0 %v2949
        %2975 = vmatprep.subr.bf16.mxu0 0
        %2976 = vmatpush1.bf16.msra.mxu0 %v2948
        %2977 = vmatprep.subr.bf16.mxu0 0
        %2978 = vmatpush1.bf16.msra.mxu0 %v2947
        %2979 = vmatprep.subr.bf16.mxu0 0
        %2980 = vmatpush2.bf16.msra.mxu0 0
        %2981 = vmatprep.subr.bf16.mxu0 0
        %2982 = vmatpush2.bf16.msra.mxu0 0
        %2983 = vmatprep.subr.bf16.mxu0 0
        %2984 = vmatpush2.bf16.msra.mxu0 0
        %2985 = vmatprep.subr.bf16.mxu0 0
        %2986 = vmatpush2.bf16.msra.mxu0 0
        %2987 = vmatprep.subr.bf16.mxu0 0
        %2988 = vmatpush2.bf16.msra.mxu0 0
        %2989 = vmatprep.subr.bf16.mxu0 0
        %2990 = vmatpush2.bf16.msra.mxu0 0
        %2991 = vmatprep.subr.bf16.mxu0 0
        %2992 = vmatpush2.bf16.msra.mxu0 0
        %2993 = vmatprep.subr.bf16.mxu0 0
        %2994 = vmatpush2.bf16.msra.mxu0 0
        %2995 = vmatprep.mubr.bf16.mxu0 0
        %2996 = vmatmul.mubr.bf16.gmra.mxu0 %v2891
        %v2997 = vpop.f32.mrf.mxu0
        %v2998 = vadd.f32 %v2913, %v2997
        %v2999 = vpop.f32.mrf.mxu0
        %v3000 = vpop.f32.mrf.mxu0
        %v3001 = vpop.f32.mrf.mxu0
        %3002 = vdwg.mxu0
        %v3003 = vmax.f32 %v2998, 0.0
        %v3004 = vpack.c.bf16 %v3003, %v3003
        %v3005 = vld [vmem:[#allocation10] sm:$0xf]
        %v3006 = vld [vmem:[#allocation10 + $0x4] sm:$0xf]
        %v3007 = vld [vmem:[#allocation10 + $0x8] sm:$0xf]
        %v3008 = vld [vmem:[#allocation10 + $0xc] sm:$0xf]
        %v3009 = vld [vmem:[#allocation10 + $0x10] sm:$0xf]
        %v3010 = vld [vmem:[#allocation10 + $0x14] sm:$0xf]
        %v3011 = vld [vmem:[#allocation10 + $0x18] sm:$0xf]
        %v3012 = vld [vmem:[#allocation10 + $0x1c] sm:$0xf]
        %v3013 = vld [vmem:[#allocation10 + $0x20] sm:$0xf]
        %v3014 = vld [vmem:[#allocation10 + $0x24] sm:$0xf]
        %v3015 = vld [vmem:[#allocation10 + $0x28] sm:$0xf]
        %v3016 = vld [vmem:[#allocation10 + $0x2c] sm:$0xf]
        %v3017 = vld [vmem:[#allocation10 + $0x30] sm:$0xf]
        %v3018 = vld [vmem:[#allocation10 + $0x34] sm:$0xf]
        %v3019 = vld [vmem:[#allocation10 + $0x38] sm:$0xf]
        %v3020 = vld [vmem:[#allocation10 + $0x3c] sm:$0xf]
        %v3021 = vld [vmem:[%s8] sm:$0x1]
        %v3023 = vlaneseq
        %v3024 = vshrl.u32 %v3023, 7
        %v3025 = vsub.s32 0, %v3024
        %v3026 = vrot.slane %v3021, %v3025
        %v3044 = vunpack.c.l.b16 %v3005
        %v3045 = vunpack.c.l.b16 %v3006
        %v3046 = vunpack.c.l.b16 %v3007
        %v3047 = vunpack.c.l.b16 %v3008
        %v3048 = vunpack.c.l.b16 %v3009
        %v3049 = vunpack.c.l.b16 %v3010
        %v3050 = vunpack.c.l.b16 %v3011
        %v3051 = vunpack.c.l.b16 %v3012
        %v3052 = vunpack.c.l.b16 %v3013
        %v3053 = vunpack.c.l.b16 %v3014
        %v3054 = vunpack.c.l.b16 %v3015
        %v3055 = vunpack.c.l.b16 %v3016
        %v3056 = vunpack.c.l.b16 %v3017
        %v3057 = vunpack.c.l.b16 %v3018
        %v3058 = vunpack.c.l.b16 %v3019
        %v3059 = vunpack.c.l.b16 %v3020
        %v3060 = vpack.c.b16 %v3045, %v3044
        %v3061 = vpack.c.b16 %v3047, %v3046
        %v3062 = vpack.c.b16 %v3049, %v3048
        %v3063 = vpack.c.b16 %v3051, %v3050
        %v3064 = vpack.c.b16 %v3053, %v3052
        %v3065 = vpack.c.b16 %v3055, %v3054
        %v3066 = vpack.c.b16 %v3057, %v3056
        %v3067 = vpack.c.b16 %v3059, %v3058
        %3076 = vmatprep.subr.bf16.mxu0 0
        %3077 = vmatpush1.bf16.msra.mxu0 %v3067
        %3078 = vmatprep.subr.bf16.mxu0 0
        %3079 = vmatpush1.bf16.msra.mxu0 %v3066
        %3080 = vmatprep.subr.bf16.mxu0 0
        %3081 = vmatpush1.bf16.msra.mxu0 %v3065
        %3082 = vmatprep.subr.bf16.mxu0 0
        %3083 = vmatpush1.bf16.msra.mxu0 %v3064
        %3084 = vmatprep.subr.bf16.mxu0 0
        %3085 = vmatpush1.bf16.msra.mxu0 %v3063
        %3086 = vmatprep.subr.bf16.mxu0 0
        %3087 = vmatpush1.bf16.msra.mxu0 %v3062
        %3088 = vmatprep.subr.bf16.mxu0 0
        %3089 = vmatpush1.bf16.msra.mxu0 %v3061
        %3090 = vmatprep.subr.bf16.mxu0 0
        %3091 = vmatpush1.bf16.msra.mxu0 %v3060
        %3092 = vmatprep.subr.bf16.mxu0 0
        %3093 = vmatpush2.bf16.msra.mxu0 0
        %3094 = vmatprep.subr.bf16.mxu0 0
        %3095 = vmatpush2.bf16.msra.mxu0 0
        %3096 = vmatprep.subr.bf16.mxu0 0
        %3097 = vmatpush2.bf16.msra.mxu0 0
        %3098 = vmatprep.subr.bf16.mxu0 0
        %3099 = vmatpush2.bf16.msra.mxu0 0
        %3100 = vmatprep.subr.bf16.mxu0 0
        %3101 = vmatpush2.bf16.msra.mxu0 0
        %3102 = vmatprep.subr.bf16.mxu0 0
        %3103 = vmatpush2.bf16.msra.mxu0 0
        %3104 = vmatprep.subr.bf16.mxu0 0
        %3105 = vmatpush2.bf16.msra.mxu0 0
        %3106 = vmatprep.subr.bf16.mxu0 0
        %3107 = vmatpush2.bf16.msra.mxu0 0
        %3108 = vmatprep.mubr.bf16.mxu0 0
        %3109 = vmatmul.mubr.bf16.gmra.mxu0 %v3004
        %v3110 = vpop.f32.mrf.mxu0
        %v3111 = vadd.f32 %v3026, %v3110
        %v3112 = vpop.f32.mrf.mxu0
        %v3113 = vpop.f32.mrf.mxu0
        %v3114 = vpop.f32.mrf.mxu0
        %3115 = vdwg.mxu0
        %3116 = vst [vmem:[%s406] sm:$0xff] %v3111
        %s3117 = sand.u32 %s230, 1
        %s3118 = scalar_lea.sflag [#allocation4], %s3117
        %s3119 = sand.u32 %s230, 1
        %s3120 = smul.addr %s3119, 8
        %s3121 = scalar_lea.vmem [#allocation11], %s3120
        // Predicated region
        $region77: #{tpu_custom_call.1} parent=55 // pred_check
          %p3122 = pneg %p240
        $region78: #{tpu_custom_call.1} parent=55 // pred_check_branch
          %3124 = sbr.rel (%p3122) target = $region80
        $region79: #{tpu_custom_call.1} parent=55 // pred_region
          %s3126 = ssub.s32 128, 128
          %3127 = vsyncadd %s3118, %s3126
          %s3128 = smul.addr %s28, 128
          %s3129 = scalar_lea.hbm %s9, %s3128
          %s3131 = sshll.u32 %s3121, 4
          %s3132 = int_to_ptr.vmem [resolvable:$true] %s3131
          %3134 = dma.vmem_to_hbm [thread:$0]  %s3132, 128, %s3129, %s3118
        $region80: #{tpu_custom_call.1} parent=55 // pred_fallthru
          _
      $region56: #{tpu_custom_call.1} parent=5 // pred_fallthru
        _
      %p3135 = scmp.le.s32.totalorder 2, %s23
      // Predicated region
      $region81: #{tpu_custom_call.1} parent=5 // pred_check
        %p3136 = pneg %p3135
      $region82: #{tpu_custom_call.1} parent=5 // pred_check_branch
        %3138 = sbr.rel (%p3136) target = $region84
      $region83: #{tpu_custom_call.1} parent=5 // pred_region
        %s3139 = ssub.s32 %s23, 2
        // Predicated region
        $region85: #{tpu_custom_call.1} parent=83 // pred_check
          %p3140 = pneg %p246
        $region86: #{tpu_custom_call.1} parent=83 // pred_check_branch
          %3142 = sbr.rel (%p3140) target = $region88
        $region87: #{tpu_custom_call.1} parent=83 // pred_region
          %s3143 = sand.u32 %s231, 1
          %s3144 = scalar_lea.sflag [#allocation4], %s3143
          %s3145 = sand.u32 %s231, 1
          %s3146 = smul.addr %s3145, 8
          %s3147 = scalar_lea.vmem [#allocation11], %s3146
          %3148 = dma.done %s3144, 128
        $region88: #{tpu_custom_call.1} parent=83 // pred_fallthru
          _
      $region84: #{tpu_custom_call.1} parent=5 // pred_fallthru
        _
    $region6: #{tpu_custom_call.1} parent=1 // loop_footer
      %s27 = sadd.s32 1, %s23
    $region7: #{tpu_custom_call.1} parent=1 // loop_footer_branch
      %22 = sbr.rel target = $region3
    $region8: #{tpu_custom_call.1} parent=1 // loop_exit
      _
    %3149 = vsyncpa [#allocation3], 1
    %s3150 = scalar_lea.sflag [#allocation3], 1
    %3151 = vsyncpa %s3150, 1
    %3152 = vsyncpa [#allocation6], 1
    %3153 = vsyncpa [#allocation9], 1
    %3154 = vsyncpa [#allocation4], 1
    %s3155 = scalar_lea.sflag [#allocation4], 1
    %3156 = vsyncpa %s3155, 1

// kernel: tpu_custom_call.1
$region0: #{tpu_custom_call.1}
  #allocation0 [shape = 'u32[]', space=smem, size = 0x4, offset = 0x4, fixed_abs, tag = 'smem constant byte address 0x4 - core index']
  #allocation1 [shape = 'u32[144,128]{1,0:T(1,128)}', space=vmem, size = 0x12000, scoped, tag = 'internal scratch']
  %s0 = inlined_call_operand.hbm [shape: f32[16,3465], index: 0, kind: input, shape index: {}]
  %s1 = inlined_call_operand.hbm [shape: bf16[3465,128], index: 1, kind: input, shape index: {}]
  %s2 = inlined_call_operand.vmem [shape: f32[1,128], index: 2, kind: input, shape index: {}]
  %s3 = inlined_call_operand.hbm [shape: bf16[128,128], index: 3, kind: input, shape index: {}]
  %s4 = inlined_call_operand.vmem [shape: f32[1,128], index: 4, kind: input, shape index: {}]
  %s5 = inlined_call_operand.hbm [shape: bf16[128,128], index: 5, kind: input, shape index: {}]
  %s6 = inlined_call_operand.vmem [shape: f32[1,128], index: 6, kind: input, shape index: {}]
  %s7 = inlined_call_operand.hbm [shape: bf16[128,128], index: 7, kind: input, shape index: {}]
  %s8 = inlined_call_operand.vmem [shape: f32[1,128], index: 8, kind: input, shape index: {}]
  %s9 = inlined_call_operand.hbm [shape: f32[16,128], index: 9, kind: output, shape index: {}]
  %s10 = sld [smem:[#allocation0]]
  $region89: #{tpu_custom_call.1} parent=0
    _
  %s12 = ssub.s32 1, %s10
  %s13 = scalar_select 0, %s12, %s10
  $region1: #{tpu_custom_call.1} parent=0
    #allocation2 [shape = 'u8[229376]{0}', space=vmem, size = 0x38000, scoped, tag = 'input window, operand 0']
    #allocation3 [shape = 's32[2]{0}', space=sflag, size = 0x8, scoped, tag = 'scoped memory for tpu_custom_call.1']
    #allocation4 [shape = 's32[2]{0}', space=sflag, size = 0x8, scoped, tag = 'scoped memory for tpu_custom_call.1']
    #allocation5 [shape = 'u8[888832]{0}', space=vmem, size = 0xd9000, scoped, tag = 'input window, operand 1, single buffered']
    #allocation6 [shape = 's32[1]{0}', space=sflag, size = 0x4, scoped, tag = 'scoped memory for tpu_custom_call.1']
    #allocation7 [shape = 'u8[32768]{0}', space=vmem, size = 0x8000, scoped, tag = 'input window, operand 3, single buffered']
    #allocation8 [shape = 'u8[32768]{0}', space=vmem, size = 0x8000, scoped, tag = 'input window, operand 5, single buffered']
    #allocation9 [shape = 's32[1]{0}', space=sflag, size = 0x4, scoped, tag = 'scoped memory for tpu_custom_call.1']
    #allocation10 [shape = 'u8[32768]{0}', space=vmem, size = 0x8000, scoped, tag = 'input window, operand 7, single buffered']
    #allocation11 [shape = 'u8[8192]{0}', space=vmem, size = 0x2000, scoped, tag = 'output window, operand 0']
    %14 = vsyncpa [#allocation3], 0
    %s15 = scalar_lea.sflag [#allocation3], 1
    %16 = vsyncpa %s15, 0
    %17 = vsyncpa [#allocation6], 0
    %18 = vsyncpa [#allocation9], 0
    %19 = vsyncpa [#allocation4], 0
    %s20 = scalar_lea.sflag [#allocation4], 1
    %21 = vsyncpa %s20, 0
    loop: start=0, step=1, limit=4
    $region2: #{tpu_custom_call.1} parent=1 // loop_pre_header
      _
    $region3: #{tpu_custom_call.1} parent=1 // loop_header
      %s23 = sphi 0, %s27
      %p24 = scmp.ge.s32.totalorder %s23, 4
      %s33 = sphi 0, %s35
      %s36 = sphi 0, %s33
      %s37 = sphi 0, %s36
      %s53 = sphi 0, %s37
      %s57 = sphi 0, %s57
      %s59 = sphi 0, %s57
      %s60 = sphi 0, %s59
      %s74 = sphi 0, %s60
      %s78 = sphi 0, %s78
      %s80 = sphi 0, %s78
      %s81 = sphi 0, %s80
      %s95 = sphi 0, %s81
      %s99 = sphi 0, %s99
      %s101 = sphi 0, %s99
      %s102 = sphi 0, %s101
      %s116 = sphi 0, %s102
      %s120 = sphi 0, %s120
      %s122 = sphi 0, %s120
      %s123 = sphi 0, %s122
      %s137 = sphi 0, %s123
      %s141 = sphi 0, %s141
      %s143 = sphi 0, %s141
      %s144 = sphi 0, %s143
      %s158 = sphi 0, %s144
      %s162 = sphi 0, %s162
      %s164 = sphi 0, %s162
      %s165 = sphi 0, %s164
      %s179 = sphi 0, %s165
      %s183 = sphi 0, %s183
      %s185 = sphi 0, %s183
      %s186 = sphi 0, %s185
      %s200 = sphi 0, %s186
      %s204 = sphi 0, %s204
      %s206 = sphi 0, %s204
      %s207 = sphi 0, %s206
      %s221 = sphi 0, %s207
      %s227 = sphi 0, %s229
      %s230 = sphi 0, %s227
      %s231 = sphi 0, %s230
      %s247 = sphi 0, %s231
    $region4: #{tpu_custom_call.1} parent=1 // loop_header_branch
      %26 = sbr.rel (%p24) target = $region8
    $region5: #{tpu_custom_call.1} parent=1 // loop_body
      %s28 = ssub.s32 %s23, 1
      %s29 = ssub.s32 %s23, 2
      %s30 = sadd.s32 %s23, 1
      %s31 = ssub.s32 %s23, %s30
      %p32 = scmp.eq.s32.totalorder %s31, 0
      %s34 = sadd.s32 %s33, 1
      %s35 = scalar_select %p32, %s33, %s34
      %p38 = pneg %p32
      %p39 = scmp.eq.s32.totalorder %s23, 1
      %p40 = por %p38, %p39
      %p41 = scmp.ne.s32.totalorder %s33, %s36
      %p42 = scmp.eq.s32.totalorder %s23, 0
      %p43 = por %p41, %p42
      %p44 = scmp.ne.s32.totalorder %s33, %s36
      %p45 = scmp.eq.s32.totalorder %s28, 1
      %p46 = por %p44, %p45
      %p47 = scmp.ne.s32.totalorder %s36, %s37
      %p48 = scmp.eq.s32.totalorder %s28, 0
      %p49 = por %p47, %p48
      %p50 = scmp.ne.s32.totalorder %s36, %s37
      %p51 = scmp.eq.s32.totalorder %s29, 1
      %p52 = por %p50, %p51
      %p54 = scmp.ne.s32.totalorder %s37, %s53
      %p55 = scmp.eq.s32.totalorder %s29, 0
      %p56 = por %p54, %p55
      %s58 = sadd.s32 %s57, 1
      %p61 = scmp.eq.s32.totalorder %s23, 1
      %p62 = scmp.ne.s32.totalorder %s57, %s59
      %p63 = scmp.eq.s32.totalorder %s23, 0
      %p64 = por %p62, %p63
      %p65 = scmp.ne.s32.totalorder %s57, %s59
      %p66 = scmp.eq.s32.totalorder %s28, 1
      %p67 = por %p65, %p66
      %p68 = scmp.ne.s32.totalorder %s59, %s60
      %p69 = scmp.eq.s32.totalorder %s28, 0
      %p70 = por %p68, %p69
      %p71 = scmp.ne.s32.totalorder %s59, %s60
      %p72 = scmp.eq.s32.totalorder %s29, 1
      %p73 = por %p71, %p72
      %p75 = scmp.ne.s32.totalorder %s60, %s74
      %p76 = scmp.eq.s32.totalorder %s29, 0
      %p77 = por %p75, %p76
      %s79 = sadd.s32 %s78, 1
      %p82 = scmp.eq.s32.totalorder %s23, 1
      %p83 = scmp.ne.s32.totalorder %s78, %s80
      %p84 = scmp.eq.s32.totalorder %s23, 0
      %p85 = por %p83, %p84
      %p86 = scmp.ne.s32.totalorder %s78, %s80
      %p87 = scmp.eq.s32.totalorder %s28, 1
      %p88 = por %p86, %p87
      %p89 = scmp.ne.s32.totalorder %s80, %s81
      %p90 = scmp.eq.s32.totalorder %s28, 0
      %p91 = por %p89, %p90
      %p92 = scmp.ne.s32.totalorder %s80, %s81
      %p93 = scmp.eq.s32.totalorder %s29, 1
      %p94 = por %p92, %p93
      %p96 = scmp.ne.s32.totalorder %s81, %s95
      %p97 = scmp.eq.s32.totalorder %s29, 0
      %p98 = por %p96, %p97
      %s100 = sadd.s32 %s99, 1
      %p103 = scmp.eq.s32.totalorder %s23, 1
      %p104 = scmp.ne.s32.totalorder %s99, %s101
      %p105 = scmp.eq.s32.totalorder %s23, 0
      %p106 = por %p104, %p105
      %p107 = scmp.ne.s32.totalorder %s99, %s101
      %p108 = scmp.eq.s32.totalorder %s28, 1
      %p109 = por %p107, %p108
      %p110 = scmp.ne.s32.totalorder %s101, %s102
      %p111 = scmp.eq.s32.totalorder %s28, 0
      %p112 = por %p110, %p111
      %p113 = scmp.ne.s32.totalorder %s101, %s102
      %p114 = scmp.eq.s32.totalorder %s29, 1
      %p115 = por %p113, %p114
      %p117 = scmp.ne.s32.totalorder %s102, %s116
      %p118 = scmp.eq.s32.totalorder %s29, 0
      %p119 = por %p117, %p118
      %s121 = sadd.s32 %s120, 1
      %p124 = scmp.eq.s32.totalorder %s23, 1
      %p125 = scmp.ne.s32.totalorder %s120, %s122
      %p126 = scmp.eq.s32.totalorder %s23, 0
      %p127 = por %p125, %p126
      %p128 = scmp.ne.s32.totalorder %s120, %s122
      %p129 = scmp.eq.s32.totalorder %s28, 1
      %p130 = por %p128, %p129
      %p131 = scmp.ne.s32.totalorder %s122, %s123
      %p132 = scmp.eq.s32.totalorder %s28, 0
      %p133 = por %p131, %p132
      %p134 = scmp.ne.s32.totalorder %s122, %s123
      %p135 = scmp.eq.s32.totalorder %s29, 1
      %p136 = por %p134, %p135
      %p138 = scmp.ne.s32.totalorder %s123, %s137
      %p139 = scmp.eq.s32.totalorder %s29, 0
      %p140 = por %p138, %p139
      %s142 = sadd.s32 %s141, 1
      %p145 = scmp.eq.s32.totalorder %s23, 1
      %p146 = scmp.ne.s32.totalorder %s141, %s143
      %p147 = scmp.eq.s32.totalorder %s23, 0
      %p148 = por %p146, %p147
      %p149 = scmp.ne.s32.totalorder %s141, %s143
      %p150 = scmp.eq.s32.totalorder %s28, 1
      %p151 = por %p149, %p150
      %p152 = scmp.ne.s32.totalorder %s143, %s144
      %p153 = scmp.eq.s32.totalorder %s28, 0
      %p154 = por %p152, %p153
      %p155 = scmp.ne.s32.totalorder %s143, %s144
      %p156 = scmp.eq.s32.totalorder %s29, 1
      %p157 = por %p155, %p156
      %p159 = scmp.ne.s32.totalorder %s144, %s158
      %p160 = scmp.eq.s32.totalorder %s29, 0
      %p161 = por %p159, %p160
      %s163 = sadd.s32 %s162, 1
      %p166 = scmp.eq.s32.totalorder %s23, 1
      %p167 = scmp.ne.s32.totalorder %s162, %s164
      %p168 = scmp.eq.s32.totalorder %s23, 0
      %p169 = por %p167, %p168
      %p170 = scmp.ne.s32.totalorder %s162, %s164
      %p171 = scmp.eq.s32.totalorder %s28, 1
      %p172 = por %p170, %p171
      %p173 = scmp.ne.s32.totalorder %s164, %s165
      %p174 = scmp.eq.s32.totalorder %s28, 0
      %p175 = por %p173, %p174
      %p176 = scmp.ne.s32.totalorder %s164, %s165
      %p177 = scmp.eq.s32.totalorder %s29, 1
      %p178 = por %p176, %p177
      %p180 = scmp.ne.s32.totalorder %s165, %s179
      %p181 = scmp.eq.s32.totalorder %s29, 0
      %p182 = por %p180, %p181
      %s184 = sadd.s32 %s183, 1
      %p187 = scmp.eq.s32.totalorder %s23, 1
      %p188 = scmp.ne.s32.totalorder %s183, %s185
      %p189 = scmp.eq.s32.totalorder %s23, 0
      %p190 = por %p188, %p189
      %p191 = scmp.ne.s32.totalorder %s183, %s185
      %p192 = scmp.eq.s32.totalorder %s28, 1
      %p193 = por %p191, %p192
      %p194 = scmp.ne.s32.totalorder %s185, %s186
      %p195 = scmp.eq.s32.totalorder %s28, 0
      %p196 = por %p194, %p195
      %p197 = scmp.ne.s32.totalorder %s185, %s186
      %p198 = scmp.eq.s32.totalorder %s29, 1
      %p199 = por %p197, %p198
      %p201 = scmp.ne.s32.totalorder %s186, %s200
      %p202 = scmp.eq.s32.totalorder %s29, 0
      %p203 = por %p201, %p202
      %s205 = sadd.s32 %s204, 1
      %p208 = scmp.eq.s32.totalorder %s23, 1
      %p209 = scmp.ne.s32.totalorder %s204, %s206
      %p210 = scmp.eq.s32.totalorder %s23, 0
      %p211 = por %p209, %p210
      %p212 = scmp.ne.s32.totalorder %s204, %s206
      %p213 = scmp.eq.s32.totalorder %s28, 1
      %p214 = por %p212, %p213
      %p215 = scmp.ne.s32.totalorder %s206, %s207
      %p216 = scmp.eq.s32.totalorder %s28, 0
      %p217 = por %p215, %p216
      %p218 = scmp.ne.s32.totalorder %s206, %s207
      %p219 = scmp.eq.s32.totalorder %s29, 1
      %p220 = por %p218, %p219
      %p222 = scmp.ne.s32.totalorder %s207, %s221
      %p223 = scmp.eq.s32.totalorder %s29, 0
      %p224 = por %p222, %p223
      %s225 = ssub.s32 %s23, %s30
      %p226 = scmp.eq.s32.totalorder %s225, 0
      %s228 = sadd.s32 %s227, 1
      %s229 = scalar_select %p226, %s227, %s228
      %p232 = pneg %p226
      %p233 = scmp.eq.s32.totalorder %s23, 1
      %p234 = por %p232, %p233
      %p235 = scmp.ne.s32.totalorder %s227, %s230
      %p236 = scmp.eq.s32.totalorder %s23, 0
      %p237 = por %p235, %p236
      %p238 = scmp.ne.s32.totalorder %s227, %s230
      %p239 = scmp.eq.s32.totalorder %s28, 1
      %p240 = por %p238, %p239
      %p241 = scmp.ne.s32.totalorder %s230, %s231
      %p242 = scmp.eq.s32.totalorder %s28, 0
      %p243 = por %p241, %p242
      %p244 = scmp.ne.s32.totalorder %s230, %s231
      %p245 = scmp.eq.s32.totalorder %s29, 1
      %p246 = por %p244, %p245
      %p248 = scmp.ne.s32.totalorder %s231, %s247
      %p249 = scmp.eq.s32.totalorder %s29, 0
      %p250 = por %p248, %p249
      %p251 = scmp.le.s32.totalorder 1, %s23
      %p252 = scmp.lt.s32.totalorder %s23, 3
      %p253 = pnand %p251, %p252
      %p254 = pneg %p253
      // Predicated region
      $region9: #{tpu_custom_call.1} parent=5 // pred_check
        _
      $region10: #{tpu_custom_call.1} parent=5 // pred_check_branch
        %256 = sbr.rel (%p253) target = $region12
      $region11: #{tpu_custom_call.1} parent=5 // pred_region
        %s257 = ssub.s32 %s23, 1
        // Predicated region
        $region13: #{tpu_custom_call.1} parent=11 // pred_check
          %p258 = pneg %p70
        $region14: #{tpu_custom_call.1} parent=11 // pred_check_branch
          %260 = sbr.rel (%p258) target = $region16
        $region15: #{tpu_custom_call.1} parent=11 // pred_region
          %s262 = ssub.s32 27776, 27776
          %263 = vsyncadd [#allocation6], %s262
          %s264 = sshll.u32 [#allocation5], 4
          %s265 = int_to_ptr.vmem [resolvable:$true] %s264
          %270 = dma.hbm_to_vmem [thread:$0]  %s1, 27776, %s265, [#allocation6], 64, 64, 4
        $region16: #{tpu_custom_call.1} parent=11 // pred_fallthru
          _
        // Predicated region
        $region17: #{tpu_custom_call.1} parent=11 // pred_check
          %p271 = pneg %p91
        $region18: #{tpu_custom_call.1} parent=11 // pred_check_branch
          %273 = sbr.rel (%p271) target = $region20
        $region19: #{tpu_custom_call.1} parent=11 // pred_region
          _
        $region20: #{tpu_custom_call.1} parent=11 // pred_fallthru
          _
        // Predicated region
        $region21: #{tpu_custom_call.1} parent=11 // pred_check
          %p274 = pneg %p112
        $region22: #{tpu_custom_call.1} parent=11 // pred_check_branch
          %276 = sbr.rel (%p274) target = $region24
        $region23: #{tpu_custom_call.1} parent=11 // pred_region
          %s278 = ssub.s32 1024, 1024
          %279 = vsyncadd [#allocation6], %s278
          %s280 = sshll.u32 [#allocation7], 4
          %s281 = int_to_ptr.vmem [resolvable:$true] %s280
          %286 = dma.hbm_to_vmem [thread:$0]  %s3, 1024, %s281, [#allocation6], 64, 64, 4
        $region24: #{tpu_custom_call.1} parent=11 // pred_fallthru
          _
        // Predicated region
        $region25: #{tpu_custom_call.1} parent=11 // pred_check
          %p287 = pneg %p133
        $region26: #{tpu_custom_call.1} parent=11 // pred_check_branch
          %289 = sbr.rel (%p287) target = $region28
        $region27: #{tpu_custom_call.1} parent=11 // pred_region
          _
        $region28: #{tpu_custom_call.1} parent=11 // pred_fallthru
          _
        // Predicated region
        $region29: #{tpu_custom_call.1} parent=11 // pred_check
          %p290 = pneg %p154
        $region30: #{tpu_custom_call.1} parent=11 // pred_check_branch
          %292 = sbr.rel (%p290) target = $region32
        $region31: #{tpu_custom_call.1} parent=11 // pred_region
          %s294 = ssub.s32 1024, 1024
          %295 = vsyncadd [#allocation9], %s294
          %s296 = sshll.u32 [#allocation8], 4
          %s297 = int_to_ptr.vmem [resolvable:$true] %s296
          %302 = dma.hbm_to_vmem [thread:$0]  %s5, 1024, %s297, [#allocation9], 64, 64, 4
        $region32: #{tpu_custom_call.1} parent=11 // pred_fallthru
          _
        // Predicated region
        $region33: #{tpu_custom_call.1} parent=11 // pred_check
          %p303 = pneg %p175
        $region34: #{tpu_custom_call.1} parent=11 // pred_check_branch
          %305 = sbr.rel (%p303) target = $region36
        $region35: #{tpu_custom_call.1} parent=11 // pred_region
          _
        $region36: #{tpu_custom_call.1} parent=11 // pred_fallthru
          _
        // Predicated region
        $region37: #{tpu_custom_call.1} parent=11 // pred_check
          %p306 = pneg %p196
        $region38: #{tpu_custom_call.1} parent=11 // pred_check_branch
          %308 = sbr.rel (%p306) target = $region40
        $region39: #{tpu_custom_call.1} parent=11 // pred_region
          %s310 = ssub.s32 1024, 1024
          %311 = vsyncadd [#allocation9], %s310
          %s312 = sshll.u32 [#allocation10], 4
          %s313 = int_to_ptr.vmem [resolvable:$true] %s312
          %318 = dma.hbm_to_vmem [thread:$0]  %s7, 1024, %s313, [#allocation9], 64, 64, 4
        $region40: #{tpu_custom_call.1} parent=11 // pred_fallthru
          _
        // Predicated region
        $region41: #{tpu_custom_call.1} parent=11 // pred_check
          %p319 = pneg %p217
        $region42: #{tpu_custom_call.1} parent=11 // pred_check_branch
          %321 = sbr.rel (%p319) target = $region44
        $region43: #{tpu_custom_call.1} parent=11 // pred_region
          _
        $region44: #{tpu_custom_call.1} parent=11 // pred_fallthru
          _
      $region12: #{tpu_custom_call.1} parent=5 // pred_fallthru
        _
      %p322 = scmp.lt.s32.totalorder %s23, 2
      // Predicated region
      $region45: #{tpu_custom_call.1} parent=5 // pred_check
        %p323 = pneg %p322
      $region46: #{tpu_custom_call.1} parent=5 // pred_check_branch
        %325 = sbr.rel (%p323) target = $region48
      $region47: #{tpu_custom_call.1} parent=5 // pred_region
        // Predicated region
        $region49: #{tpu_custom_call.1} parent=47 // pred_check
          %p326 = pneg %p43
        $region50: #{tpu_custom_call.1} parent=47 // pred_check_branch
          %328 = sbr.rel (%p326) target = $region52
        $region51: #{tpu_custom_call.1} parent=47 // pred_region
          %s329 = sand.u32 %s33, 1
          %s330 = scalar_lea.sflag [#allocation3], %s329
          %s331 = sand.u32 %s33, 1
          %s332 = smul.addr %s331, 224
          %s333 = scalar_lea.vmem [#allocation2], %s332
          %s335 = ssub.s32 3584, 3584
          %336 = vsyncadd %s330, %s335
          %s337 = smul.addr %s23, 28
          %s338 = smul.addr %s337, 128
          %s339 = scalar_lea.hbm %s0, %s338
          %s341 = sshll.u32 %s333, 4
          %s342 = int_to_ptr.vmem [resolvable:$true] %s341
          %344 = dma.hbm_to_vmem [thread:$0]  %s339, 3584, %s342, %s330
        $region52: #{tpu_custom_call.1} parent=47 // pred_fallthru
          _
      $region48: #{tpu_custom_call.1} parent=5 // pred_fallthru
        _
      %p345 = scmp.le.s32.totalorder 1, %s23
      %p346 = scmp.lt.s32.totalorder %s23, 3
      %p347 = pnand %p345, %p346
      %p348 = pneg %p347
      // Predicated region
      $region53: #{tpu_custom_call.1} parent=5 // pred_check
        _
      $region54: #{tpu_custom_call.1} parent=5 // pred_check_branch
        %350 = sbr.rel (%p347) target = $region56
      $region55: #{tpu_custom_call.1} parent=5 // pred_region
        %s351 = ssub.s32 %s23, 1
        %s352 = sand.u32 %s36, 1
        %s353 = scalar_lea.sflag [#allocation3], %s352
        %s354 = sand.u32 %s36, 1
        %s355 = smul.addr %s354, 224
        %s356 = scalar_lea.vmem [#allocation2], %s355
        // Predicated region
        $region57: #{tpu_custom_call.1} parent=55 // pred_check
          %p357 = pneg %p49
        $region58: #{tpu_custom_call.1} parent=55 // pred_check_branch
          %359 = sbr.rel (%p357) target = $region60
        $region59: #{tpu_custom_call.1} parent=55 // pred_region
          %360 = dma.done %s353, 3584
        $region60: #{tpu_custom_call.1} parent=55 // pred_fallthru
          _
        // Predicated region
        $region61: #{tpu_custom_call.1} parent=55 // pred_check
          %p361 = pneg %p70
        $region62: #{tpu_custom_call.1} parent=55 // pred_check_branch
          %363 = sbr.rel (%p361) target = $region64
        $region63: #{tpu_custom_call.1} parent=55 // pred_region
          %364 = dma.done [#allocation6], 27776
        $region64: #{tpu_custom_call.1} parent=55 // pred_fallthru
          _
        // Predicated region
        $region65: #{tpu_custom_call.1} parent=55 // pred_check
          %p365 = pneg %p112
        $region66: #{tpu_custom_call.1} parent=55 // pred_check_branch
          %367 = sbr.rel (%p365) target = $region68
        $region67: #{tpu_custom_call.1} parent=55 // pred_region
          %368 = dma.done [#allocation6], 1024
        $region68: #{tpu_custom_call.1} parent=55 // pred_fallthru
          _
        // Predicated region
        $region69: #{tpu_custom_call.1} parent=55 // pred_check
          %p369 = pneg %p154
        $region70: #{tpu_custom_call.1} parent=55 // pred_check_branch
          %371 = sbr.rel (%p369) target = $region72
        $region71: #{tpu_custom_call.1} parent=55 // pred_region
          %372 = dma.done [#allocation9], 1024
        $region72: #{tpu_custom_call.1} parent=55 // pred_fallthru
          _
        // Predicated region
        $region73: #{tpu_custom_call.1} parent=55 // pred_check
          %p373 = pneg %p196
        $region74: #{tpu_custom_call.1} parent=55 // pred_check_branch
          %375 = sbr.rel (%p373) target = $region76
        $region75: #{tpu_custom_call.1} parent=55 // pred_region
          %376 = dma.done [#allocation9], 1024
        $region76: #{tpu_custom_call.1} parent=55 // pred_fallthru
          _
        %s377 = sand.u32 %s36, 1
        %s378 = scalar_lea.sflag [#allocation3], %s377
        %s379 = sand.u32 %s36, 1
        %s380 = smul.addr %s379, 224
        %s381 = scalar_lea.vmem [#allocation2], %s380
        %p382 = pneg %p49
        %p383 = pneg %p46
        %p384 = pneg %p70
        %p385 = pneg %p67
        %p386 = pneg %p91
        %p387 = pneg %p88
        %p388 = pneg %p112
        %p389 = pneg %p109
        %p390 = pneg %p133
        %p391 = pneg %p130
        %p392 = pneg %p154
        %p393 = pneg %p151
        %p394 = pneg %p175
        %p395 = pneg %p172
        %p396 = pneg %p196
        %p397 = pneg %p193
        %p398 = pneg %p217
        %p399 = pneg %p214
        %p400 = pneg %p243
        %p401 = pneg %p240
        %s402 = sand.u32 %s230, 1
        %s403 = scalar_lea.sflag [#allocation4], %s402
        %s404 = sand.u32 %s230, 1
        %s405 = smul.addr %s404, 8
        %s406 = scalar_lea.vmem [#allocation11], %s405
        %v408 = vld [vmem:[%s356] sm:$0xff]
        %v409 = vld [vmem:[%s356 + $0x8] sm:$0xff]
        %v410 = vld [vmem:[%s356 + $0x10] sm:$0xff]
        %v411 = vld [vmem:[%s356 + $0x18] sm:$0xff]
        %v412 = vld [vmem:[%s356 + $0x20] sm:$0xff]
        %v413 = vld [vmem:[%s356 + $0x28] sm:$0xff]
        %v414 = vld [vmem:[%s356 + $0x30] sm:$0xff]
        %v415 = vld [vmem:[%s356 + $0x38] sm:$0xff]
        %v416 = vld [vmem:[%s356 + $0x40] sm:$0xff]
        %v417 = vld [vmem:[%s356 + $0x48] sm:$0xff]
        %v418 = vld [vmem:[%s356 + $0x50] sm:$0xff]
        %v419 = vld [vmem:[%s356 + $0x58] sm:$0xff]
        %v420 = vld [vmem:[%s356 + $0x60] sm:$0xff]
        %v421 = vld [vmem:[%s356 + $0x68] sm:$0xff]
        %v422 = vld [vmem:[%s356 + $0x70] sm:$0xff]
        %v423 = vld [vmem:[%s356 + $0x78] sm:$0xff]
        %v424 = vld [vmem:[%s356 + $0x80] sm:$0xff]
        %v425 = vld [vmem:[%s356 + $0x88] sm:$0xff]
        %v426 = vld [vmem:[%s356 + $0x90] sm:$0xff]
        %v427 = vld [vmem:[%s356 + $0x98] sm:$0xff]
        %v428 = vld [vmem:[%s356 + $0xa0] sm:$0xff]
        %v429 = vld [vmem:[%s356 + $0xa8] sm:$0xff]
        %v430 = vld [vmem:[%s356 + $0xb0] sm:$0xff]
        %v431 = vld [vmem:[%s356 + $0xb8] sm:$0xff]
        %v432 = vld [vmem:[%s356 + $0xc0] sm:$0xff]
        %v433 = vld [vmem:[%s356 + $0xc8] sm:$0xff]
        %v434 = vld [vmem:[%s356 + $0xd0] sm:$0xff]
        %v435 = vld [vmem:[%s356 + $0xd8] sm:$0xff]
        %v436 = vpack.c.bf16 %v408, %v408
        %v437 = vpack.c.bf16 %v409, %v409
        %v438 = vpack.c.bf16 %v410, %v410
        %v439 = vpack.c.bf16 %v411, %v411
        %v440 = vpack.c.bf16 %v412, %v412
        %v441 = vpack.c.bf16 %v413, %v413
        %v442 = vpack.c.bf16 %v414, %v414
        %v443 = vpack.c.bf16 %v415, %v415
        %v444 = vpack.c.bf16 %v416, %v416
        %v445 = vpack.c.bf16 %v417, %v417
        %v446 = vpack.c.bf16 %v418, %v418
        %v447 = vpack.c.bf16 %v419, %v419
        %v448 = vpack.c.bf16 %v420, %v420
        %v449 = vpack.c.bf16 %v421, %v421
        %v450 = vpack.c.bf16 %v422, %v422
        %v451 = vpack.c.bf16 %v423, %v423
        %v452 = vpack.c.bf16 %v424, %v424
        %v453 = vpack.c.bf16 %v425, %v425
        %v454 = vpack.c.bf16 %v426, %v426
        %v455 = vpack.c.bf16 %v427, %v427
        %v456 = vpack.c.bf16 %v428, %v428
        %v457 = vpack.c.bf16 %v429, %v429
        %v458 = vpack.c.bf16 %v430, %v430
        %v459 = vpack.c.bf16 %v431, %v431
        %v460 = vpack.c.bf16 %v432, %v432
        %v461 = vpack.c.bf16 %v433, %v433
        %v462 = vpack.c.bf16 %v434, %v434
        %v463 = vpack.c.bf16 %v435, %v435
        %v464 = vld [vmem:[#allocation5] sm:$0xf]
        %v465 = vld [vmem:[#allocation5 + $0x4] sm:$0xf]
        %v466 = vld [vmem:[#allocation5 + $0x8] sm:$0xf]
        %v467 = vld [vmem:[#allocation5 + $0xc] sm:$0xf]
        %v468 = vld [vmem:[#allocation5 + $0x10] sm:$0xf]
        %v469 = vld [vmem:[#allocation5 + $0x14] sm:$0xf]
        %v470 = vld [vmem:[#allocation5 + $0x18] sm:$0xf]
        %v471 = vld [vmem:[#allocation5 + $0x1c] sm:$0xf]
        %v472 = vld [vmem:[#allocation5 + $0x20] sm:$0xf]
        %v473 = vld [vmem:[#allocation5 + $0x24] sm:$0xf]
        %v474 = vld [vmem:[#allocation5 + $0x28] sm:$0xf]
        %v475 = vld [vmem:[#allocation5 + $0x2c] sm:$0xf]
        %v476 = vld [vmem:[#allocation5 + $0x30] sm:$0xf]
        %v477 = vld [vmem:[#allocation5 + $0x34] sm:$0xf]
        %v478 = vld [vmem:[#allocation5 + $0x38] sm:$0xf]
        %v479 = vld [vmem:[#allocation5 + $0x3c] sm:$0xf]
        %v480 = vld [vmem:[#allocation5 + $0x40] sm:$0xf]
        %v481 = vld [vmem:[#allocation5 + $0x44] sm:$0xf]
        %v482 = vld [vmem:[#allocation5 + $0x48] sm:$0xf]
        %v483 = vld [vmem:[#allocation5 + $0x4c] sm:$0xf]
        %v484 = vld [vmem:[#allocation5 + $0x50] sm:$0xf]
        %v485 = vld [vmem:[#allocation5 + $0x54] sm:$0xf]
        %v486 = vld [vmem:[#allocation5 + $0x58] sm:$0xf]
        %v487 = vld [vmem:[#allocation5 + $0x5c] sm:$0xf]
        %v488 = vld [vmem:[#allocation5 + $0x60] sm:$0xf]
        %v489 = vld [vmem:[#allocation5 + $0x64] sm:$0xf]
        %v490 = vld [vmem:[#allocation5 + $0x68] sm:$0xf]
        %v491 = vld [vmem:[#allocation5 + $0x6c] sm:$0xf]
        %v492 = vld [vmem:[#allocation5 + $0x70] sm:$0xf]
        %v493 = vld [vmem:[#allocation5 + $0x74] sm:$0xf]
        %v494 = vld [vmem:[#allocation5 + $0x78] sm:$0xf]
        %v495 = vld [vmem:[#allocation5 + $0x7c] sm:$0xf]
        %v496 = vld [vmem:[#allocation5 + $0x80] sm:$0xf]
        %v497 = vld [vmem:[#allocation5 + $0x84] sm:$0xf]
        %v498 = vld [vmem:[#allocation5 + $0x88] sm:$0xf]
        %v499 = vld [vmem:[#allocation5 + $0x8c] sm:$0xf]
        %v500 = vld [vmem:[#allocation5 + $0x90] sm:$0xf]
        %v501 = vld [vmem:[#allocation5 + $0x94] sm:$0xf]
        %v502 = vld [vmem:[#allocation5 + $0x98] sm:$0xf]
        %v503 = vld [vmem:[#allocation5 + $0x9c] sm:$0xf]
        %v504 = vld [vmem:[#allocation5 + $0xa0] sm:$0xf]
        %v505 = vld [vmem:[#allocation5 + $0xa4] sm:$0xf]
        %v506 = vld [vmem:[#allocation5 + $0xa8] sm:$0xf]
        %v507 = vld [vmem:[#allocation5 + $0xac] sm:$0xf]
        %v508 = vld [vmem:[#allocation5 + $0xb0] sm:$0xf]
        %v509 = vld [vmem:[#allocation5 + $0xb4] sm:$0xf]
        %v510 = vld [vmem:[#allocation5 + $0xb8] sm:$0xf]
        %v511 = vld [vmem:[#allocation5 + $0xbc] sm:$0xf]
        %v512 = vld [vmem:[#allocation5 + $0xc0] sm:$0xf]
        %v513 = vld [vmem:[#allocation5 + $0xc4] sm:$0xf]
        %v514 = vld [vmem:[#allocation5 + $0xc8] sm:$0xf]
        %v515 = vld [vmem:[#allocation5 + $0xcc] sm:$0xf]
        %v516 = vld [vmem:[#allocation5 + $0xd0] sm:$0xf]
        %v517 = vld [vmem:[#allocation5 + $0xd4] sm:$0xf]
        %v518 = vld [vmem:[#allocation5 + $0xd8] sm:$0xf]
        %v519 = vld [vmem:[#allocation5 + $0xdc] sm:$0xf]
        %v520 = vld [vmem:[#allocation5 + $0xe0] sm:$0xf]
        %v521 = vld [vmem:[#allocation5 + $0xe4] sm:$0xf]
        %v522 = vld [vmem:[#allocation5 + $0xe8] sm:$0xf]
        %v523 = vld [vmem:[#allocation5 + $0xec] sm:$0xf]
        %v524 = vld [vmem:[#allocation5 + $0xf0] sm:$0xf]
        %v525 = vld [vmem:[#allocation5 + $0xf4] sm:$0xf]
        %v526 = vld [vmem:[#allocation5 + $0xf8] sm:$0xf]
        %v527 = vld [vmem:[#allocation5 + $0xfc] sm:$0xf]
        %v528 = vld [vmem:[#allocation5 + $0x100] sm:$0xf]
        %v529 = vld [vmem:[#allocation5 + $0x104] sm:$0xf]
        %v530 = vld [vmem:[#allocation5 + $0x108] sm:$0xf]
        %v531 = vld [vmem:[#allocation5 + $0x10c] sm:$0xf]
        %v532 = vld [vmem:[#allocation5 + $0x110] sm:$0xf]
        %v533 = vld [vmem:[#allocation5 + $0x114] sm:$0xf]
        %v534 = vld [vmem:[#allocation5 + $0x118] sm:$0xf]
        %v535 = vld [vmem:[#allocation5 + $0x11c] sm:$0xf]
        %v536 = vld [vmem:[#allocation5 + $0x120] sm:$0xf]
        %v537 = vld [vmem:[#allocation5 + $0x124] sm:$0xf]
        %v538 = vld [vmem:[#allocation5 + $0x128] sm:$0xf]
        %v539 = vld [vmem:[#allocation5 + $0x12c] sm:$0xf]
        %v540 = vld [vmem:[#allocation5 + $0x130] sm:$0xf]
        %v541 = vld [vmem:[#allocation5 + $0x134] sm:$0xf]
        %v542 = vld [vmem:[#allocation5 + $0x138] sm:$0xf]
        %v543 = vld [vmem:[#allocation5 + $0x13c] sm:$0xf]
        %v544 = vld [vmem:[#allocation5 + $0x140] sm:$0xf]
        %v545 = vld [vmem:[#allocation5 + $0x144] sm:$0xf]
        %v546 = vld [vmem:[#allocation5 + $0x148] sm:$0xf]
        %v547 = vld [vmem:[#allocation5 + $0x14c] sm:$0xf]
        %v548 = vld [vmem:[#allocation5 + $0x150] sm:$0xf]
        %v549 = vld [vmem:[#allocation5 + $0x154] sm:$0xf]
        %v550 = vld [vmem:[#allocation5 + $0x158] sm:$0xf]
        %v551 = vld [vmem:[#allocation5 + $0x15c] sm:$0xf]
        %v552 = vld [vmem:[#allocation5 + $0x160] sm:$0xf]
        %v553 = vld [vmem:[#allocation5 + $0x164] sm:$0xf]
        %v554 = vld [vmem:[#allocation5 + $0x168] sm:$0xf]
        %v555 = vld [vmem:[#allocation5 + $0x16c] sm:$0xf]
        %v556 = vld [vmem:[#allocation5 + $0x170] sm:$0xf]
        %v557 = vld [vmem:[#allocation5 + $0x174] sm:$0xf]
        %v558 = vld [vmem:[#allocation5 + $0x178] sm:$0xf]
        %v559 = vld [vmem:[#allocation5 + $0x17c] sm:$0xf]
        %v560 = vld [vmem:[#allocation5 + $0x180] sm:$0xf]
        %v561 = vld [vmem:[#allocation5 + $0x184] sm:$0xf]
        %v562 = vld [vmem:[#allocation5 + $0x188] sm:$0xf]
        %v563 = vld [vmem:[#allocation5 + $0x18c] sm:$0xf]
        %v564 = vld [vmem:[#allocation5 + $0x190] sm:$0xf]
        %v565 = vld [vmem:[#allocation5 + $0x194] sm:$0xf]
        %v566 = vld [vmem:[#allocation5 + $0x198] sm:$0xf]
        %v567 = vld [vmem:[#allocation5 + $0x19c] sm:$0xf]
        %v568 = vld [vmem:[#allocation5 + $0x1a0] sm:$0xf]
        %v569 = vld [vmem:[#allocation5 + $0x1a4] sm:$0xf]
        %v570 = vld [vmem:[#allocation5 + $0x1a8] sm:$0xf]
        %v571 = vld [vmem:[#allocation5 + $0x1ac] sm:$0xf]
        %v572 = vld [vmem:[#allocation5 + $0x1b0] sm:$0xf]
        %v573 = vld [vmem:[#allocation5 + $0x1b4] sm:$0xf]
        %v574 = vld [vmem:[#allocation5 + $0x1b8] sm:$0xf]
        %v575 = vld [vmem:[#allocation5 + $0x1bc] sm:$0xf]
        %v576 = vld [vmem:[#allocation5 + $0x1c0] sm:$0xf]
        %v577 = vld [vmem:[#allocation5 + $0x1c4] sm:$0xf]
        %v578 = vld [vmem:[#allocation5 + $0x1c8] sm:$0xf]
        %v579 = vld [vmem:[#allocation5 + $0x1cc] sm:$0xf]
        %v580 = vld [vmem:[#allocation5 + $0x1d0] sm:$0xf]
        %v581 = vld [vmem:[#allocation5 + $0x1d4] sm:$0xf]
        %v582 = vld [vmem:[#allocation5 + $0x1d8] sm:$0xf]
        %v583 = vld [vmem:[#allocation5 + $0x1dc] sm:$0xf]
        %v584 = vld [vmem:[#allocation5 + $0x1e0] sm:$0xf]
        %v585 = vld [vmem:[#allocation5 + $0x1e4] sm:$0xf]
        %v586 = vld [vmem:[#allocation5 + $0x1e8] sm:$0xf]
        %v587 = vld [vmem:[#allocation5 + $0x1ec] sm:$0xf]
        %v588 = vld [vmem:[#allocation5 + $0x1f0] sm:$0xf]
        %v589 = vld [vmem:[#allocation5 + $0x1f4] sm:$0xf]
        %v590 = vld [vmem:[#allocation5 + $0x1f8] sm:$0xf]
        %v591 = vld [vmem:[#allocation5 + $0x1fc] sm:$0xf]
        %v592 = vld [vmem:[#allocation5 + $0x200] sm:$0xf]
        %v593 = vld [vmem:[#allocation5 + $0x204] sm:$0xf]
        %v594 = vld [vmem:[#allocation5 + $0x208] sm:$0xf]
        %v595 = vld [vmem:[#allocation5 + $0x20c] sm:$0xf]
        %v596 = vld [vmem:[#allocation5 + $0x210] sm:$0xf]
        %v597 = vld [vmem:[#allocation5 + $0x214] sm:$0xf]
        %v598 = vld [vmem:[#allocation5 + $0x218] sm:$0xf]
        %v599 = vld [vmem:[#allocation5 + $0x21c] sm:$0xf]
        %v600 = vld [vmem:[#allocation5 + $0x220] sm:$0xf]
        %v601 = vld [vmem:[#allocation5 + $0x224] sm:$0xf]
        %v602 = vld [vmem:[#allocation5 + $0x228] sm:$0xf]
        %v603 = vld [vmem:[#allocation5 + $0x22c] sm:$0xf]
        %v604 = vld [vmem:[#allocation5 + $0x230] sm:$0xf]
        %v605 = vld [vmem:[#allocation5 + $0x234] sm:$0xf]
        %v606 = vld [vmem:[#allocation5 + $0x238] sm:$0xf]
        %v607 = vld [vmem:[#allocation5 + $0x23c] sm:$0xf]
        %v608 = vld [vmem:[#allocation5 + $0x240] sm:$0xf]
        %v609 = vld [vmem:[#allocation5 + $0x244] sm:$0xf]
        %v610 = vld [vmem:[#allocation5 + $0x248] sm:$0xf]
        %v611 = vld [vmem:[#allocation5 + $0x24c] sm:$0xf]
        %v612 = vld [vmem:[#allocation5 + $0x250] sm:$0xf]
        %v613 = vld [vmem:[#allocation5 + $0x254] sm:$0xf]
        %v614 = vld [vmem:[#allocation5 + $0x258] sm:$0xf]
        %v615 = vld [vmem:[#allocation5 + $0x25c] sm:$0xf]
        %v616 = vld [vmem:[#allocation5 + $0x260] sm:$0xf]
        %v617 = vld [vmem:[#allocation5 + $0x264] sm:$0xf]
        %v618 = vld [vmem:[#allocation5 + $0x268] sm:$0xf]
        %v619 = vld [vmem:[#allocation5 + $0x26c] sm:$0xf]
        %v620 = vld [vmem:[#allocation5 + $0x270] sm:$0xf]
        %v621 = vld [vmem:[#allocation5 + $0x274] sm:$0xf]
        %v622 = vld [vmem:[#allocation5 + $0x278] sm:$0xf]
        %v623 = vld [vmem:[#allocation5 + $0x27c] sm:$0xf]
        %v624 = vld [vmem:[#allocation5 + $0x280] sm:$0xf]
        %v625 = vld [vmem:[#allocation5 + $0x284] sm:$0xf]
        %v626 = vld [vmem:[#allocation5 + $0x288] sm:$0xf]
        %v627 = vld [vmem:[#allocation5 + $0x28c] sm:$0xf]
        %v628 = vld [vmem:[#allocation5 + $0x290] sm:$0xf]
        %v629 = vld [vmem:[#allocation5 + $0x294] sm:$0xf]
        %v630 = vld [vmem:[#allocation5 + $0x298] sm:$0xf]
        %v631 = vld [vmem:[#allocation5 + $0x29c] sm:$0xf]
        %v632 = vld [vmem:[#allocation5 + $0x2a0] sm:$0xf]
        %v633 = vld [vmem:[#allocation5 + $0x2a4] sm:$0xf]
        %v634 = vld [vmem:[#allocation5 + $0x2a8] sm:$0xf]
        %v635 = vld [vmem:[#allocation5 + $0x2ac] sm:$0xf]
        %v636 = vld [vmem:[#allocation5 + $0x2b0] sm:$0xf]
        %v637 = vld [vmem:[#allocation5 + $0x2b4] sm:$0xf]
        %v638 = vld [vmem:[#allocation5 + $0x2b8] sm:$0xf]
        %v639 = vld [vmem:[#allocation5 + $0x2bc] sm:$0xf]
        %v640 = vld [vmem:[#allocation5 + $0x2c0] sm:$0xf]
        %v641 = vld [vmem:[#allocation5 + $0x2c4] sm:$0xf]
        %v642 = vld [vmem:[#allocation5 + $0x2c8] sm:$0xf]
        %v643 = vld [vmem:[#allocation5 + $0x2cc] sm:$0xf]
        %v644 = vld [vmem:[#allocation5 + $0x2d0] sm:$0xf]
        %v645 = vld [vmem:[#allocation5 + $0x2d4] sm:$0xf]
        %v646 = vld [vmem:[#allocation5 + $0x2d8] sm:$0xf]
        %v647 = vld [vmem:[#allocation5 + $0x2dc] sm:$0xf]
        %v648 = vld [vmem:[#allocation5 + $0x2e0] sm:$0xf]
        %v649 = vld [vmem:[#allocation5 + $0x2e4] sm:$0xf]
        %v650 = vld [vmem:[#allocation5 + $0x2e8] sm:$0xf]
        %v651 = vld [vmem:[#allocation5 + $0x2ec] sm:$0xf]
        %v652 = vld [vmem:[#allocation5 + $0x2f0] sm:$0xf]
        %v653 = vld [vmem:[#allocation5 + $0x2f4] sm:$0xf]
        %v654 = vld [vmem:[#allocation5 + $0x2f8] sm:$0xf]
        %v655 = vld [vmem:[#allocation5 + $0x2fc] sm:$0xf]
        %v656 = vld [vmem:[#allocation5 + $0x300] sm:$0xf]
        %v657 = vld [vmem:[#allocation5 + $0x304] sm:$0xf]
        %v658 = vld [vmem:[#allocation5 + $0x308] sm:$0xf]
        %v659 = vld [vmem:[#allocation5 + $0x30c] sm:$0xf]
        %v660 = vld [vmem:[#allocation5 + $0x310] sm:$0xf]
        %v661 = vld [vmem:[#allocation5 + $0x314] sm:$0xf]
        %v662 = vld [vmem:[#allocation5 + $0x318] sm:$0xf]
        %v663 = vld [vmem:[#allocation5 + $0x31c] sm:$0xf]
        %v664 = vld [vmem:[#allocation5 + $0x320] sm:$0xf]
        %v665 = vld [vmem:[#allocation5 + $0x324] sm:$0xf]
        %v666 = vld [vmem:[#allocation5 + $0x328] sm:$0xf]
        %v667 = vld [vmem:[#allocation5 + $0x32c] sm:$0xf]
        %v668 = vld [vmem:[#allocation5 + $0x330] sm:$0xf]
        %v669 = vld [vmem:[#allocation5 + $0x334] sm:$0xf]
        %v670 = vld [vmem:[#allocation5 + $0x338] sm:$0xf]
        %v671 = vld [vmem:[#allocation5 + $0x33c] sm:$0xf]
        %v672 = vld [vmem:[#allocation5 + $0x340] sm:$0xf]
        %v673 = vld [vmem:[#allocation5 + $0x344] sm:$0xf]
        %v674 = vld [vmem:[#allocation5 + $0x348] sm:$0xf]
        %v675 = vld [vmem:[#allocation5 + $0x34c] sm:$0xf]
        %v676 = vld [vmem:[#allocation5 + $0x350] sm:$0xf]
        %v677 = vld [vmem:[#allocation5 + $0x354] sm:$0xf]
        %v678 = vld [vmem:[#allocation5 + $0x358] sm:$0xf]
        %v679 = vld [vmem:[#allocation5 + $0x35c] sm:$0xf]
        %v680 = vld [vmem:[#allocation5 + $0x360] sm:$0xf]
        %v681 = vld [vmem:[#allocation5 + $0x364] sm:$0xf]
        %v682 = vld [vmem:[#allocation5 + $0x368] sm:$0xf]
        %v683 = vld [vmem:[#allocation5 + $0x36c] sm:$0xf]
        %v684 = vld [vmem:[#allocation5 + $0x370] sm:$0xf]
        %v685 = vld [vmem:[#allocation5 + $0x374] sm:$0xf]
        %v686 = vld [vmem:[#allocation5 + $0x378] sm:$0xf]
        %v687 = vld [vmem:[#allocation5 + $0x37c] sm:$0xf]
        %v688 = vld [vmem:[#allocation5 + $0x380] sm:$0xf]
        %v689 = vld [vmem:[#allocation5 + $0x384] sm:$0xf]
        %v690 = vld [vmem:[#allocation5 + $0x388] sm:$0xf]
        %v691 = vld [vmem:[#allocation5 + $0x38c] sm:$0xf]
        %v692 = vld [vmem:[#allocation5 + $0x390] sm:$0xf]
        %v693 = vld [vmem:[#allocation5 + $0x394] sm:$0xf]
        %v694 = vld [vmem:[#allocation5 + $0x398] sm:$0xf]
        %v695 = vld [vmem:[#allocation5 + $0x39c] sm:$0xf]
        %v696 = vld [vmem:[#allocation5 + $0x3a0] sm:$0xf]
        %v697 = vld [vmem:[#allocation5 + $0x3a4] sm:$0xf]
        %v698 = vld [vmem:[#allocation5 + $0x3a8] sm:$0xf]
        %v699 = vld [vmem:[#allocation5 + $0x3ac] sm:$0xf]
        %v700 = vld [vmem:[#allocation5 + $0x3b0] sm:$0xf]
        %v701 = vld [vmem:[#allocation5 + $0x3b4] sm:$0xf]
        %v702 = vld [vmem:[#allocation5 + $0x3b8] sm:$0xf]
        %v703 = vld [vmem:[#allocation5 + $0x3bc] sm:$0xf]
        %v704 = vld [vmem:[#allocation5 + $0x3c0] sm:$0xf]
        %v705 = vld [vmem:[#allocation5 + $0x3c4] sm:$0xf]
        %v706 = vld [vmem:[#allocation5 + $0x3c8] sm:$0xf]
        %v707 = vld [vmem:[#allocation5 + $0x3cc] sm:$0xf]
        %v708 = vld [vmem:[#allocation5 + $0x3d0] sm:$0xf]
        %v709 = vld [vmem:[#allocation5 + $0x3d4] sm:$0xf]
        %v710 = vld [vmem:[#allocation5 + $0x3d8] sm:$0xf]
        %v711 = vld [vmem:[#allocation5 + $0x3dc] sm:$0xf]
        %v712 = vld [vmem:[#allocation5 + $0x3e0] sm:$0xf]
        %v713 = vld [vmem:[#allocation5 + $0x3e4] sm:$0xf]
        %v714 = vld [vmem:[#allocation5 + $0x3e8] sm:$0xf]
        %v715 = vld [vmem:[#allocation5 + $0x3ec] sm:$0xf]
        %v716 = vld [vmem:[#allocation5 + $0x3f0] sm:$0xf]
        %v717 = vld [vmem:[#allocation5 + $0x3f4] sm:$0xf]
        %v718 = vld [vmem:[#allocation5 + $0x3f8] sm:$0xf]
        %v719 = vld [vmem:[#allocation5 + $0x3fc] sm:$0xf]
        %v720 = vld [vmem:[#allocation5 + $0x400] sm:$0xf]
        %v721 = vld [vmem:[#allocation5 + $0x404] sm:$0xf]
        %v722 = vld [vmem:[#allocation5 + $0x408] sm:$0xf]
        %v723 = vld [vmem:[#allocation5 + $0x40c] sm:$0xf]
        %v724 = vld [vmem:[#allocation5 + $0x410] sm:$0xf]
        %v725 = vld [vmem:[#allocation5 + $0x414] sm:$0xf]
        %v726 = vld [vmem:[#allocation5 + $0x418] sm:$0xf]
        %v727 = vld [vmem:[#allocation5 + $0x41c] sm:$0xf]
        %v728 = vld [vmem:[#allocation5 + $0x420] sm:$0xf]
        %v729 = vld [vmem:[#allocation5 + $0x424] sm:$0xf]
        %v730 = vld [vmem:[#allocation5 + $0x428] sm:$0xf]
        %v731 = vld [vmem:[#allocation5 + $0x42c] sm:$0xf]
        %v732 = vld [vmem:[#allocation5 + $0x430] sm:$0xf]
        %v733 = vld [vmem:[#allocation5 + $0x434] sm:$0xf]
        %v734 = vld [vmem:[#allocation5 + $0x438] sm:$0xf]
        %v735 = vld [vmem:[#allocation5 + $0x43c] sm:$0xf]
        %v736 = vld [vmem:[#allocation5 + $0x440] sm:$0xf]
        %v737 = vld [vmem:[#allocation5 + $0x444] sm:$0xf]
        %v738 = vld [vmem:[#allocation5 + $0x448] sm:$0xf]
        %v739 = vld [vmem:[#allocation5 + $0x44c] sm:$0xf]
        %v740 = vld [vmem:[#allocation5 + $0x450] sm:$0xf]
        %v741 = vld [vmem:[#allocation5 + $0x454] sm:$0xf]
        %v742 = vld [vmem:[#allocation5 + $0x458] sm:$0xf]
        %v743 = vld [vmem:[#allocation5 + $0x45c] sm:$0xf]
        %v744 = vld [vmem:[#allocation5 + $0x460] sm:$0xf]
        %v745 = vld [vmem:[#allocation5 + $0x464] sm:$0xf]
        %v746 = vld [vmem:[#allocation5 + $0x468] sm:$0xf]
        %v747 = vld [vmem:[#allocation5 + $0x46c] sm:$0xf]
        %v748 = vld [vmem:[#allocation5 + $0x470] sm:$0xf]
        %v749 = vld [vmem:[#allocation5 + $0x474] sm:$0xf]
        %v750 = vld [vmem:[#allocation5 + $0x478] sm:$0xf]
        %v751 = vld [vmem:[#allocation5 + $0x47c] sm:$0xf]
        %v752 = vld [vmem:[#allocation5 + $0x480] sm:$0xf]
        %v753 = vld [vmem:[#allocation5 + $0x484] sm:$0xf]
        %v754 = vld [vmem:[#allocation5 + $0x488] sm:$0xf]
        %v755 = vld [vmem:[#allocation5 + $0x48c] sm:$0xf]
        %v756 = vld [vmem:[#allocation5 + $0x490] sm:$0xf]
        %v757 = vld [vmem:[#allocation5 + $0x494] sm:$0xf]
        %v758 = vld [vmem:[#allocation5 + $0x498] sm:$0xf]
        %v759 = vld [vmem:[#allocation5 + $0x49c] sm:$0xf]
        %v760 = vld [vmem:[#allocation5 + $0x4a0] sm:$0xf]
        %v761 = vld [vmem:[#allocation5 + $0x4a4] sm:$0xf]
        %v762 = vld [vmem:[#allocation5 + $0x4a8] sm:$0xf]
        %v763 = vld [vmem:[#allocation5 + $0x4ac] sm:$0xf]
        %v764 = vld [vmem:[#allocation5 + $0x4b0] sm:$0xf]
        %v765 = vld [vmem:[#allocation5 + $0x4b4] sm:$0xf]
        %v766 = vld [vmem:[#allocation5 + $0x4b8] sm:$0xf]
        %v767 = vld [vmem:[#allocation5 + $0x4bc] sm:$0xf]
        %v768 = vld [vmem:[#allocation5 + $0x4c0] sm:$0xf]
        %v769 = vld [vmem:[#allocation5 + $0x4c4] sm:$0xf]
        %v770 = vld [vmem:[#allocation5 + $0x4c8] sm:$0xf]
        %v771 = vld [vmem:[#allocation5 + $0x4cc] sm:$0xf]
        %v772 = vld [vmem:[#allocation5 + $0x4d0] sm:$0xf]
        %v773 = vld [vmem:[#allocation5 + $0x4d4] sm:$0xf]
        %v774 = vld [vmem:[#allocation5 + $0x4d8] sm:$0xf]
        %v775 = vld [vmem:[#allocation5 + $0x4dc] sm:$0xf]
        %v776 = vld [vmem:[#allocation5 + $0x4e0] sm:$0xf]
        %v777 = vld [vmem:[#allocation5 + $0x4e4] sm:$0xf]
        %v778 = vld [vmem:[#allocation5 + $0x4e8] sm:$0xf]
        %v779 = vld [vmem:[#allocation5 + $0x4ec] sm:$0xf]
        %v780 = vld [vmem:[#allocation5 + $0x4f0] sm:$0xf]
        %v781 = vld [vmem:[#allocation5 + $0x4f4] sm:$0xf]
        %v782 = vld [vmem:[#allocation5 + $0x4f8] sm:$0xf]
        %v783 = vld [vmem:[#allocation5 + $0x4fc] sm:$0xf]
        %v784 = vld [vmem:[#allocation5 + $0x500] sm:$0xf]
        %v785 = vld [vmem:[#allocation5 + $0x504] sm:$0xf]
        %v786 = vld [vmem:[#allocation5 + $0x508] sm:$0xf]
        %v787 = vld [vmem:[#allocation5 + $0x50c] sm:$0xf]
        %v788 = vld [vmem:[#allocation5 + $0x510] sm:$0xf]
        %v789 = vld [vmem:[#allocation5 + $0x514] sm:$0xf]
        %v790 = vld [vmem:[#allocation5 + $0x518] sm:$0xf]
        %v791 = vld [vmem:[#allocation5 + $0x51c] sm:$0xf]
        %v792 = vld [vmem:[#allocation5 + $0x520] sm:$0xf]
        %v793 = vld [vmem:[#allocation5 + $0x524] sm:$0xf]
        %v794 = vld [vmem:[#allocation5 + $0x528] sm:$0xf]
        %v795 = vld [vmem:[#allocation5 + $0x52c] sm:$0xf]
        %v796 = vld [vmem:[#allocation5 + $0x530] sm:$0xf]
        %v797 = vld [vmem:[#allocation5 + $0x534] sm:$0xf]
        %v798 = vld [vmem:[#allocation5 + $0x538] sm:$0xf]
        %v799 = vld [vmem:[#allocation5 + $0x53c] sm:$0xf]
        %v800 = vld [vmem:[#allocation5 + $0x540] sm:$0xf]
        %v801 = vld [vmem:[#allocation5 + $0x544] sm:$0xf]
        %v802 = vld [vmem:[#allocation5 + $0x548] sm:$0xf]
        %v803 = vld [vmem:[#allocation5 + $0x54c] sm:$0xf]
        %v804 = vld [vmem:[#allocation5 + $0x550] sm:$0xf]
        %v805 = vld [vmem:[#allocation5 + $0x554] sm:$0xf]
        %v806 = vld [vmem:[#allocation5 + $0x558] sm:$0xf]
        %v807 = vld [vmem:[#allocation5 + $0x55c] sm:$0xf]
        %v808 = vld [vmem:[#allocation5 + $0x560] sm:$0xf]
        %v809 = vld [vmem:[#allocation5 + $0x564] sm:$0xf]
        %v810 = vld [vmem:[#allocation5 + $0x568] sm:$0xf]
        %v811 = vld [vmem:[#allocation5 + $0x56c] sm:$0xf]
        %v812 = vld [vmem:[#allocation5 + $0x570] sm:$0xf]
        %v813 = vld [vmem:[#allocation5 + $0x574] sm:$0xf]
        %v814 = vld [vmem:[#allocation5 + $0x578] sm:$0xf]
        %v815 = vld [vmem:[#allocation5 + $0x57c] sm:$0xf]
        %v816 = vld [vmem:[#allocation5 + $0x580] sm:$0xf]
        %v817 = vld [vmem:[#allocation5 + $0x584] sm:$0xf]
        %v818 = vld [vmem:[#allocation5 + $0x588] sm:$0xf]
        %v819 = vld [vmem:[#allocation5 + $0x58c] sm:$0xf]
        %v820 = vld [vmem:[#allocation5 + $0x590] sm:$0xf]
        %v821 = vld [vmem:[#allocation5 + $0x594] sm:$0xf]
        %v822 = vld [vmem:[#allocation5 + $0x598] sm:$0xf]
        %v823 = vld [vmem:[#allocation5 + $0x59c] sm:$0xf]
        %v824 = vld [vmem:[#allocation5 + $0x5a0] sm:$0xf]
        %v825 = vld [vmem:[#allocation5 + $0x5a4] sm:$0xf]
        %v826 = vld [vmem:[#allocation5 + $0x5a8] sm:$0xf]
        %v827 = vld [vmem:[#allocation5 + $0x5ac] sm:$0xf]
        %v828 = vld [vmem:[#allocation5 + $0x5b0] sm:$0xf]
        %v829 = vld [vmem:[#allocation5 + $0x5b4] sm:$0xf]
        %v830 = vld [vmem:[#allocation5 + $0x5b8] sm:$0xf]
        %v831 = vld [vmem:[#allocation5 + $0x5bc] sm:$0xf]
        %v832 = vld [vmem:[#allocation5 + $0x5c0] sm:$0xf]
        %v833 = vld [vmem:[#allocation5 + $0x5c4] sm:$0xf]
        %v834 = vld [vmem:[#allocation5 + $0x5c8] sm:$0xf]
        %v835 = vld [vmem:[#allocation5 + $0x5cc] sm:$0xf]
        %v836 = vld [vmem:[#allocation5 + $0x5d0] sm:$0xf]
        %v837 = vld [vmem:[#allocation5 + $0x5d4] sm:$0xf]
        %v838 = vld [vmem:[#allocation5 + $0x5d8] sm:$0xf]
        %v839 = vld [vmem:[#allocation5 + $0x5dc] sm:$0xf]
        %v840 = vld [vmem:[#allocation5 + $0x5e0] sm:$0xf]
        %v841 = vld [vmem:[#allocation5 + $0x5e4] sm:$0xf]
        %v842 = vld [vmem:[#allocation5 + $0x5e8] sm:$0xf]
        %v843 = vld [vmem:[#allocation5 + $0x5ec] sm:$0xf]
        %v844 = vld [vmem:[#allocation5 + $0x5f0] sm:$0xf]
        %v845 = vld [vmem:[#allocation5 + $0x5f4] sm:$0xf]
        %v846 = vld [vmem:[#allocation5 + $0x5f8] sm:$0xf]
        %v847 = vld [vmem:[#allocation5 + $0x5fc] sm:$0xf]
        %v848 = vld [vmem:[#allocation5 + $0x600] sm:$0xf]
        %v849 = vld [vmem:[#allocation5 + $0x604] sm:$0xf]
        %v850 = vld [vmem:[#allocation5 + $0x608] sm:$0xf]
        %v851 = vld [vmem:[#allocation5 + $0x60c] sm:$0xf]
        %v852 = vld [vmem:[#allocation5 + $0x610] sm:$0xf]
        %v853 = vld [vmem:[#allocation5 + $0x614] sm:$0xf]
        %v854 = vld [vmem:[#allocation5 + $0x618] sm:$0xf]
        %v855 = vld [vmem:[#allocation5 + $0x61c] sm:$0xf]
        %v856 = vld [vmem:[#allocation5 + $0x620] sm:$0xf]
        %v857 = vld [vmem:[#allocation5 + $0x624] sm:$0xf]
        %v858 = vld [vmem:[#allocation5 + $0x628] sm:$0xf]
        %v859 = vld [vmem:[#allocation5 + $0x62c] sm:$0xf]
        %v860 = vld [vmem:[#allocation5 + $0x630] sm:$0xf]
        %v861 = vld [vmem:[#allocation5 + $0x634] sm:$0xf]
        %v862 = vld [vmem:[#allocation5 + $0x638] sm:$0xf]
        %v863 = vld [vmem:[#allocation5 + $0x63c] sm:$0xf]
        %v864 = vld [vmem:[#allocation5 + $0x640] sm:$0xf]
        %v865 = vld [vmem:[#allocation5 + $0x644] sm:$0xf]
        %v866 = vld [vmem:[#allocation5 + $0x648] sm:$0xf]
        %v867 = vld [vmem:[#allocation5 + $0x64c] sm:$0xf]
        %v868 = vld [vmem:[#allocation5 + $0x650] sm:$0xf]
        %v869 = vld [vmem:[#allocation5 + $0x654] sm:$0xf]
        %v870 = vld [vmem:[#allocation5 + $0x658] sm:$0xf]
        %v871 = vld [vmem:[#allocation5 + $0x65c] sm:$0xf]
        %v872 = vld [vmem:[#allocation5 + $0x660] sm:$0xf]
        %v873 = vld [vmem:[#allocation5 + $0x664] sm:$0xf]
        %v874 = vld [vmem:[#allocation5 + $0x668] sm:$0xf]
        %v875 = vld [vmem:[#allocation5 + $0x66c] sm:$0xf]
        %v876 = vld [vmem:[#allocation5 + $0x670] sm:$0xf]
        %v877 = vld [vmem:[#allocation5 + $0x674] sm:$0xf]
        %v878 = vld [vmem:[#allocation5 + $0x678] sm:$0xf]
        %v879 = vld [vmem:[#allocation5 + $0x67c] sm:$0xf]
        %v880 = vld [vmem:[#allocation5 + $0x680] sm:$0xf]
        %v881 = vld [vmem:[#allocation5 + $0x684] sm:$0xf]
        %v882 = vld [vmem:[#allocation5 + $0x688] sm:$0xf]
        %v883 = vld [vmem:[#allocation5 + $0x68c] sm:$0xf]
        %v884 = vld [vmem:[#allocation5 + $0x690] sm:$0xf]
        %v885 = vld [vmem:[#allocation5 + $0x694] sm:$0xf]
        %v886 = vld [vmem:[#allocation5 + $0x698] sm:$0xf]
        %v887 = vld [vmem:[#allocation5 + $0x69c] sm:$0xf]
        %v888 = vld [vmem:[#allocation5 + $0x6a0] sm:$0xf]
        %v889 = vld [vmem:[#allocation5 + $0x6a4] sm:$0xf]
        %v890 = vld [vmem:[#allocation5 + $0x6a8] sm:$0xf]
        %v891 = vld [vmem:[#allocation5 + $0x6ac] sm:$0xf]
        %v892 = vld [vmem:[#allocation5 + $0x6b0] sm:$0xf]
        %v893 = vld [vmem:[#allocation5 + $0x6b4] sm:$0xf]
        %v894 = vld [vmem:[#allocation5 + $0x6b8] sm:$0xf]
        %v895 = vld [vmem:[#allocation5 + $0x6bc] sm:$0xf]
        %v896 = vld [vmem:[#allocation5 + $0x6c0] sm:$0xf]
        %v897 = vld [vmem:[#allocation5 + $0x6c4] sm:$0x1]
        %v898 = vld [vmem:[%s2] sm:$0x1]
        %v900 = vlaneseq
        %v901 = vshrl.u32 %v900, 7
        %v902 = vsub.s32 0, %v901
        %v903 = vrot.slane %v898, %v902
        %v1339 = vunpack.c.l.b16 %v464
        %v1340 = vunpack.c.l.b16 %v465
        %v1341 = vunpack.c.l.b16 %v466
        %v1342 = vunpack.c.l.b16 %v467
        %v1343 = vunpack.c.l.b16 %v468
        %v1344 = vunpack.c.l.b16 %v469
        %v1345 = vunpack.c.l.b16 %v470
        %v1346 = vunpack.c.l.b16 %v471
        %v1347 = vunpack.c.l.b16 %v472
        %v1348 = vunpack.c.l.b16 %v473
        %v1349 = vunpack.c.l.b16 %v474
        %v1350 = vunpack.c.l.b16 %v475
        %v1351 = vunpack.c.l.b16 %v476
        %v1352 = vunpack.c.l.b16 %v477
        %v1353 = vunpack.c.l.b16 %v478
        %v1354 = vunpack.c.l.b16 %v479
        %v1355 = vunpack.c.l.b16 %v480
        %v1356 = vunpack.c.l.b16 %v481
        %v1357 = vunpack.c.l.b16 %v482
        %v1358 = vunpack.c.l.b16 %v483
        %v1359 = vunpack.c.l.b16 %v484
        %v1360 = vunpack.c.l.b16 %v485
        %v1361 = vunpack.c.l.b16 %v486
        %v1362 = vunpack.c.l.b16 %v487
        %v1363 = vunpack.c.l.b16 %v488
        %v1364 = vunpack.c.l.b16 %v489
        %v1365 = vunpack.c.l.b16 %v490
        %v1366 = vunpack.c.l.b16 %v491
        %v1367 = vunpack.c.l.b16 %v492
        %v1368 = vunpack.c.l.b16 %v493
        %v1369 = vunpack.c.l.b16 %v494
        %v1370 = vunpack.c.l.b16 %v495
        %v1371 = vunpack.c.l.b16 %v496
        %v1372 = vunpack.c.l.b16 %v497
        %v1373 = vunpack.c.l.b16 %v498
        %v1374 = vunpack.c.l.b16 %v499
        %v1375 = vunpack.c.l.b16 %v500
        %v1376 = vunpack.c.l.b16 %v501
        %v1377 = vunpack.c.l.b16 %v502
        %v1378 = vunpack.c.l.b16 %v503
        %v1379 = vunpack.c.l.b16 %v504
        %v1380 = vunpack.c.l.b16 %v505
        %v1381 = vunpack.c.l.b16 %v506
        %v1382 = vunpack.c.l.b16 %v507
        %v1383 = vunpack.c.l.b16 %v508
        %v1384 = vunpack.c.l.b16 %v509
        %v1385 = vunpack.c.l.b16 %v510
        %v1386 = vunpack.c.l.b16 %v511
        %v1387 = vunpack.c.l.b16 %v512
        %v1388 = vunpack.c.l.b16 %v513
        %v1389 = vunpack.c.l.b16 %v514
        %v1390 = vunpack.c.l.b16 %v515
        %v1391 = vunpack.c.l.b16 %v516
        %v1392 = vunpack.c.l.b16 %v517
        %v1393 = vunpack.c.l.b16 %v518
        %v1394 = vunpack.c.l.b16 %v519
        %v1395 = vunpack.c.l.b16 %v520
        %v1396 = vunpack.c.l.b16 %v521
        %v1397 = vunpack.c.l.b16 %v522
        %v1398 = vunpack.c.l.b16 %v523
        %v1399 = vunpack.c.l.b16 %v524
        %v1400 = vunpack.c.l.b16 %v525
        %v1401 = vunpack.c.l.b16 %v526
        %v1402 = vunpack.c.l.b16 %v527
        %v1403 = vunpack.c.l.b16 %v528
        %v1404 = vunpack.c.l.b16 %v529
        %v1405 = vunpack.c.l.b16 %v530
        %v1406 = vunpack.c.l.b16 %v531
        %v1407 = vunpack.c.l.b16 %v532
        %v1408 = vunpack.c.l.b16 %v533
        %v1409 = vunpack.c.l.b16 %v534
        %v1410 = vunpack.c.l.b16 %v535
        %v1411 = vunpack.c.l.b16 %v536
        %v1412 = vunpack.c.l.b16 %v537
        %v1413 = vunpack.c.l.b16 %v538
        %v1414 = vunpack.c.l.b16 %v539
        %v1415 = vunpack.c.l.b16 %v540
        %v1416 = vunpack.c.l.b16 %v541
        %v1417 = vunpack.c.l.b16 %v542
        %v1418 = vunpack.c.l.b16 %v543
        %v1419 = vunpack.c.l.b16 %v544
        %v1420 = vunpack.c.l.b16 %v545
        %v1421 = vunpack.c.l.b16 %v546
        %v1422 = vunpack.c.l.b16 %v547
        %v1423 = vunpack.c.l.b16 %v548
        %v1424 = vunpack.c.l.b16 %v549
        %v1425 = vunpack.c.l.b16 %v550
        %v1426 = vunpack.c.l.b16 %v551
        %v1427 = vunpack.c.l.b16 %v552
        %v1428 = vunpack.c.l.b16 %v553
        %v1429 = vunpack.c.l.b16 %v554
        %v1430 = vunpack.c.l.b16 %v555
        %v1431 = vunpack.c.l.b16 %v556
        %v1432 = vunpack.c.l.b16 %v557
        %v1433 = vunpack.c.l.b16 %v558
        %v1434 = vunpack.c.l.b16 %v559
        %v1435 = vunpack.c.l.b16 %v560
        %v1436 = vunpack.c.l.b16 %v561
        %v1437 = vunpack.c.l.b16 %v562
        %v1438 = vunpack.c.l.b16 %v563
        %v1439 = vunpack.c.l.b16 %v564
        %v1440 = vunpack.c.l.b16 %v565
        %v1441 = vunpack.c.l.b16 %v566
        %v1442 = vunpack.c.l.b16 %v567
        %v1443 = vunpack.c.l.b16 %v568
        %v1444 = vunpack.c.l.b16 %v569
        %v1445 = vunpack.c.l.b16 %v570
        %v1446 = vunpack.c.l.b16 %v571
        %v1447 = vunpack.c.l.b16 %v572
        %v1448 = vunpack.c.l.b16 %v573
        %v1449 = vunpack.c.l.b16 %v574
        %v1450 = vunpack.c.l.b16 %v575
        %v1451 = vunpack.c.l.b16 %v576
        %v1452 = vunpack.c.l.b16 %v577
        %v1453 = vunpack.c.l.b16 %v578
        %v1454 = vunpack.c.l.b16 %v579
        %v1455 = vunpack.c.l.b16 %v580
        %v1456 = vunpack.c.l.b16 %v581
        %v1457 = vunpack.c.l.b16 %v582
        %v1458 = vunpack.c.l.b16 %v583
        %v1459 = vunpack.c.l.b16 %v584
        %v1460 = vunpack.c.l.b16 %v585
        %v1461 = vunpack.c.l.b16 %v586
        %v1462 = vunpack.c.l.b16 %v587
        %v1463 = vunpack.c.l.b16 %v588
        %v1464 = vunpack.c.l.b16 %v589
        %v1465 = vunpack.c.l.b16 %v590
        %v1466 = vunpack.c.l.b16 %v591
        %v1467 = vunpack.c.l.b16 %v592
        %v1468 = vunpack.c.l.b16 %v593
        %v1469 = vunpack.c.l.b16 %v594
        %v1470 = vunpack.c.l.b16 %v595
        %v1471 = vunpack.c.l.b16 %v596
        %v1472 = vunpack.c.l.b16 %v597
        %v1473 = vunpack.c.l.b16 %v598
        %v1474 = vunpack.c.l.b16 %v599
        %v1475 = vunpack.c.l.b16 %v600
        %v1476 = vunpack.c.l.b16 %v601
        %v1477 = vunpack.c.l.b16 %v602
        %v1478 = vunpack.c.l.b16 %v603
        %v1479 = vunpack.c.l.b16 %v604
        %v1480 = vunpack.c.l.b16 %v605
        %v1481 = vunpack.c.l.b16 %v606
        %v1482 = vunpack.c.l.b16 %v607
        %v1483 = vunpack.c.l.b16 %v608
        %v1484 = vunpack.c.l.b16 %v609
        %v1485 = vunpack.c.l.b16 %v610
        %v1486 = vunpack.c.l.b16 %v611
        %v1487 = vunpack.c.l.b16 %v612
        %v1488 = vunpack.c.l.b16 %v613
        %v1489 = vunpack.c.l.b16 %v614
        %v1490 = vunpack.c.l.b16 %v615
        %v1491 = vunpack.c.l.b16 %v616
        %v1492 = vunpack.c.l.b16 %v617
        %v1493 = vunpack.c.l.b16 %v618
        %v1494 = vunpack.c.l.b16 %v619
        %v1495 = vunpack.c.l.b16 %v620
        %v1496 = vunpack.c.l.b16 %v621
        %v1497 = vunpack.c.l.b16 %v622
        %v1498 = vunpack.c.l.b16 %v623
        %v1499 = vunpack.c.l.b16 %v624
        %v1500 = vunpack.c.l.b16 %v625
        %v1501 = vunpack.c.l.b16 %v626
        %v1502 = vunpack.c.l.b16 %v627
        %v1503 = vunpack.c.l.b16 %v628
        %v1504 = vunpack.c.l.b16 %v629
        %v1505 = vunpack.c.l.b16 %v630
        %v1506 = vunpack.c.l.b16 %v631
        %v1507 = vunpack.c.l.b16 %v632
        %v1508 = vunpack.c.l.b16 %v633
        %v1509 = vunpack.c.l.b16 %v634
        %v1510 = vunpack.c.l.b16 %v635
        %v1511 = vunpack.c.l.b16 %v636
        %v1512 = vunpack.c.l.b16 %v637
        %v1513 = vunpack.c.l.b16 %v638
        %v1514 = vunpack.c.l.b16 %v639
        %v1515 = vunpack.c.l.b16 %v640
        %v1516 = vunpack.c.l.b16 %v641
        %v1517 = vunpack.c.l.b16 %v642
        %v1518 = vunpack.c.l.b16 %v643
        %v1519 = vunpack.c.l.b16 %v644
        %v1520 = vunpack.c.l.b16 %v645
        %v1521 = vunpack.c.l.b16 %v646
        %v1522 = vunpack.c.l.b16 %v647
        %v1523 = vunpack.c.l.b16 %v648
        %v1524 = vunpack.c.l.b16 %v649
        %v1525 = vunpack.c.l.b16 %v650
        %v1526 = vunpack.c.l.b16 %v651
        %v1527 = vunpack.c.l.b16 %v652
        %v1528 = vunpack.c.l.b16 %v653
        %v1529 = vunpack.c.l.b16 %v654
        %v1530 = vunpack.c.l.b16 %v655
        %v1531 = vunpack.c.l.b16 %v656
        %v1532 = vunpack.c.l.b16 %v657
        %v1533 = vunpack.c.l.b16 %v658
        %v1534 = vunpack.c.l.b16 %v659
        %v1535 = vunpack.c.l.b16 %v660
        %v1536 = vunpack.c.l.b16 %v661
        %v1537 = vunpack.c.l.b16 %v662
        %v1538 = vunpack.c.l.b16 %v663
        %v1539 = vunpack.c.l.b16 %v664
        %v1540 = vunpack.c.l.b16 %v665
        %v1541 = vunpack.c.l.b16 %v666
        %v1542 = vunpack.c.l.b16 %v667
        %v1543 = vunpack.c.l.b16 %v668
        %v1544 = vunpack.c.l.b16 %v669
        %v1545 = vunpack.c.l.b16 %v670
        %v1546 = vunpack.c.l.b16 %v671
        %v1547 = vunpack.c.l.b16 %v672
        %v1548 = vunpack.c.l.b16 %v673
        %v1549 = vunpack.c.l.b16 %v674
        %v1550 = vunpack.c.l.b16 %v675
        %v1551 = vunpack.c.l.b16 %v676
        %v1552 = vunpack.c.l.b16 %v677
        %v1553 = vunpack.c.l.b16 %v678
        %v1554 = vunpack.c.l.b16 %v679
        %v1555 = vunpack.c.l.b16 %v680
        %v1556 = vunpack.c.l.b16 %v681
        %v1557 = vunpack.c.l.b16 %v682
        %v1558 = vunpack.c.l.b16 %v683
        %v1559 = vunpack.c.l.b16 %v684
        %v1560 = vunpack.c.l.b16 %v685
        %v1561 = vunpack.c.l.b16 %v686
        %v1562 = vunpack.c.l.b16 %v687
        %v1563 = vunpack.c.l.b16 %v688
        %v1564 = vunpack.c.l.b16 %v689
        %v1565 = vunpack.c.l.b16 %v690
        %v1566 = vunpack.c.l.b16 %v691
        %v1567 = vunpack.c.l.b16 %v692
        %v1568 = vunpack.c.l.b16 %v693
        %v1569 = vunpack.c.l.b16 %v694
        %v1570 = vunpack.c.l.b16 %v695
        %v1571 = vunpack.c.l.b16 %v696
        %v1572 = vunpack.c.l.b16 %v697
        %v1573 = vunpack.c.l.b16 %v698
        %v1574 = vunpack.c.l.b16 %v699
        %v1575 = vunpack.c.l.b16 %v700
        %v1576 = vunpack.c.l.b16 %v701
        %v1577 = vunpack.c.l.b16 %v702
        %v1578 = vunpack.c.l.b16 %v703
        %v1579 = vunpack.c.l.b16 %v704
        %v1580 = vunpack.c.l.b16 %v705
        %v1581 = vunpack.c.l.b16 %v706
        %v1582 = vunpack.c.l.b16 %v707
        %v1583 = vunpack.c.l.b16 %v708
        %v1584 = vunpack.c.l.b16 %v709
        %v1585 = vunpack.c.l.b16 %v710
        %v1586 = vunpack.c.l.b16 %v711
        %v1587 = vunpack.c.l.b16 %v712
        %v1588 = vunpack.c.l.b16 %v713
        %v1589 = vunpack.c.l.b16 %v714
        %v1590 = vunpack.c.l.b16 %v715
        %v1591 = vunpack.c.l.b16 %v716
        %v1592 = vunpack.c.l.b16 %v717
        %v1593 = vunpack.c.l.b16 %v718
        %v1594 = vunpack.c.l.b16 %v719
        %v1595 = vunpack.c.l.b16 %v720
        %v1596 = vunpack.c.l.b16 %v721
        %v1597 = vunpack.c.l.b16 %v722
        %v1598 = vunpack.c.l.b16 %v723
        %v1599 = vunpack.c.l.b16 %v724
        %v1600 = vunpack.c.l.b16 %v725
        %v1601 = vunpack.c.l.b16 %v726
        %v1602 = vunpack.c.l.b16 %v727
        %v1603 = vunpack.c.l.b16 %v728
        %v1604 = vunpack.c.l.b16 %v729
        %v1605 = vunpack.c.l.b16 %v730
        %v1606 = vunpack.c.l.b16 %v731
        %v1607 = vunpack.c.l.b16 %v732
        %v1608 = vunpack.c.l.b16 %v733
        %v1609 = vunpack.c.l.b16 %v734
        %v1610 = vunpack.c.l.b16 %v735
        %v1611 = vunpack.c.l.b16 %v736
        %v1612 = vunpack.c.l.b16 %v737
        %v1613 = vunpack.c.l.b16 %v738
        %v1614 = vunpack.c.l.b16 %v739
        %v1615 = vunpack.c.l.b16 %v740
        %v1616 = vunpack.c.l.b16 %v741
        %v1617 = vunpack.c.l.b16 %v742
        %v1618 = vunpack.c.l.b16 %v743
        %v1619 = vunpack.c.l.b16 %v744
        %v1620 = vunpack.c.l.b16 %v745
        %v1621 = vunpack.c.l.b16 %v746
        %v1622 = vunpack.c.l.b16 %v747
        %v1623 = vunpack.c.l.b16 %v748
        %v1624 = vunpack.c.l.b16 %v749
        %v1625 = vunpack.c.l.b16 %v750
        %v1626 = vunpack.c.l.b16 %v751
        %v1627 = vunpack.c.l.b16 %v752
        %v1628 = vunpack.c.l.b16 %v753
        %v1629 = vunpack.c.l.b16 %v754
        %v1630 = vunpack.c.l.b16 %v755
        %v1631 = vunpack.c.l.b16 %v756
        %v1632 = vunpack.c.l.b16 %v757
        %v1633 = vunpack.c.l.b16 %v758
        %v1634 = vunpack.c.l.b16 %v759
        %v1635 = vunpack.c.l.b16 %v760
        %v1636 = vunpack.c.l.b16 %v761
        %v1637 = vunpack.c.l.b16 %v762
        %v1638 = vunpack.c.l.b16 %v763
        %v1639 = vunpack.c.l.b16 %v764
        %v1640 = vunpack.c.l.b16 %v765
        %v1641 = vunpack.c.l.b16 %v766
        %v1642 = vunpack.c.l.b16 %v767
        %v1643 = vunpack.c.l.b16 %v768
        %v1644 = vunpack.c.l.b16 %v769
        %v1645 = vunpack.c.l.b16 %v770
        %v1646 = vunpack.c.l.b16 %v771
        %v1647 = vunpack.c.l.b16 %v772
        %v1648 = vunpack.c.l.b16 %v773
        %v1649 = vunpack.c.l.b16 %v774
        %v1650 = vunpack.c.l.b16 %v775
        %v1651 = vunpack.c.l.b16 %v776
        %v1652 = vunpack.c.l.b16 %v777
        %v1653 = vunpack.c.l.b16 %v778
        %v1654 = vunpack.c.l.b16 %v779
        %v1655 = vunpack.c.l.b16 %v780
        %v1656 = vunpack.c.l.b16 %v781
        %v1657 = vunpack.c.l.b16 %v782
        %v1658 = vunpack.c.l.b16 %v783
        %v1659 = vunpack.c.l.b16 %v784
        %v1660 = vunpack.c.l.b16 %v785
        %v1661 = vunpack.c.l.b16 %v786
        %v1662 = vunpack.c.l.b16 %v787
        %v1663 = vunpack.c.l.b16 %v788
        %v1664 = vunpack.c.l.b16 %v789
        %v1665 = vunpack.c.l.b16 %v790
        %v1666 = vunpack.c.l.b16 %v791
        %v1667 = vunpack.c.l.b16 %v792
        %v1668 = vunpack.c.l.b16 %v793
        %v1669 = vunpack.c.l.b16 %v794
        %v1670 = vunpack.c.l.b16 %v795
        %v1671 = vunpack.c.l.b16 %v796
        %v1672 = vunpack.c.l.b16 %v797
        %v1673 = vunpack.c.l.b16 %v798
        %v1674 = vunpack.c.l.b16 %v799
        %v1675 = vunpack.c.l.b16 %v800
        %v1676 = vunpack.c.l.b16 %v801
        %v1677 = vunpack.c.l.b16 %v802
        %v1678 = vunpack.c.l.b16 %v803
        %v1679 = vunpack.c.l.b16 %v804
        %v1680 = vunpack.c.l.b16 %v805
        %v1681 = vunpack.c.l.b16 %v806
        %v1682 = vunpack.c.l.b16 %v807
        %v1683 = vunpack.c.l.b16 %v808
        %v1684 = vunpack.c.l.b16 %v809
        %v1685 = vunpack.c.l.b16 %v810
        %v1686 = vunpack.c.l.b16 %v811
        %v1687 = vunpack.c.l.b16 %v812
        %v1688 = vunpack.c.l.b16 %v813
        %v1689 = vunpack.c.l.b16 %v814
        %v1690 = vunpack.c.l.b16 %v815
        %v1691 = vunpack.c.l.b16 %v816
        %v1692 = vunpack.c.l.b16 %v817
        %v1693 = vunpack.c.l.b16 %v818
        %v1694 = vunpack.c.l.b16 %v819
        %v1695 = vunpack.c.l.b16 %v820
        %v1696 = vunpack.c.l.b16 %v821
        %v1697 = vunpack.c.l.b16 %v822
        %v1698 = vunpack.c.l.b16 %v823
        %v1699 = vunpack.c.l.b16 %v824
        %v1700 = vunpack.c.l.b16 %v825
        %v1701 = vunpack.c.l.b16 %v826
        %v1702 = vunpack.c.l.b16 %v827
        %v1703 = vunpack.c.l.b16 %v828
        %v1704 = vunpack.c.l.b16 %v829
        %v1705 = vunpack.c.l.b16 %v830
        %v1706 = vunpack.c.l.b16 %v831
        %v1707 = vunpack.c.l.b16 %v832
        %v1708 = vunpack.c.l.b16 %v833
        %v1709 = vunpack.c.l.b16 %v834
        %v1710 = vunpack.c.l.b16 %v835
        %v1711 = vunpack.c.l.b16 %v836
        %v1712 = vunpack.c.l.b16 %v837
        %v1713 = vunpack.c.l.b16 %v838
        %v1714 = vunpack.c.l.b16 %v839
        %v1715 = vunpack.c.l.b16 %v840
        %v1716 = vunpack.c.l.b16 %v841
        %v1717 = vunpack.c.l.b16 %v842
        %v1718 = vunpack.c.l.b16 %v843
        %v1719 = vunpack.c.l.b16 %v844
        %v1720 = vunpack.c.l.b16 %v845
        %v1721 = vunpack.c.l.b16 %v846
        %v1722 = vunpack.c.l.b16 %v847
        %v1723 = vunpack.c.l.b16 %v848
        %v1724 = vunpack.c.l.b16 %v849
        %v1725 = vunpack.c.l.b16 %v850
        %v1726 = vunpack.c.l.b16 %v851
        %v1727 = vunpack.c.l.b16 %v852
        %v1728 = vunpack.c.l.b16 %v853
        %v1729 = vunpack.c.l.b16 %v854
        %v1730 = vunpack.c.l.b16 %v855
        %v1731 = vunpack.c.l.b16 %v856
        %v1732 = vunpack.c.l.b16 %v857
        %v1733 = vunpack.c.l.b16 %v858
        %v1734 = vunpack.c.l.b16 %v859
        %v1735 = vunpack.c.l.b16 %v860
        %v1736 = vunpack.c.l.b16 %v861
        %v1737 = vunpack.c.l.b16 %v862
        %v1738 = vunpack.c.l.b16 %v863
        %v1739 = vunpack.c.l.b16 %v864
        %v1740 = vunpack.c.l.b16 %v865
        %v1741 = vunpack.c.l.b16 %v866
        %v1742 = vunpack.c.l.b16 %v867
        %v1743 = vunpack.c.l.b16 %v868
        %v1744 = vunpack.c.l.b16 %v869
        %v1745 = vunpack.c.l.b16 %v870
        %v1746 = vunpack.c.l.b16 %v871
        %v1747 = vunpack.c.l.b16 %v872
        %v1748 = vunpack.c.l.b16 %v873
        %v1749 = vunpack.c.l.b16 %v874
        %v1750 = vunpack.c.l.b16 %v875
        %v1751 = vunpack.c.l.b16 %v876
        %v1752 = vunpack.c.l.b16 %v877
        %v1753 = vunpack.c.l.b16 %v878
        %v1754 = vunpack.c.l.b16 %v879
        %v1755 = vunpack.c.l.b16 %v880
        %v1756 = vunpack.c.l.b16 %v881
        %v1757 = vunpack.c.l.b16 %v882
        %v1758 = vunpack.c.l.b16 %v883
        %v1759 = vunpack.c.l.b16 %v884
        %v1760 = vunpack.c.l.b16 %v885
        %v1761 = vunpack.c.l.b16 %v886
        %v1762 = vunpack.c.l.b16 %v887
        %v1763 = vunpack.c.l.b16 %v888
        %v1764 = vunpack.c.l.b16 %v889
        %v1765 = vunpack.c.l.b16 %v890
        %v1766 = vunpack.c.l.b16 %v891
        %v1767 = vunpack.c.l.b16 %v892
        %v1768 = vunpack.c.l.b16 %v893
        %v1769 = vunpack.c.l.b16 %v894
        %v1770 = vunpack.c.l.b16 %v895
        %v1771 = vunpack.c.l.b16 %v896
        %v1772 = vunpack.c.l.b16 %v897
        %v1773 = vpack.c.b16 %v1340, %v1339
        %v1774 = vpack.c.b16 %v1342, %v1341
        %v1775 = vpack.c.b16 %v1344, %v1343
        %v1776 = vpack.c.b16 %v1346, %v1345
        %v1777 = vpack.c.b16 %v1348, %v1347
        %v1778 = vpack.c.b16 %v1350, %v1349
        %v1779 = vpack.c.b16 %v1352, %v1351
        %v1780 = vpack.c.b16 %v1354, %v1353
        %v1781 = vpack.c.b16 %v1356, %v1355
        %v1782 = vpack.c.b16 %v1358, %v1357
        %v1783 = vpack.c.b16 %v1360, %v1359
        %v1784 = vpack.c.b16 %v1362, %v1361
        %v1785 = vpack.c.b16 %v1364, %v1363
        %v1786 = vpack.c.b16 %v1366, %v1365
        %v1787 = vpack.c.b16 %v1368, %v1367
        %v1788 = vpack.c.b16 %v1370, %v1369
        %v1789 = vpack.c.b16 %v1372, %v1371
        %v1790 = vpack.c.b16 %v1374, %v1373
        %v1791 = vpack.c.b16 %v1376, %v1375
        %v1792 = vpack.c.b16 %v1378, %v1377
        %v1793 = vpack.c.b16 %v1380, %v1379
        %v1794 = vpack.c.b16 %v1382, %v1381
        %v1795 = vpack.c.b16 %v1384, %v1383
        %v1796 = vpack.c.b16 %v1386, %v1385
        %v1797 = vpack.c.b16 %v1388, %v1387
        %v1798 = vpack.c.b16 %v1390, %v1389
        %v1799 = vpack.c.b16 %v1392, %v1391
        %v1800 = vpack.c.b16 %v1394, %v1393
        %v1801 = vpack.c.b16 %v1396, %v1395
        %v1802 = vpack.c.b16 %v1398, %v1397
        %v1803 = vpack.c.b16 %v1400, %v1399
        %v1804 = vpack.c.b16 %v1402, %v1401
        %v1805 = vpack.c.b16 %v1404, %v1403
        %v1806 = vpack.c.b16 %v1406, %v1405
        %v1807 = vpack.c.b16 %v1408, %v1407
        %v1808 = vpack.c.b16 %v1410, %v1409
        %v1809 = vpack.c.b16 %v1412, %v1411
        %v1810 = vpack.c.b16 %v1414, %v1413
        %v1811 = vpack.c.b16 %v1416, %v1415
        %v1812 = vpack.c.b16 %v1418, %v1417
        %v1813 = vpack.c.b16 %v1420, %v1419
        %v1814 = vpack.c.b16 %v1422, %v1421
        %v1815 = vpack.c.b16 %v1424, %v1423
        %v1816 = vpack.c.b16 %v1426, %v1425
        %v1817 = vpack.c.b16 %v1428, %v1427
        %v1818 = vpack.c.b16 %v1430, %v1429
        %v1819 = vpack.c.b16 %v1432, %v1431
        %v1820 = vpack.c.b16 %v1434, %v1433
        %v1821 = vpack.c.b16 %v1436, %v1435
        %v1822 = vpack.c.b16 %v1438, %v1437
        %v1823 = vpack.c.b16 %v1440, %v1439
        %v1824 = vpack.c.b16 %v1442, %v1441
        %v1825 = vpack.c.b16 %v1444, %v1443
        %v1826 = vpack.c.b16 %v1446, %v1445
        %v1827 = vpack.c.b16 %v1448, %v1447
        %v1828 = vpack.c.b16 %v1450, %v1449
        %v1829 = vpack.c.b16 %v1452, %v1451
        %v1830 = vpack.c.b16 %v1454, %v1453
        %v1831 = vpack.c.b16 %v1456, %v1455
        %v1832 = vpack.c.b16 %v1458, %v1457
        %v1833 = vpack.c.b16 %v1460, %v1459
        %v1834 = vpack.c.b16 %v1462, %v1461
        %v1835 = vpack.c.b16 %v1464, %v1463
        %v1836 = vpack.c.b16 %v1466, %v1465
        %v1837 = vpack.c.b16 %v1468, %v1467
        %v1838 = vpack.c.b16 %v1470, %v1469
        %v1839 = vpack.c.b16 %v1472, %v1471
        %v1840 = vpack.c.b16 %v1474, %v1473
        %v1841 = vpack.c.b16 %v1476, %v1475
        %v1842 = vpack.c.b16 %v1478, %v1477
        %v1843 = vpack.c.b16 %v1480, %v1479
        %v1844 = vpack.c.b16 %v1482, %v1481
        %v1845 = vpack.c.b16 %v1484, %v1483
        %v1846 = vpack.c.b16 %v1486, %v1485
        %v1847 = vpack.c.b16 %v1488, %v1487
        %v1848 = vpack.c.b16 %v1490, %v1489
        %v1849 = vpack.c.b16 %v1492, %v1491
        %v1850 = vpack.c.b16 %v1494, %v1493
        %v1851 = vpack.c.b16 %v1496, %v1495
        %v1852 = vpack.c.b16 %v1498, %v1497
        %v1853 = vpack.c.b16 %v1500, %v1499
        %v1854 = vpack.c.b16 %v1502, %v1501
        %v1855 = vpack.c.b16 %v1504, %v1503
        %v1856 = vpack.c.b16 %v1506, %v1505
        %v1857 = vpack.c.b16 %v1508, %v1507
        %v1858 = vpack.c.b16 %v1510, %v1509
        %v1859 = vpack.c.b16 %v1512, %v1511
        %v1860 = vpack.c.b16 %v1514, %v1513
        %v1861 = vpack.c.b16 %v1516, %v1515
        %v1862 = vpack.c.b16 %v1518, %v1517
        %v1863 = vpack.c.b16 %v1520, %v1519
        %v1864 = vpack.c.b16 %v1522, %v1521
        %v1865 = vpack.c.b16 %v1524, %v1523
        %v1866 = vpack.c.b16 %v1526, %v1525
        %v1867 = vpack.c.b16 %v1528, %v1527
        %v1868 = vpack.c.b16 %v1530, %v1529
        %v1869 = vpack.c.b16 %v1532, %v1531
        %v1870 = vpack.c.b16 %v1534, %v1533
        %v1871 = vpack.c.b16 %v1536, %v1535
        %v1872 = vpack.c.b16 %v1538, %v1537
        %v1873 = vpack.c.b16 %v1540, %v1539
        %v1874 = vpack.c.b16 %v1542, %v1541
        %v1875 = vpack.c.b16 %v1544, %v1543
        %v1876 = vpack.c.b16 %v1546, %v1545
        %v1877 = vpack.c.b16 %v1548, %v1547
        %v1878 = vpack.c.b16 %v1550, %v1549
        %v1879 = vpack.c.b16 %v1552, %v1551
        %v1880 = vpack.c.b16 %v1554, %v1553
        %v1881 = vpack.c.b16 %v1556, %v1555
        %v1882 = vpack.c.b16 %v1558, %v1557
        %v1883 = vpack.c.b16 %v1560, %v1559
        %v1884 = vpack.c.b16 %v1562, %v1561
        %v1885 = vpack.c.b16 %v1564, %v1563
        %v1886 = vpack.c.b16 %v1566, %v1565
        %v1887 = vpack.c.b16 %v1568, %v1567
        %v1888 = vpack.c.b16 %v1570, %v1569
        %v1889 = vpack.c.b16 %v1572, %v1571
        %v1890 = vpack.c.b16 %v1574, %v1573
        %v1891 = vpack.c.b16 %v1576, %v1575
        %v1892 = vpack.c.b16 %v1578, %v1577
        %v1893 = vpack.c.b16 %v1580, %v1579
        %v1894 = vpack.c.b16 %v1582, %v1581
        %v1895 = vpack.c.b16 %v1584, %v1583
        %v1896 = vpack.c.b16 %v1586, %v1585
        %v1897 = vpack.c.b16 %v1588, %v1587
        %v1898 = vpack.c.b16 %v1590, %v1589
        %v1899 = vpack.c.b16 %v1592, %v1591
        %v1900 = vpack.c.b16 %v1594, %v1593
        %v1901 = vpack.c.b16 %v1596, %v1595
        %v1902 = vpack.c.b16 %v1598, %v1597
        %v1903 = vpack.c.b16 %v1600, %v1599
        %v1904 = vpack.c.b16 %v1602, %v1601
        %v1905 = vpack.c.b16 %v1604, %v1603
        %v1906 = vpack.c.b16 %v1606, %v1605
        %v1907 = vpack.c.b16 %v1608, %v1607
        %v1908 = vpack.c.b16 %v1610, %v1609
        %v1909 = vpack.c.b16 %v1612, %v1611
        %v1910 = vpack.c.b16 %v1614, %v1613
        %v1911 = vpack.c.b16 %v1616, %v1615
        %v1912 = vpack.c.b16 %v1618, %v1617
        %v1913 = vpack.c.b16 %v1620, %v1619
        %v1914 = vpack.c.b16 %v1622, %v1621
        %v1915 = vpack.c.b16 %v1624, %v1623
        %v1916 = vpack.c.b16 %v1626, %v1625
        %v1917 = vpack.c.b16 %v1628, %v1627
        %v1918 = vpack.c.b16 %v1630, %v1629
        %v1919 = vpack.c.b16 %v1632, %v1631
        %v1920 = vpack.c.b16 %v1634, %v1633
        %v1921 = vpack.c.b16 %v1636, %v1635
        %v1922 = vpack.c.b16 %v1638, %v1637
        %v1923 = vpack.c.b16 %v1640, %v1639
        %v1924 = vpack.c.b16 %v1642, %v1641
        %v1925 = vpack.c.b16 %v1644, %v1643
        %v1926 = vpack.c.b16 %v1646, %v1645
        %v1927 = vpack.c.b16 %v1648, %v1647
        %v1928 = vpack.c.b16 %v1650, %v1649
        %v1929 = vpack.c.b16 %v1652, %v1651
        %v1930 = vpack.c.b16 %v1654, %v1653
        %v1931 = vpack.c.b16 %v1656, %v1655
        %v1932 = vpack.c.b16 %v1658, %v1657
        %v1933 = vpack.c.b16 %v1660, %v1659
        %v1934 = vpack.c.b16 %v1662, %v1661
        %v1935 = vpack.c.b16 %v1664, %v1663
        %v1936 = vpack.c.b16 %v1666, %v1665
        %v1937 = vpack.c.b16 %v1668, %v1667
        %v1938 = vpack.c.b16 %v1670, %v1669
        %v1939 = vpack.c.b16 %v1672, %v1671
        %v1940 = vpack.c.b16 %v1674, %v1673
        %v1941 = vpack.c.b16 %v1676, %v1675
        %v1942 = vpack.c.b16 %v1678, %v1677
        %v1943 = vpack.c.b16 %v1680, %v1679
        %v1944 = vpack.c.b16 %v1682, %v1681
        %v1945 = vpack.c.b16 %v1684, %v1683
        %v1946 = vpack.c.b16 %v1686, %v1685
        %v1947 = vpack.c.b16 %v1688, %v1687
        %v1948 = vpack.c.b16 %v1690, %v1689
        %v1949 = vpack.c.b16 %v1692, %v1691
        %v1950 = vpack.c.b16 %v1694, %v1693
        %v1951 = vpack.c.b16 %v1696, %v1695
        %v1952 = vpack.c.b16 %v1698, %v1697
        %v1953 = vpack.c.b16 %v1700, %v1699
        %v1954 = vpack.c.b16 %v1702, %v1701
        %v1955 = vpack.c.b16 %v1704, %v1703
        %v1956 = vpack.c.b16 %v1706, %v1705
        %v1957 = vpack.c.b16 %v1708, %v1707
        %v1958 = vpack.c.b16 %v1710, %v1709
        %v1959 = vpack.c.b16 %v1712, %v1711
        %v1960 = vpack.c.b16 %v1714, %v1713
        %v1961 = vpack.c.b16 %v1716, %v1715
        %v1962 = vpack.c.b16 %v1718, %v1717
        %v1963 = vpack.c.b16 %v1720, %v1719
        %v1964 = vpack.c.b16 %v1722, %v1721
        %v1965 = vpack.c.b16 %v1724, %v1723
        %v1966 = vpack.c.b16 %v1726, %v1725
        %v1967 = vpack.c.b16 %v1728, %v1727
        %v1968 = vpack.c.b16 %v1730, %v1729
        %v1969 = vpack.c.b16 %v1732, %v1731
        %v1970 = vpack.c.b16 %v1734, %v1733
        %v1971 = vpack.c.b16 %v1736, %v1735
        %v1972 = vpack.c.b16 %v1738, %v1737
        %v1973 = vpack.c.b16 %v1740, %v1739
        %v1974 = vpack.c.b16 %v1742, %v1741
        %v1975 = vpack.c.b16 %v1744, %v1743
        %v1976 = vpack.c.b16 %v1746, %v1745
        %v1977 = vpack.c.b16 %v1748, %v1747
        %v1978 = vpack.c.b16 %v1750, %v1749
        %v1979 = vpack.c.b16 %v1752, %v1751
        %v1980 = vpack.c.b16 %v1754, %v1753
        %v1981 = vpack.c.b16 %v1756, %v1755
        %v1982 = vpack.c.b16 %v1758, %v1757
        %v1983 = vpack.c.b16 %v1760, %v1759
        %v1984 = vpack.c.b16 %v1762, %v1761
        %v1985 = vpack.c.b16 %v1764, %v1763
        %v1986 = vpack.c.b16 %v1766, %v1765
        %v1987 = vpack.c.b16 %v1768, %v1767
        %v1988 = vpack.c.b16 %v1770, %v1769
        %v1989 = vpack.c.b16 %v1772, %v1771
        %vm2206 = vcmask 72704
        %v2208 = vsel %vm2206, %v463, 0
        %vm2210 = vcmask 1043456
        %vm2211 = vcmask 1044480
        %v2212 = vsel %vm2210, 4294967295, 65535
        %v2213 = vsel %vm2211, %v2212, 0
        %v2215 = vand.u32 %v1989, %v2213
        %2217 = vmatprep.subr.bf16.mxu0 0
        %2218 = vmatpush1.bf16.msra.mxu0 %v1780
        %2219 = vmatprep.subr.bf16.mxu0 0
        %2220 = vmatpush1.bf16.msra.mxu0 %v1779
        %2221 = vmatprep.subr.bf16.mxu0 0
        %2222 = vmatpush1.bf16.msra.mxu0 %v1778
        %2223 = vmatprep.subr.bf16.mxu0 0
        %2224 = vmatpush1.bf16.msra.mxu0 %v1777
        %2225 = vmatprep.subr.bf16.mxu0 0
        %2226 = vmatpush1.bf16.msra.mxu0 %v1776
        %2227 = vmatprep.subr.bf16.mxu0 0
        %2228 = vmatpush1.bf16.msra.mxu0 %v1775
        %2229 = vmatprep.subr.bf16.mxu0 0
        %2230 = vmatpush1.bf16.msra.mxu0 %v1774
        %2231 = vmatprep.subr.bf16.mxu0 0
        %2232 = vmatpush1.bf16.msra.mxu0 %v1773
        %2233 = vmatprep.subr.bf16.mxu0 0
        %2234 = vmatpush2.bf16.msra.mxu0 %v1788
        %2235 = vmatprep.subr.bf16.mxu0 0
        %2236 = vmatpush2.bf16.msra.mxu0 %v1787
        %2237 = vmatprep.subr.bf16.mxu0 0
        %2238 = vmatpush2.bf16.msra.mxu0 %v1786
        %2239 = vmatprep.subr.bf16.mxu0 0
        %2240 = vmatpush2.bf16.msra.mxu0 %v1785
        %2241 = vmatprep.subr.bf16.mxu0 0
        %2242 = vmatpush2.bf16.msra.mxu0 %v1784
        %2243 = vmatprep.subr.bf16.mxu0 0
        %2244 = vmatpush2.bf16.msra.mxu0 %v1783
        %2245 = vmatprep.subr.bf16.mxu0 0
        %2246 = vmatpush2.bf16.msra.mxu0 %v1782
        %2247 = vmatprep.subr.bf16.mxu0 0
        %2248 = vmatpush2.bf16.msra.mxu0 %v1781
        %2249 = vmatprep.mubr.bf16.mxu0 %v437
        %2250 = vmatmul.mubr.bf16.gmra.mxu0 %v436
        %v2251 = vpop.f32.mrf.mxu0
        %v2252 = vadd.f32 %v903, %v2251
        %v2253 = vpop.f32.mrf.mxu0
        %v2254 = vpop.f32.mrf.mxu0
        %v2255 = vpop.f32.mrf.mxu0
        %2256 = vdwg.mxu0
        %2257 = vmatprep.subr.bf16.mxu0 0
        %2258 = vmatpush1.bf16.msra.mxu0 %v1796
        %2259 = vmatprep.subr.bf16.mxu0 0
        %2260 = vmatpush1.bf16.msra.mxu0 %v1795
        %2261 = vmatprep.subr.bf16.mxu0 0
        %2262 = vmatpush1.bf16.msra.mxu0 %v1794
        %2263 = vmatprep.subr.bf16.mxu0 0
        %2264 = vmatpush1.bf16.msra.mxu0 %v1793
        %2265 = vmatprep.subr.bf16.mxu0 0
        %2266 = vmatpush1.bf16.msra.mxu0 %v1792
        %2267 = vmatprep.subr.bf16.mxu0 0
        %2268 = vmatpush1.bf16.msra.mxu0 %v1791
        %2269 = vmatprep.subr.bf16.mxu0 0
        %2270 = vmatpush1.bf16.msra.mxu0 %v1790
        %2271 = vmatprep.subr.bf16.mxu0 0
        %2272 = vmatpush1.bf16.msra.mxu0 %v1789
        %2273 = vmatprep.subr.bf16.mxu0 0
        %2274 = vmatpush2.bf16.msra.mxu0 %v1804
        %2275 = vmatprep.subr.bf16.mxu0 0
        %2276 = vmatpush2.bf16.msra.mxu0 %v1803
        %2277 = vmatprep.subr.bf16.mxu0 0
        %2278 = vmatpush2.bf16.msra.mxu0 %v1802
        %2279 = vmatprep.subr.bf16.mxu0 0
        %2280 = vmatpush2.bf16.msra.mxu0 %v1801
        %2281 = vmatprep.subr.bf16.mxu0 0
        %2282 = vmatpush2.bf16.msra.mxu0 %v1800
        %2283 = vmatprep.subr.bf16.mxu0 0
        %2284 = vmatpush2.bf16.msra.mxu0 %v1799
        %2285 = vmatprep.subr.bf16.mxu0 0
        %2286 = vmatpush2.bf16.msra.mxu0 %v1798
        %2287 = vmatprep.subr.bf16.mxu0 0
        %2288 = vmatpush2.bf16.msra.mxu0 %v1797
        %2289 = vmatprep.mubr.bf16.mxu0 %v439
        %2290 = vmatmul.mubr.bf16.gmra.mxu0 %v438
        %v2291 = vpop.f32.mrf.mxu0
        %v2292 = vadd.f32 %v2252, %v2291
        %v2293 = vpop.f32.mrf.mxu0
        %v2294 = vpop.f32.mrf.mxu0
        %v2295 = vpop.f32.mrf.mxu0
        %2296 = vdwg.mxu0
        %2297 = vmatprep.subr.bf16.mxu0 0
        %2298 = vmatpush1.bf16.msra.mxu0 %v1812
        %2299 = vmatprep.subr.bf16.mxu0 0
        %2300 = vmatpush1.bf16.msra.mxu0 %v1811
        %2301 = vmatprep.subr.bf16.mxu0 0
        %2302 = vmatpush1.bf16.msra.mxu0 %v1810
        %2303 = vmatprep.subr.bf16.mxu0 0
        %2304 = vmatpush1.bf16.msra.mxu0 %v1809
        %2305 = vmatprep.subr.bf16.mxu0 0
        %2306 = vmatpush1.bf16.msra.mxu0 %v1808
        %2307 = vmatprep.subr.bf16.mxu0 0
        %2308 = vmatpush1.bf16.msra.mxu0 %v1807
        %2309 = vmatprep.subr.bf16.mxu0 0
        %2310 = vmatpush1.bf16.msra.mxu0 %v1806
        %2311 = vmatprep.subr.bf16.mxu0 0
        %2312 = vmatpush1.bf16.msra.mxu0 %v1805
        %2313 = vmatprep.subr.bf16.mxu0 0
        %2314 = vmatpush2.bf16.msra.mxu0 %v1820
        %2315 = vmatprep.subr.bf16.mxu0 0
        %2316 = vmatpush2.bf16.msra.mxu0 %v1819
        %2317 = vmatprep.subr.bf16.mxu0 0
        %2318 = vmatpush2.bf16.msra.mxu0 %v1818
        %2319 = vmatprep.subr.bf16.mxu0 0
        %2320 = vmatpush2.bf16.msra.mxu0 %v1817
        %2321 = vmatprep.subr.bf16.mxu0 0
        %2322 = vmatpush2.bf16.msra.mxu0 %v1816
        %2323 = vmatprep.subr.bf16.mxu0 0
        %2324 = vmatpush2.bf16.msra.mxu0 %v1815
        %2325 = vmatprep.subr.bf16.mxu0 0
        %2326 = vmatpush2.bf16.msra.mxu0 %v1814
        %2327 = vmatprep.subr.bf16.mxu0 0
        %2328 = vmatpush2.bf16.msra.mxu0 %v1813
        %2329 = vmatprep.mubr.bf16.mxu0 %v441
        %2330 = vmatmul.mubr.bf16.gmra.mxu0 %v440
        %v2331 = vpop.f32.mrf.mxu0
        %v2332 = vadd.f32 %v2292, %v2331
        %v2333 = vpop.f32.mrf.mxu0
        %v2334 = vpop.f32.mrf.mxu0
        %v2335 = vpop.f32.mrf.mxu0
        %2336 = vdwg.mxu0
        %2337 = vmatprep.subr.bf16.mxu0 0
        %2338 = vmatpush1.bf16.msra.mxu0 %v1828
        %2339 = vmatprep.subr.bf16.mxu0 0
        %2340 = vmatpush1.bf16.msra.mxu0 %v1827
        %2341 = vmatprep.subr.bf16.mxu0 0
        %2342 = vmatpush1.bf16.msra.mxu0 %v1826
        %2343 = vmatprep.subr.bf16.mxu0 0
        %2344 = vmatpush1.bf16.msra.mxu0 %v1825
        %2345 = vmatprep.subr.bf16.mxu0 0
        %2346 = vmatpush1.bf16.msra.mxu0 %v1824
        %2347 = vmatprep.subr.bf16.mxu0 0
        %2348 = vmatpush1.bf16.msra.mxu0 %v1823
        %2349 = vmatprep.subr.bf16.mxu0 0
        %2350 = vmatpush1.bf16.msra.mxu0 %v1822
        %2351 = vmatprep.subr.bf16.mxu0 0
        %2352 = vmatpush1.bf16.msra.mxu0 %v1821
        %2353 = vmatprep.subr.bf16.mxu0 0
        %2354 = vmatpush2.bf16.msra.mxu0 %v1836
        %2355 = vmatprep.subr.bf16.mxu0 0
        %2356 = vmatpush2.bf16.msra.mxu0 %v1835
        %2357 = vmatprep.subr.bf16.mxu0 0
        %2358 = vmatpush2.bf16.msra.mxu0 %v1834
        %2359 = vmatprep.subr.bf16.mxu0 0
        %2360 = vmatpush2.bf16.msra.mxu0 %v1833
        %2361 = vmatprep.subr.bf16.mxu0 0
        %2362 = vmatpush2.bf16.msra.mxu0 %v1832
        %2363 = vmatprep.subr.bf16.mxu0 0
        %2364 = vmatpush2.bf16.msra.mxu0 %v1831
        %2365 = vmatprep.subr.bf16.mxu0 0
        %2366 = vmatpush2.bf16.msra.mxu0 %v1830
        %2367 = vmatprep.subr.bf16.mxu0 0
        %2368 = vmatpush2.bf16.msra.mxu0 %v1829
        %2369 = vmatprep.mubr.bf16.mxu0 %v443
        %2370 = vmatmul.mubr.bf16.gmra.mxu0 %v442
        %v2371 = vpop.f32.mrf.mxu0
        %v2372 = vadd.f32 %v2332, %v2371
        %v2373 = vpop.f32.mrf.mxu0
        %v2374 = vpop.f32.mrf.mxu0
        %v2375 = vpop.f32.mrf.mxu0
        %2376 = vdwg.mxu0
        %2377 = vmatprep.subr.bf16.mxu0 0
        %2378 = vmatpush1.bf16.msra.mxu0 %v1844
        %2379 = vmatprep.subr.bf16.mxu0 0
        %2380 = vmatpush1.bf16.msra.mxu0 %v1843
        %2381 = vmatprep.subr.bf16.mxu0 0
        %2382 = vmatpush1.bf16.msra.mxu0 %v1842
        %2383 = vmatprep.subr.bf16.mxu0 0
        %2384 = vmatpush1.bf16.msra.mxu0 %v1841
        %2385 = vmatprep.subr.bf16.mxu0 0
        %2386 = vmatpush1.bf16.msra.mxu0 %v1840
        %2387 = vmatprep.subr.bf16.mxu0 0
        %2388 = vmatpush1.bf16.msra.mxu0 %v1839
        %2389 = vmatprep.subr.bf16.mxu0 0
        %2390 = vmatpush1.bf16.msra.mxu0 %v1838
        %2391 = vmatprep.subr.bf16.mxu0 0
        %2392 = vmatpush1.bf16.msra.mxu0 %v1837
        %2393 = vmatprep.subr.bf16.mxu0 0
        %2394 = vmatpush2.bf16.msra.mxu0 %v1852
        %2395 = vmatprep.subr.bf16.mxu0 0
        %2396 = vmatpush2.bf16.msra.mxu0 %v1851
        %2397 = vmatprep.subr.bf16.mxu0 0
        %2398 = vmatpush2.bf16.msra.mxu0 %v1850
        %2399 = vmatprep.subr.bf16.mxu0 0
        %2400 = vmatpush2.bf16.msra.mxu0 %v1849
        %2401 = vmatprep.subr.bf16.mxu0 0
        %2402 = vmatpush2.bf16.msra.mxu0 %v1848
        %2403 = vmatprep.subr.bf16.mxu0 0
        %2404 = vmatpush2.bf16.msra.mxu0 %v1847
        %2405 = vmatprep.subr.bf16.mxu0 0
        %2406 = vmatpush2.bf16.msra.mxu0 %v1846
        %2407 = vmatprep.subr.bf16.mxu0 0
        %2408 = vmatpush2.bf16.msra.mxu0 %v1845
        %2409 = vmatprep.mubr.bf16.mxu0 %v445
        %2410 = vmatmul.mubr.bf16.gmra.mxu0 %v444
        %v2411 = vpop.f32.mrf.mxu0
        %v2412 = vadd.f32 %v2372, %v2411
        %v2413 = vpop.f32.mrf.mxu0
        %v2414 = vpop.f32.mrf.mxu0
        %v2415 = vpop.f32.mrf.mxu0
        %2416 = vdwg.mxu0
        %2417 = vmatprep.subr.bf16.mxu0 0
        %2418 = vmatpush1.bf16.msra.mxu0 %v1860
        %2419 = vmatprep.subr.bf16.mxu0 0
        %2420 = vmatpush1.bf16.msra.mxu0 %v1859
        %2421 = vmatprep.subr.bf16.mxu0 0
        %2422 = vmatpush1.bf16.msra.mxu0 %v1858
        %2423 = vmatprep.subr.bf16.mxu0 0
        %2424 = vmatpush1.bf16.msra.mxu0 %v1857
        %2425 = vmatprep.subr.bf16.mxu0 0
        %2426 = vmatpush1.bf16.msra.mxu0 %v1856
        %2427 = vmatprep.subr.bf16.mxu0 0
        %2428 = vmatpush1.bf16.msra.mxu0 %v1855
        %2429 = vmatprep.subr.bf16.mxu0 0
        %2430 = vmatpush1.bf16.msra.mxu0 %v1854
        %2431 = vmatprep.subr.bf16.mxu0 0
        %2432 = vmatpush1.bf16.msra.mxu0 %v1853
        %2433 = vmatprep.subr.bf16.mxu0 0
        %2434 = vmatpush2.bf16.msra.mxu0 %v1868
        %2435 = vmatprep.subr.bf16.mxu0 0
        %2436 = vmatpush2.bf16.msra.mxu0 %v1867
        %2437 = vmatprep.subr.bf16.mxu0 0
        %2438 = vmatpush2.bf16.msra.mxu0 %v1866
        %2439 = vmatprep.subr.bf16.mxu0 0
        %2440 = vmatpush2.bf16.msra.mxu0 %v1865
        %2441 = vmatprep.subr.bf16.mxu0 0
        %2442 = vmatpush2.bf16.msra.mxu0 %v1864
        %2443 = vmatprep.subr.bf16.mxu0 0
        %2444 = vmatpush2.bf16.msra.mxu0 %v1863
        %2445 = vmatprep.subr.bf16.mxu0 0
        %2446 = vmatpush2.bf16.msra.mxu0 %v1862
        %2447 = vmatprep.subr.bf16.mxu0 0
        %2448 = vmatpush2.bf16.msra.mxu0 %v1861
        %2449 = vmatprep.mubr.bf16.mxu0 %v447
        %2450 = vmatmul.mubr.bf16.gmra.mxu0 %v446
        %v2451 = vpop.f32.mrf.mxu0
        %v2452 = vadd.f32 %v2412, %v2451
        %v2453 = vpop.f32.mrf.mxu0
        %v2454 = vpop.f32.mrf.mxu0
        %v2455 = vpop.f32.mrf.mxu0
        %2456 = vdwg.mxu0
        %2457 = vmatprep.subr.bf16.mxu0 0
        %2458 = vmatpush1.bf16.msra.mxu0 %v1876
        %2459 = vmatprep.subr.bf16.mxu0 0
        %2460 = vmatpush1.bf16.msra.mxu0 %v1875
        %2461 = vmatprep.subr.bf16.mxu0 0
        %2462 = vmatpush1.bf16.msra.mxu0 %v1874
        %2463 = vmatprep.subr.bf16.mxu0 0
        %2464 = vmatpush1.bf16.msra.mxu0 %v1873
        %2465 = vmatprep.subr.bf16.mxu0 0
        %2466 = vmatpush1.bf16.msra.mxu0 %v1872
        %2467 = vmatprep.subr.bf16.mxu0 0
        %2468 = vmatpush1.bf16.msra.mxu0 %v1871
        %2469 = vmatprep.subr.bf16.mxu0 0
        %2470 = vmatpush1.bf16.msra.mxu0 %v1870
        %2471 = vmatprep.subr.bf16.mxu0 0
        %2472 = vmatpush1.bf16.msra.mxu0 %v1869
        %2473 = vmatprep.subr.bf16.mxu0 0
        %2474 = vmatpush2.bf16.msra.mxu0 %v1884
        %2475 = vmatprep.subr.bf16.mxu0 0
        %2476 = vmatpush2.bf16.msra.mxu0 %v1883
        %2477 = vmatprep.subr.bf16.mxu0 0
        %2478 = vmatpush2.bf16.msra.mxu0 %v1882
        %2479 = vmatprep.subr.bf16.mxu0 0
        %2480 = vmatpush2.bf16.msra.mxu0 %v1881
        %2481 = vmatprep.subr.bf16.mxu0 0
        %2482 = vmatpush2.bf16.msra.mxu0 %v1880
        %2483 = vmatprep.subr.bf16.mxu0 0
        %2484 = vmatpush2.bf16.msra.mxu0 %v1879
        %2485 = vmatprep.subr.bf16.mxu0 0
        %2486 = vmatpush2.bf16.msra.mxu0 %v1878
        %2487 = vmatprep.subr.bf16.mxu0 0
        %2488 = vmatpush2.bf16.msra.mxu0 %v1877
        %2489 = vmatprep.mubr.bf16.mxu0 %v449
        %2490 = vmatmul.mubr.bf16.gmra.mxu0 %v448
        %v2491 = vpop.f32.mrf.mxu0
        %v2492 = vadd.f32 %v2452, %v2491
        %v2493 = vpop.f32.mrf.mxu0
        %v2494 = vpop.f32.mrf.mxu0
        %v2495 = vpop.f32.mrf.mxu0
        %2496 = vdwg.mxu0
        %2497 = vmatprep.subr.bf16.mxu0 0
        %2498 = vmatpush1.bf16.msra.mxu0 %v1892
        %2499 = vmatprep.subr.bf16.mxu0 0
        %2500 = vmatpush1.bf16.msra.mxu0 %v1891
        %2501 = vmatprep.subr.bf16.mxu0 0
        %2502 = vmatpush1.bf16.msra.mxu0 %v1890
        %2503 = vmatprep.subr.bf16.mxu0 0
        %2504 = vmatpush1.bf16.msra.mxu0 %v1889
        %2505 = vmatprep.subr.bf16.mxu0 0
        %2506 = vmatpush1.bf16.msra.mxu0 %v1888
        %2507 = vmatprep.subr.bf16.mxu0 0
        %2508 = vmatpush1.bf16.msra.mxu0 %v1887
        %2509 = vmatprep.subr.bf16.mxu0 0
        %2510 = vmatpush1.bf16.msra.mxu0 %v1886
        %2511 = vmatprep.subr.bf16.mxu0 0
        %2512 = vmatpush1.bf16.msra.mxu0 %v1885
        %2513 = vmatprep.subr.bf16.mxu0 0
        %2514 = vmatpush2.bf16.msra.mxu0 %v1900
        %2515 = vmatprep.subr.bf16.mxu0 0
        %2516 = vmatpush2.bf16.msra.mxu0 %v1899
        %2517 = vmatprep.subr.bf16.mxu0 0
        %2518 = vmatpush2.bf16.msra.mxu0 %v1898
        %2519 = vmatprep.subr.bf16.mxu0 0
        %2520 = vmatpush2.bf16.msra.mxu0 %v1897
        %2521 = vmatprep.subr.bf16.mxu0 0
        %2522 = vmatpush2.bf16.msra.mxu0 %v1896
        %2523 = vmatprep.subr.bf16.mxu0 0
        %2524 = vmatpush2.bf16.msra.mxu0 %v1895
        %2525 = vmatprep.subr.bf16.mxu0 0
        %2526 = vmatpush2.bf16.msra.mxu0 %v1894
        %2527 = vmatprep.subr.bf16.mxu0 0
        %2528 = vmatpush2.bf16.msra.mxu0 %v1893
        %2529 = vmatprep.mubr.bf16.mxu0 %v451
        %2530 = vmatmul.mubr.bf16.gmra.mxu0 %v450
        %v2531 = vpop.f32.mrf.mxu0
        %v2532 = vadd.f32 %v2492, %v2531
        %v2533 = vpop.f32.mrf.mxu0
        %v2534 = vpop.f32.mrf.mxu0
        %v2535 = vpop.f32.mrf.mxu0
        %2536 = vdwg.mxu0
        %2537 = vmatprep.subr.bf16.mxu0 0
        %2538 = vmatpush1.bf16.msra.mxu0 %v1908
        %2539 = vmatprep.subr.bf16.mxu0 0
        %2540 = vmatpush1.bf16.msra.mxu0 %v1907
        %2541 = vmatprep.subr.bf16.mxu0 0
        %2542 = vmatpush1.bf16.msra.mxu0 %v1906
        %2543 = vmatprep.subr.bf16.mxu0 0
        %2544 = vmatpush1.bf16.msra.mxu0 %v1905
        %2545 = vmatprep.subr.bf16.mxu0 0
        %2546 = vmatpush1.bf16.msra.mxu0 %v1904
        %2547 = vmatprep.subr.bf16.mxu0 0
        %2548 = vmatpush1.bf16.msra.mxu0 %v1903
        %2549 = vmatprep.subr.bf16.mxu0 0
        %2550 = vmatpush1.bf16.msra.mxu0 %v1902
        %2551 = vmatprep.subr.bf16.mxu0 0
        %2552 = vmatpush1.bf16.msra.mxu0 %v1901
        %2553 = vmatprep.subr.bf16.mxu0 0
        %2554 = vmatpush2.bf16.msra.mxu0 %v1916
        %2555 = vmatprep.subr.bf16.mxu0 0
        %2556 = vmatpush2.bf16.msra.mxu0 %v1915
        %2557 = vmatprep.subr.bf16.mxu0 0
        %2558 = vmatpush2.bf16.msra.mxu0 %v1914
        %2559 = vmatprep.subr.bf16.mxu0 0
        %2560 = vmatpush2.bf16.msra.mxu0 %v1913
        %2561 = vmatprep.subr.bf16.mxu0 0
        %2562 = vmatpush2.bf16.msra.mxu0 %v1912
        %2563 = vmatprep.subr.bf16.mxu0 0
        %2564 = vmatpush2.bf16.msra.mxu0 %v1911
        %2565 = vmatprep.subr.bf16.mxu0 0
        %2566 = vmatpush2.bf16.msra.mxu0 %v1910
        %2567 = vmatprep.subr.bf16.mxu0 0
        %2568 = vmatpush2.bf16.msra.mxu0 %v1909
        %2569 = vmatprep.mubr.bf16.mxu0 %v453
        %2570 = vmatmul.mubr.bf16.gmra.mxu0 %v452
        %v2571 = vpop.f32.mrf.mxu0
        %v2572 = vadd.f32 %v2532, %v2571
        %v2573 = vpop.f32.mrf.mxu0
        %v2574 = vpop.f32.mrf.mxu0
        %v2575 = vpop.f32.mrf.mxu0
        %2576 = vdwg.mxu0
        %2577 = vmatprep.subr.bf16.mxu0 0
        %2578 = vmatpush1.bf16.msra.mxu0 %v1924
        %2579 = vmatprep.subr.bf16.mxu0 0
        %2580 = vmatpush1.bf16.msra.mxu0 %v1923
        %2581 = vmatprep.subr.bf16.mxu0 0
        %2582 = vmatpush1.bf16.msra.mxu0 %v1922
        %2583 = vmatprep.subr.bf16.mxu0 0
        %2584 = vmatpush1.bf16.msra.mxu0 %v1921
        %2585 = vmatprep.subr.bf16.mxu0 0
        %2586 = vmatpush1.bf16.msra.mxu0 %v1920
        %2587 = vmatprep.subr.bf16.mxu0 0
        %2588 = vmatpush1.bf16.msra.mxu0 %v1919
        %2589 = vmatprep.subr.bf16.mxu0 0
        %2590 = vmatpush1.bf16.msra.mxu0 %v1918
        %2591 = vmatprep.subr.bf16.mxu0 0
        %2592 = vmatpush1.bf16.msra.mxu0 %v1917
        %2593 = vmatprep.subr.bf16.mxu0 0
        %2594 = vmatpush2.bf16.msra.mxu0 %v1932
        %2595 = vmatprep.subr.bf16.mxu0 0
        %2596 = vmatpush2.bf16.msra.mxu0 %v1931
        %2597 = vmatprep.subr.bf16.mxu0 0
        %2598 = vmatpush2.bf16.msra.mxu0 %v1930
        %2599 = vmatprep.subr.bf16.mxu0 0
        %2600 = vmatpush2.bf16.msra.mxu0 %v1929
        %2601 = vmatprep.subr.bf16.mxu0 0
        %2602 = vmatpush2.bf16.msra.mxu0 %v1928
        %2603 = vmatprep.subr.bf16.mxu0 0
        %2604 = vmatpush2.bf16.msra.mxu0 %v1927
        %2605 = vmatprep.subr.bf16.mxu0 0
        %2606 = vmatpush2.bf16.msra.mxu0 %v1926
        %2607 = vmatprep.subr.bf16.mxu0 0
        %2608 = vmatpush2.bf16.msra.mxu0 %v1925
        %2609 = vmatprep.mubr.bf16.mxu0 %v455
        %2610 = vmatmul.mubr.bf16.gmra.mxu0 %v454
        %v2611 = vpop.f32.mrf.mxu0
        %v2612 = vadd.f32 %v2572, %v2611
        %v2613 = vpop.f32.mrf.mxu0
        %v2614 = vpop.f32.mrf.mxu0
        %v2615 = vpop.f32.mrf.mxu0
        %2616 = vdwg.mxu0
        %2617 = vmatprep.subr.bf16.mxu0 0
        %2618 = vmatpush1.bf16.msra.mxu0 %v1940
        %2619 = vmatprep.subr.bf16.mxu0 0
        %2620 = vmatpush1.bf16.msra.mxu0 %v1939
        %2621 = vmatprep.subr.bf16.mxu0 0
        %2622 = vmatpush1.bf16.msra.mxu0 %v1938
        %2623 = vmatprep.subr.bf16.mxu0 0
        %2624 = vmatpush1.bf16.msra.mxu0 %v1937
        %2625 = vmatprep.subr.bf16.mxu0 0
        %2626 = vmatpush1.bf16.msra.mxu0 %v1936
        %2627 = vmatprep.subr.bf16.mxu0 0
        %2628 = vmatpush1.bf16.msra.mxu0 %v1935
        %2629 = vmatprep.subr.bf16.mxu0 0
        %2630 = vmatpush1.bf16.msra.mxu0 %v1934
        %2631 = vmatprep.subr.bf16.mxu0 0
        %2632 = vmatpush1.bf16.msra.mxu0 %v1933
        %2633 = vmatprep.subr.bf16.mxu0 0
        %2634 = vmatpush2.bf16.msra.mxu0 %v1948
        %2635 = vmatprep.subr.bf16.mxu0 0
        %2636 = vmatpush2.bf16.msra.mxu0 %v1947
        %2637 = vmatprep.subr.bf16.mxu0 0
        %2638 = vmatpush2.bf16.msra.mxu0 %v1946
        %2639 = vmatprep.subr.bf16.mxu0 0
        %2640 = vmatpush2.bf16.msra.mxu0 %v1945
        %2641 = vmatprep.subr.bf16.mxu0 0
        %2642 = vmatpush2.bf16.msra.mxu0 %v1944
        %2643 = vmatprep.subr.bf16.mxu0 0
        %2644 = vmatpush2.bf16.msra.mxu0 %v1943
        %2645 = vmatprep.subr.bf16.mxu0 0
        %2646 = vmatpush2.bf16.msra.mxu0 %v1942
        %2647 = vmatprep.subr.bf16.mxu0 0
        %2648 = vmatpush2.bf16.msra.mxu0 %v1941
        %2649 = vmatprep.mubr.bf16.mxu0 %v457
        %2650 = vmatmul.mubr.bf16.gmra.mxu0 %v456
        %v2651 = vpop.f32.mrf.mxu0
        %v2652 = vadd.f32 %v2612, %v2651
        %v2653 = vpop.f32.mrf.mxu0
        %v2654 = vpop.f32.mrf.mxu0
        %v2655 = vpop.f32.mrf.mxu0
        %2656 = vdwg.mxu0
        %2657 = vmatprep.subr.bf16.mxu0 0
        %2658 = vmatpush1.bf16.msra.mxu0 %v1956
        %2659 = vmatprep.subr.bf16.mxu0 0
        %2660 = vmatpush1.bf16.msra.mxu0 %v1955
        %2661 = vmatprep.subr.bf16.mxu0 0
        %2662 = vmatpush1.bf16.msra.mxu0 %v1954
        %2663 = vmatprep.subr.bf16.mxu0 0
        %2664 = vmatpush1.bf16.msra.mxu0 %v1953
        %2665 = vmatprep.subr.bf16.mxu0 0
        %2666 = vmatpush1.bf16.msra.mxu0 %v1952
        %2667 = vmatprep.subr.bf16.mxu0 0
        %2668 = vmatpush1.bf16.msra.mxu0 %v1951
        %2669 = vmatprep.subr.bf16.mxu0 0
        %2670 = vmatpush1.bf16.msra.mxu0 %v1950
        %2671 = vmatprep.subr.bf16.mxu0 0
        %2672 = vmatpush1.bf16.msra.mxu0 %v1949
        %2673 = vmatprep.subr.bf16.mxu0 0
        %2674 = vmatpush2.bf16.msra.mxu0 %v1964
        %2675 = vmatprep.subr.bf16.mxu0 0
        %2676 = vmatpush2.bf16.msra.mxu0 %v1963
        %2677 = vmatprep.subr.bf16.mxu0 0
        %2678 = vmatpush2.bf16.msra.mxu0 %v1962
        %2679 = vmatprep.subr.bf16.mxu0 0
        %2680 = vmatpush2.bf16.msra.mxu0 %v1961
        %2681 = vmatprep.subr.bf16.mxu0 0
        %2682 = vmatpush2.bf16.msra.mxu0 %v1960
        %2683 = vmatprep.subr.bf16.mxu0 0
        %2684 = vmatpush2.bf16.msra.mxu0 %v1959
        %2685 = vmatprep.subr.bf16.mxu0 0
        %2686 = vmatpush2.bf16.msra.mxu0 %v1958
        %2687 = vmatprep.subr.bf16.mxu0 0
        %2688 = vmatpush2.bf16.msra.mxu0 %v1957
        %2689 = vmatprep.mubr.bf16.mxu0 %v459
        %2690 = vmatmul.mubr.bf16.gmra.mxu0 %v458
        %v2691 = vpop.f32.mrf.mxu0
        %v2692 = vadd.f32 %v2652, %v2691
        %v2693 = vpop.f32.mrf.mxu0
        %v2694 = vpop.f32.mrf.mxu0
        %v2695 = vpop.f32.mrf.mxu0
        %2696 = vdwg.mxu0
        %2697 = vmatprep.subr.bf16.mxu0 0
        %2698 = vmatpush1.bf16.msra.mxu0 %v1972
        %2699 = vmatprep.subr.bf16.mxu0 0
        %2700 = vmatpush1.bf16.msra.mxu0 %v1971
        %2701 = vmatprep.subr.bf16.mxu0 0
        %2702 = vmatpush1.bf16.msra.mxu0 %v1970
        %2703 = vmatprep.subr.bf16.mxu0 0
        %2704 = vmatpush1.bf16.msra.mxu0 %v1969
        %2705 = vmatprep.subr.bf16.mxu0 0
        %2706 = vmatpush1.bf16.msra.mxu0 %v1968
        %2707 = vmatprep.subr.bf16.mxu0 0
        %2708 = vmatpush1.bf16.msra.mxu0 %v1967
        %2709 = vmatprep.subr.bf16.mxu0 0
        %2710 = vmatpush1.bf16.msra.mxu0 %v1966
        %2711 = vmatprep.subr.bf16.mxu0 0
        %2712 = vmatpush1.bf16.msra.mxu0 %v1965
        %2713 = vmatprep.subr.bf16.mxu0 0
        %2714 = vmatpush2.bf16.msra.mxu0 %v1980
        %2715 = vmatprep.subr.bf16.mxu0 0
        %2716 = vmatpush2.bf16.msra.mxu0 %v1979
        %2717 = vmatprep.subr.bf16.mxu0 0
        %2718 = vmatpush2.bf16.msra.mxu0 %v1978
        %2719 = vmatprep.subr.bf16.mxu0 0
        %2720 = vmatpush2.bf16.msra.mxu0 %v1977
        %2721 = vmatprep.subr.bf16.mxu0 0
        %2722 = vmatpush2.bf16.msra.mxu0 %v1976
        %2723 = vmatprep.subr.bf16.mxu0 0
        %2724 = vmatpush2.bf16.msra.mxu0 %v1975
        %2725 = vmatprep.subr.bf16.mxu0 0
        %2726 = vmatpush2.bf16.msra.mxu0 %v1974
        %2727 = vmatprep.subr.bf16.mxu0 0
        %2728 = vmatpush2.bf16.msra.mxu0 %v1973
        %2729 = vmatprep.mubr.bf16.mxu0 %v461
        %2730 = vmatmul.mubr.bf16.gmra.mxu0 %v460
        %v2731 = vpop.f32.mrf.mxu0
        %v2732 = vadd.f32 %v2692, %v2731
        %v2733 = vpop.f32.mrf.mxu0
        %v2734 = vpop.f32.mrf.mxu0
        %v2735 = vpop.f32.mrf.mxu0
        %2736 = vdwg.mxu0
        %2737 = vmatprep.subr.bf16.mxu0 0
        %2738 = vmatpush1.bf16.msra.mxu0 %v1988
        %2739 = vmatprep.subr.bf16.mxu0 0
        %2740 = vmatpush1.bf16.msra.mxu0 %v1987
        %2741 = vmatprep.subr.bf16.mxu0 0
        %2742 = vmatpush1.bf16.msra.mxu0 %v1986
        %2743 = vmatprep.subr.bf16.mxu0 0
        %2744 = vmatpush1.bf16.msra.mxu0 %v1985
        %2745 = vmatprep.subr.bf16.mxu0 0
        %2746 = vmatpush1.bf16.msra.mxu0 %v1984
        %2747 = vmatprep.subr.bf16.mxu0 0
        %2748 = vmatpush1.bf16.msra.mxu0 %v1983
        %2749 = vmatprep.subr.bf16.mxu0 0
        %2750 = vmatpush1.bf16.msra.mxu0 %v1982
        %2751 = vmatprep.subr.bf16.mxu0 0
        %2752 = vmatpush1.bf16.msra.mxu0 %v1981
        %2753 = vmatprep.subr.bf16.mxu0 0
        %2754 = vmatpush2.bf16.msra.mxu0 0
        %2755 = vmatprep.subr.bf16.mxu0 0
        %2756 = vmatpush2.bf16.msra.mxu0 0
        %2757 = vmatprep.subr.bf16.mxu0 0
        %2758 = vmatpush2.bf16.msra.mxu0 0
        %2759 = vmatprep.subr.bf16.mxu0 0
        %2760 = vmatpush2.bf16.msra.mxu0 0
        %2761 = vmatprep.subr.bf16.mxu0 0
        %2762 = vmatpush2.bf16.msra.mxu0 0
        %2763 = vmatprep.subr.bf16.mxu0 0
        %2764 = vmatpush2.bf16.msra.mxu0 0
        %2765 = vmatprep.subr.bf16.mxu0 0
        %2766 = vmatpush2.bf16.msra.mxu0 0
        %2767 = vmatprep.subr.bf16.mxu0 0
        %2768 = vmatpush2.bf16.msra.mxu0 %v2215
        %2769 = vmatprep.mubr.bf16.mxu0 %v2208
        %2770 = vmatmul.mubr.bf16.gmra.mxu0 %v462
        %v2771 = vpop.f32.mrf.mxu0
        %v2772 = vadd.f32 %v2732, %v2771
        %v2773 = vpop.f32.mrf.mxu0
        %v2774 = vpop.f32.mrf.mxu0
        %v2775 = vpop.f32.mrf.mxu0
        %2776 = vdwg.mxu0
        %v2777 = vmax.f32 %v2772, 0.0
        %v2778 = vpack.c.bf16 %v2777, %v2777
        %v2779 = vld [vmem:[#allocation7] sm:$0xf]
        %v2780 = vld [vmem:[#allocation7 + $0x4] sm:$0xf]
        %v2781 = vld [vmem:[#allocation7 + $0x8] sm:$0xf]
        %v2782 = vld [vmem:[#allocation7 + $0xc] sm:$0xf]
        %v2783 = vld [vmem:[#allocation7 + $0x10] sm:$0xf]
        %v2784 = vld [vmem:[#allocation7 + $0x14] sm:$0xf]
        %v2785 = vld [vmem:[#allocation7 + $0x18] sm:$0xf]
        %v2786 = vld [vmem:[#allocation7 + $0x1c] sm:$0xf]
        %v2787 = vld [vmem:[#allocation7 + $0x20] sm:$0xf]
        %v2788 = vld [vmem:[#allocation7 + $0x24] sm:$0xf]
        %v2789 = vld [vmem:[#allocation7 + $0x28] sm:$0xf]
        %v2790 = vld [vmem:[#allocation7 + $0x2c] sm:$0xf]
        %v2791 = vld [vmem:[#allocation7 + $0x30] sm:$0xf]
        %v2792 = vld [vmem:[#allocation7 + $0x34] sm:$0xf]
        %v2793 = vld [vmem:[#allocation7 + $0x38] sm:$0xf]
        %v2794 = vld [vmem:[#allocation7 + $0x3c] sm:$0xf]
        %v2795 = vld [vmem:[%s4] sm:$0x1]
        %v2797 = vlaneseq
        %v2798 = vshrl.u32 %v2797, 7
        %v2799 = vsub.s32 0, %v2798
        %v2800 = vrot.slane %v2795, %v2799
        %v2818 = vunpack.c.l.b16 %v2779
        %v2819 = vunpack.c.l.b16 %v2780
        %v2820 = vunpack.c.l.b16 %v2781
        %v2821 = vunpack.c.l.b16 %v2782
        %v2822 = vunpack.c.l.b16 %v2783
        %v2823 = vunpack.c.l.b16 %v2784
        %v2824 = vunpack.c.l.b16 %v2785
        %v2825 = vunpack.c.l.b16 %v2786
        %v2826 = vunpack.c.l.b16 %v2787
        %v2827 = vunpack.c.l.b16 %v2788
        %v2828 = vunpack.c.l.b16 %v2789
        %v2829 = vunpack.c.l.b16 %v2790
        %v2830 = vunpack.c.l.b16 %v2791
        %v2831 = vunpack.c.l.b16 %v2792
        %v2832 = vunpack.c.l.b16 %v2793
        %v2833 = vunpack.c.l.b16 %v2794
        %v2834 = vpack.c.b16 %v2819, %v2818
        %v2835 = vpack.c.b16 %v2821, %v2820
        %v2836 = vpack.c.b16 %v2823, %v2822
        %v2837 = vpack.c.b16 %v2825, %v2824
        %v2838 = vpack.c.b16 %v2827, %v2826
        %v2839 = vpack.c.b16 %v2829, %v2828
        %v2840 = vpack.c.b16 %v2831, %v2830
        %v2841 = vpack.c.b16 %v2833, %v2832
        %2850 = vmatprep.subr.bf16.mxu0 0
        %2851 = vmatpush1.bf16.msra.mxu0 %v2841
        %2852 = vmatprep.subr.bf16.mxu0 0
        %2853 = vmatpush1.bf16.msra.mxu0 %v2840
        %2854 = vmatprep.subr.bf16.mxu0 0
        %2855 = vmatpush1.bf16.msra.mxu0 %v2839
        %2856 = vmatprep.subr.bf16.mxu0 0
        %2857 = vmatpush1.bf16.msra.mxu0 %v2838
        %2858 = vmatprep.subr.bf16.mxu0 0
        %2859 = vmatpush1.bf16.msra.mxu0 %v2837
        %2860 = vmatprep.subr.bf16.mxu0 0
        %2861 = vmatpush1.bf16.msra.mxu0 %v2836
        %2862 = vmatprep.subr.bf16.mxu0 0
        %2863 = vmatpush1.bf16.msra.mxu0 %v2835
        %2864 = vmatprep.subr.bf16.mxu0 0
        %2865 = vmatpush1.bf16.msra.mxu0 %v2834
        %2866 = vmatprep.subr.bf16.mxu0 0
        %2867 = vmatpush2.bf16.msra.mxu0 0
        %2868 = vmatprep.subr.bf16.mxu0 0
        %2869 = vmatpush2.bf16.msra.mxu0 0
        %2870 = vmatprep.subr.bf16.mxu0 0
        %2871 = vmatpush2.bf16.msra.mxu0 0
        %2872 = vmatprep.subr.bf16.mxu0 0
        %2873 = vmatpush2.bf16.msra.mxu0 0
        %2874 = vmatprep.subr.bf16.mxu0 0
        %2875 = vmatpush2.bf16.msra.mxu0 0
        %2876 = vmatprep.subr.bf16.mxu0 0
        %2877 = vmatpush2.bf16.msra.mxu0 0
        %2878 = vmatprep.subr.bf16.mxu0 0
        %2879 = vmatpush2.bf16.msra.mxu0 0
        %2880 = vmatprep.subr.bf16.mxu0 0
        %2881 = vmatpush2.bf16.msra.mxu0 0
        %2882 = vmatprep.mubr.bf16.mxu0 0
        %2883 = vmatmul.mubr.bf16.gmra.mxu0 %v2778
        %v2884 = vpop.f32.mrf.mxu0
        %v2885 = vadd.f32 %v2800, %v2884
        %v2886 = vpop.f32.mrf.mxu0
        %v2887 = vpop.f32.mrf.mxu0
        %v2888 = vpop.f32.mrf.mxu0
        %2889 = vdwg.mxu0
        %v2890 = vmax.f32 %v2885, 0.0
        %v2891 = vpack.c.bf16 %v2890, %v2890
        %v2892 = vld [vmem:[#allocation8] sm:$0xf]
        %v2893 = vld [vmem:[#allocation8 + $0x4] sm:$0xf]
        %v2894 = vld [vmem:[#allocation8 + $0x8] sm:$0xf]
        %v2895 = vld [vmem:[#allocation8 + $0xc] sm:$0xf]
        %v2896 = vld [vmem:[#allocation8 + $0x10] sm:$0xf]
        %v2897 = vld [vmem:[#allocation8 + $0x14] sm:$0xf]
        %v2898 = vld [vmem:[#allocation8 + $0x18] sm:$0xf]
        %v2899 = vld [vmem:[#allocation8 + $0x1c] sm:$0xf]
        %v2900 = vld [vmem:[#allocation8 + $0x20] sm:$0xf]
        %v2901 = vld [vmem:[#allocation8 + $0x24] sm:$0xf]
        %v2902 = vld [vmem:[#allocation8 + $0x28] sm:$0xf]
        %v2903 = vld [vmem:[#allocation8 + $0x2c] sm:$0xf]
        %v2904 = vld [vmem:[#allocation8 + $0x30] sm:$0xf]
        %v2905 = vld [vmem:[#allocation8 + $0x34] sm:$0xf]
        %v2906 = vld [vmem:[#allocation8 + $0x38] sm:$0xf]
        %v2907 = vld [vmem:[#allocation8 + $0x3c] sm:$0xf]
        %v2908 = vld [vmem:[%s6] sm:$0x1]
        %v2910 = vlaneseq
        %v2911 = vshrl.u32 %v2910, 7
        %v2912 = vsub.s32 0, %v2911
        %v2913 = vrot.slane %v2908, %v2912
        %v2931 = vunpack.c.l.b16 %v2892
        %v2932 = vunpack.c.l.b16 %v2893
        %v2933 = vunpack.c.l.b16 %v2894
        %v2934 = vunpack.c.l.b16 %v2895
        %v2935 = vunpack.c.l.b16 %v2896
        %v2936 = vunpack.c.l.b16 %v2897
        %v2937 = vunpack.c.l.b16 %v2898
        %v2938 = vunpack.c.l.b16 %v2899
        %v2939 = vunpack.c.l.b16 %v2900
        %v2940 = vunpack.c.l.b16 %v2901
        %v2941 = vunpack.c.l.b16 %v2902
        %v2942 = vunpack.c.l.b16 %v2903
        %v2943 = vunpack.c.l.b16 %v2904
        %v2944 = vunpack.c.l.b16 %v2905
        %v2945 = vunpack.c.l.b16 %v2906
        %v2946 = vunpack.c.l.b16 %v2907
        %v2947 = vpack.c.b16 %v2932, %v2931
        %v2948 = vpack.c.b16 %v2934, %v2933
        %v2949 = vpack.c.b16 %v2936, %v2935
        %v2950 = vpack.c.b16 %v2938, %v2937
        %v2951 = vpack.c.b16 %v2940, %v2939
        %v2952 = vpack.c.b16 %v2942, %v2941
        %v2953 = vpack.c.b16 %v2944, %v2943
        %v2954 = vpack.c.b16 %v2946, %v2945
        %2963 = vmatprep.subr.bf16.mxu0 0
        %2964 = vmatpush1.bf16.msra.mxu0 %v2954
        %2965 = vmatprep.subr.bf16.mxu0 0
        %2966 = vmatpush1.bf16.msra.mxu0 %v2953
        %2967 = vmatprep.subr.bf16.mxu0 0
        %2968 = vmatpush1.bf16.msra.mxu0 %v2952
        %2969 = vmatprep.subr.bf16.mxu0 0
        %2970 = vmatpush1.bf16.msra.mxu0 %v2951
        %2971 = vmatprep.subr.bf16.mxu0 0
        %2972 = vmatpush1.bf16.msra.mxu0 %v2950
        %2973 = vmatprep.subr.bf16.mxu0 0
        %2974 = vmatpush1.bf16.msra.mxu0 %v2949
        %2975 = vmatprep.subr.bf16.mxu0 0
        %2976 = vmatpush1.bf16.msra.mxu0 %v2948
        %2977 = vmatprep.subr.bf16.mxu0 0
        %2978 = vmatpush1.bf16.msra.mxu0 %v2947
        %2979 = vmatprep.subr.bf16.mxu0 0
        %2980 = vmatpush2.bf16.msra.mxu0 0
        %2981 = vmatprep.subr.bf16.mxu0 0
        %2982 = vmatpush2.bf16.msra.mxu0 0
        %2983 = vmatprep.subr.bf16.mxu0 0
        %2984 = vmatpush2.bf16.msra.mxu0 0
        %2985 = vmatprep.subr.bf16.mxu0 0
        %2986 = vmatpush2.bf16.msra.mxu0 0
        %2987 = vmatprep.subr.bf16.mxu0 0
        %2988 = vmatpush2.bf16.msra.mxu0 0
        %2989 = vmatprep.subr.bf16.mxu0 0
        %2990 = vmatpush2.bf16.msra.mxu0 0
        %2991 = vmatprep.subr.bf16.mxu0 0
        %2992 = vmatpush2.bf16.msra.mxu0 0
        %2993 = vmatprep.subr.bf16.mxu0 0
        %2994 = vmatpush2.bf16.msra.mxu0 0
        %2995 = vmatprep.mubr.bf16.mxu0 0
        %2996 = vmatmul.mubr.bf16.gmra.mxu0 %v2891
        %v2997 = vpop.f32.mrf.mxu0
        %v2998 = vadd.f32 %v2913, %v2997
        %v2999 = vpop.f32.mrf.mxu0
        %v3000 = vpop.f32.mrf.mxu0
        %v3001 = vpop.f32.mrf.mxu0
        %3002 = vdwg.mxu0
        %v3003 = vmax.f32 %v2998, 0.0
        %v3004 = vpack.c.bf16 %v3003, %v3003
        %v3005 = vld [vmem:[#allocation10] sm:$0xf]
        %v3006 = vld [vmem:[#allocation10 + $0x4] sm:$0xf]
        %v3007 = vld [vmem:[#allocation10 + $0x8] sm:$0xf]
        %v3008 = vld [vmem:[#allocation10 + $0xc] sm:$0xf]
        %v3009 = vld [vmem:[#allocation10 + $0x10] sm:$0xf]
        %v3010 = vld [vmem:[#allocation10 + $0x14] sm:$0xf]
        %v3011 = vld [vmem:[#allocation10 + $0x18] sm:$0xf]
        %v3012 = vld [vmem:[#allocation10 + $0x1c] sm:$0xf]
        %v3013 = vld [vmem:[#allocation10 + $0x20] sm:$0xf]
        %v3014 = vld [vmem:[#allocation10 + $0x24] sm:$0xf]
        %v3015 = vld [vmem:[#allocation10 + $0x28] sm:$0xf]
        %v3016 = vld [vmem:[#allocation10 + $0x2c] sm:$0xf]
        %v3017 = vld [vmem:[#allocation10 + $0x30] sm:$0xf]
        %v3018 = vld [vmem:[#allocation10 + $0x34] sm:$0xf]
        %v3019 = vld [vmem:[#allocation10 + $0x38] sm:$0xf]
        %v3020 = vld [vmem:[#allocation10 + $0x3c] sm:$0xf]
        %v3021 = vld [vmem:[%s8] sm:$0x1]
        %v3023 = vlaneseq
        %v3024 = vshrl.u32 %v3023, 7
        %v3025 = vsub.s32 0, %v3024
        %v3026 = vrot.slane %v3021, %v3025
        %v3044 = vunpack.c.l.b16 %v3005
        %v3045 = vunpack.c.l.b16 %v3006
        %v3046 = vunpack.c.l.b16 %v3007
        %v3047 = vunpack.c.l.b16 %v3008
        %v3048 = vunpack.c.l.b16 %v3009
        %v3049 = vunpack.c.l.b16 %v3010
        %v3050 = vunpack.c.l.b16 %v3011
        %v3051 = vunpack.c.l.b16 %v3012
        %v3052 = vunpack.c.l.b16 %v3013
        %v3053 = vunpack.c.l.b16 %v3014
        %v3054 = vunpack.c.l.b16 %v3015
        %v3055 = vunpack.c.l.b16 %v3016
        %v3056 = vunpack.c.l.b16 %v3017
        %v3057 = vunpack.c.l.b16 %v3018
        %v3058 = vunpack.c.l.b16 %v3019
        %v3059 = vunpack.c.l.b16 %v3020
        %v3060 = vpack.c.b16 %v3045, %v3044
        %v3061 = vpack.c.b16 %v3047, %v3046
        %v3062 = vpack.c.b16 %v3049, %v3048
        %v3063 = vpack.c.b16 %v3051, %v3050
        %v3064 = vpack.c.b16 %v3053, %v3052
        %v3065 = vpack.c.b16 %v3055, %v3054
        %v3066 = vpack.c.b16 %v3057, %v3056
        %v3067 = vpack.c.b16 %v3059, %v3058
        %3076 = vmatprep.subr.bf16.mxu0 0
        %3077 = vmatpush1.bf16.msra.mxu0 %v3067
        %3078 = vmatprep.subr.bf16.mxu0 0
        %3079 = vmatpush1.bf16.msra.mxu0 %v3066
        %3080 = vmatprep.subr.bf16.mxu0 0
        %3081 = vmatpush1.bf16.msra.mxu0 %v3065
        %3082 = vmatprep.subr.bf16.mxu0 0
        %3083 = vmatpush1.bf16.msra.mxu0 %v3064
        %3084 = vmatprep.subr.bf16.mxu0 0
        %3085 = vmatpush1.bf16.msra.mxu0 %v3063
        %3086 = vmatprep.subr.bf16.mxu0 0
        %3087 = vmatpush1.bf16.msra.mxu0 %v3062
        %3088 = vmatprep.subr.bf16.mxu0 0
        %3089 = vmatpush1.bf16.msra.mxu0 %v3061
        %3090 = vmatprep.subr.bf16.mxu0 0
        %3091 = vmatpush1.bf16.msra.mxu0 %v3060
        %3092 = vmatprep.subr.bf16.mxu0 0
        %3093 = vmatpush2.bf16.msra.mxu0 0
        %3094 = vmatprep.subr.bf16.mxu0 0
        %3095 = vmatpush2.bf16.msra.mxu0 0
        %3096 = vmatprep.subr.bf16.mxu0 0
        %3097 = vmatpush2.bf16.msra.mxu0 0
        %3098 = vmatprep.subr.bf16.mxu0 0
        %3099 = vmatpush2.bf16.msra.mxu0 0
        %3100 = vmatprep.subr.bf16.mxu0 0
        %3101 = vmatpush2.bf16.msra.mxu0 0
        %3102 = vmatprep.subr.bf16.mxu0 0
        %3103 = vmatpush2.bf16.msra.mxu0 0
        %3104 = vmatprep.subr.bf16.mxu0 0
        %3105 = vmatpush2.bf16.msra.mxu0 0
        %3106 = vmatprep.subr.bf16.mxu0 0
        %3107 = vmatpush2.bf16.msra.mxu0 0
        %3108 = vmatprep.mubr.bf16.mxu0 0
        %3109 = vmatmul.mubr.bf16.gmra.mxu0 %v3004
        %v3110 = vpop.f32.mrf.mxu0
        %v3111 = vadd.f32 %v3026, %v3110
        %v3112 = vpop.f32.mrf.mxu0
        %v3113 = vpop.f32.mrf.mxu0
        %v3114 = vpop.f32.mrf.mxu0
        %3115 = vdwg.mxu0
        %3116 = vst [vmem:[%s406] sm:$0xff] %v3111
        %s3117 = sand.u32 %s230, 1
        %s3118 = scalar_lea.sflag [#allocation4], %s3117
        %s3119 = sand.u32 %s230, 1
        %s3120 = smul.addr %s3119, 8
        %s3121 = scalar_lea.vmem [#allocation11], %s3120
        // Predicated region
        $region77: #{tpu_custom_call.1} parent=55 // pred_check
          %p3122 = pneg %p240
        $region78: #{tpu_custom_call.1} parent=55 // pred_check_branch
          %3124 = sbr.rel (%p3122) target = $region80
        $region79: #{tpu_custom_call.1} parent=55 // pred_region
          %s3126 = ssub.s32 128, 128
          %3127 = vsyncadd %s3118, %s3126
          %s3128 = smul.addr %s28, 128
          %s3129 = scalar_lea.hbm %s9, %s3128
          %s3131 = sshll.u32 %s3121, 4
          %s3132 = int_to_ptr.vmem [resolvable:$true] %s3131
          %3134 = dma.vmem_to_hbm [thread:$0]  %s3132, 128, %s3129, %s3118
        $region80: #{tpu_custom_call.1} parent=55 // pred_fallthru
          _
      $region56: #{tpu_custom_call.1} parent=5 // pred_fallthru
        _
      %p3135 = scmp.le.s32.totalorder 2, %s23
      // Predicated region
      $region81: #{tpu_custom_call.1} parent=5 // pred_check
        %p3136 = pneg %p3135
      $region82: #{tpu_custom_call.1} parent=5 // pred_check_branch
        %3138 = sbr.rel (%p3136) target = $region84
      $region83: #{tpu_custom_call.1} parent=5 // pred_region
        %s3139 = ssub.s32 %s23, 2
        // Predicated region
        $region85: #{tpu_custom_call.1} parent=83 // pred_check
          %p3140 = pneg %p246
        $region86: #{tpu_custom_call.1} parent=83 // pred_check_branch
          %3142 = sbr.rel (%p3140) target = $region88
        $region87: #{tpu_custom_call.1} parent=83 // pred_region
          %s3143 = sand.u32 %s231, 1
          %s3144 = scalar_lea.sflag [#allocation4], %s3143
          %s3145 = sand.u32 %s231, 1
          %s3146 = smul.addr %s3145, 8
          %s3147 = scalar_lea.vmem [#allocation11], %s3146
          %3148 = dma.done %s3144, 128
        $region88: #{tpu_custom_call.1} parent=83 // pred_fallthru
          _
      $region84: #{tpu_custom_call.1} parent=5 // pred_fallthru
        _
    $region6: #{tpu_custom_call.1} parent=1 // loop_footer
      %s27 = sadd.s32 1, %s23
    $region7: #{tpu_custom_call.1} parent=1 // loop_footer_branch
      %22 = sbr.rel target = $region3
    $region8: #{tpu_custom_call.1} parent=1 // loop_exit
      _
    %3149 = vsyncpa [#allocation3], 1
    %s3150 = scalar_lea.sflag [#allocation3], 1
    %3151 = vsyncpa %s3150, 1
    %3152 = vsyncpa [#allocation6], 1
    %3153 = vsyncpa [#allocation9], 1
    %3154 = vsyncpa [#allocation4], 1
    %s3155 = scalar_lea.sflag [#allocation4], 1
    %3156 = vsyncpa %s3155, 1

</llo_original>
